<compile_context>
chip_gen: v5e
topology: v5e:2x2
jax: 0.10.0
libtpu: 0.0.40
codegen_flags: <defaults>
</compile_context>

<pallas_src>
import jax
import jax.numpy as jnp
from jax import lax
from jax.experimental import pallas as pl
from jax.experimental.pallas import tpu as pltpu

# Small, TPU-friendly synthetic sizes (AbLang-heavy is H=768, 12 layers, 12 heads).
B, L, H = 2, 8, 128          # H is a multiple of 128 -> lane-dense stores
HEADS = 4
DH = H // HEADS
FFN = 4 * H
LAYERS = 2
VOCAB = 24
LN_EPS = 1e-12


# ----------------------------- shared math ----------------------------------
def _layernorm(z, g, b):
    mu = jnp.mean(z, axis=-1, keepdims=True)
    var = jnp.mean(jnp.square(z - mu), axis=-1, keepdims=True)
    return (z - mu) * lax.rsqrt(var + LN_EPS) * g + b


def _gelu(x):
    # tanh-approx GELU (EUP path). TODO(synk): real AbLang checkpoint uses exact erf GELU.
    return 0.5 * x * (1.0 + jnp.tanh(0.7978845608028654 * (x + 0.044715 * x * x * x)))


# ----------------------------- fused Pallas kernel ---------------------------
def ablang_fused_kernel(x_ref, mlane_ref, mcol_ref,
                        wq_ref, bq_ref, wk_ref, bk_ref, wv_ref, bv_ref,
                        wo_ref, bo_ref, g1_ref, be1_ref,
                        w1_ref, b1_ref, w2_ref, b2_ref, g2_ref, be2_ref,
                        out_ref, h_scratch):
    """grid = (batch, layer). Activation stays resident in VMEM scratch across layers."""
    layer = pl.program_id(1)

    @pl.when(layer == 0)
    def _():
        h_scratch[...] = x_ref[0]          # load embedded input for this batch element

    x = h_scratch[...]                     # (L, H) f32 resident activation
    mask = mlane_ref[0]                    # (1, L) float key mask
    bias = (1.0 - mask) * (-1e9)           # additive key mask (once per grid step)

    xb = x.astype(jnp.bfloat16)
    xh = jnp.broadcast_to(xb[None], (HEADS, L, H))     # heads folded into a batch dim

    q = jnp.einsum('hlc,hcd->hld', xh, wq_ref[0],
                   preferred_element_type=jnp.float32) + bq_ref[0]
    k = jnp.einsum('hlc,hcd->hld', xh, wk_ref[0],
                   preferred_element_type=jnp.float32) + bk_ref[0]
    v = jnp.einsum('hlc,hcd->hld', xh, wv_ref[0],
                   preferred_element_type=jnp.float32) + bv_ref[0]

    scale = 1.0 / (DH ** 0.5)
    s = jnp.einsum('hqd,hkd->hqk', q.astype(jnp.bfloat16), k.astype(jnp.bfloat16),
                   preferred_element_type=jnp.float32) * scale + bias
    s = s - jnp.max(s, axis=-1, keepdims=True)
    p = jnp.exp(s)
    p = p * pl.reciprocal(jnp.sum(p, axis=-1, keepdims=True), approx=False)

    ctx = jnp.einsum('hqk,hkd->hqd', p.astype(jnp.bfloat16), v.astype(jnp.bfloat16),
                     preferred_element_type=jnp.float32)
    attn = jnp.einsum('hld,hdc->hlc', ctx.astype(jnp.bfloat16), wo_ref[0],
                      preferred_element_type=jnp.float32)
    attn = jnp.sum(attn, axis=0) + bo_ref[0]           # merge heads: sum of per-head out-proj

    h1 = _layernorm(x + attn, g1_ref[0], be1_ref[0])

    f = jnp.dot(h1.astype(jnp.bfloat16), w1_ref[0],
                preferred_element_type=jnp.float32) + b1_ref[0]
    f = _gelu(f)
    f = jnp.dot(f.astype(jnp.bfloat16), w2_ref[0],
                preferred_element_type=jnp.float32) + b2_ref[0]
    h2 = _layernorm(h1 + f, g2_ref[0], be2_ref[0])
    h_scratch[...] = h2

    @pl.when(layer == pl.num_programs(1) - 1)
    def _():
        # exact _mean_embeddings: sum(h * mask, seq) / sum(mask, seq), clamped vs all-zero mask
        mcol = mcol_ref[0]                                   # (L, 1)
        pooled = jnp.sum(h2 * mcol, axis=0, keepdims=True)   # (1, H)
        denom = jnp.maximum(jnp.sum(mcol), 1.0)
        out_ref[0] = pooled * (1.0 / denom)


# ----------------------------- wrapper ---------------------------------------
_WEIGHT_NAMES = ["wq", "bq", "wk", "bk", "wv", "bv", "wo", "bo",
                 "g1", "be1", "w1", "b1", "w2", "b2", "g2", "be2"]


def ablang_forward(input_ids, attention_mask, params):
    tok_emb, pos_emb, emb_g, emb_b, W = params
    # glue: embedding gather + positional embedding + embedding layernorm (plain JAX)
    # TODO(synk): pretrained AbLang-heavy weights cannot be loaded; weights are synthetic.
    h = jnp.take(tok_emb, input_ids, axis=0) + pos_emb[None, :, :]
    h = _layernorm(h, emb_g, emb_b)                          # (B, L, H) f32

    mask = attention_mask.astype(jnp.float32)
    mask_lane = mask[:, None, :]                             # (B, 1, L) for the attn bias
    mask_col = mask[:, :, None]                              # (B, L, 1) for masked pooling

    weights = [W[n] for n in _WEIGHT_NAMES]                  # each stacked over layers

    def wspec(arr):
        nd = arr.ndim
        return pl.BlockSpec((1,) + arr.shape[1:],
                            lambda b, l, _nd=nd: (l,) + (0,) * (_nd - 1))

    in_specs = [
        pl.BlockSpec((1, L, H), lambda b, l: (b, 0, 0)),     # embedded input
        pl.BlockSpec((1, 1, L), lambda b, l: (b, 0, 0)),     # mask (lane layout)
        pl.BlockSpec((1, L, 1), lambda b, l: (b, 0, 0)),     # mask (column layout)
    ] + [wspec(w) for w in weights]

    out = pl.pallas_call(
        ablang_fused_kernel,
        out_shape=jax.ShapeDtypeStruct((B, 1, H), jnp.float32),
        grid_spec=pltpu.PrefetchScalarGridSpec(
            num_scalar_prefetch=0,
            grid=(B, LAYERS),
            in_specs=in_specs,
            out_specs=pl.BlockSpec((1, 1, H), lambda b, l: (b, 0, 0)),
            scratch_shapes=[pltpu.VMEM((L, H), jnp.float32)]),
        compiler_params=pltpu.CompilerParams(
            dimension_semantics=("parallel", "arbitrary"),
            vmem_limit_bytes=64 * 1024 * 1024),
    )(h, mask_lane, mask_col, *weights)
    return out[:, 0, :]


# ----------------------------- parameters -------------------------------------
def init_params(key):
    keys = jax.random.split(key, 3)

    def w(k, shape, scale=0.02, dtype=jnp.bfloat16):
        return (scale * jax.random.normal(k, shape, jnp.float32)).astype(dtype)

    tok_emb = 0.02 * jax.random.normal(keys[0], (VOCAB, H), jnp.float32)
    pos_emb = 0.02 * jax.random.normal(keys[1], (L, H), jnp.float32)
    emb_g = jnp.ones((1, H), jnp.float32)
    emb_b = jnp.zeros((1, H), jnp.float32)

    lk = jax.random.split(keys[2], 12)
    W = {
        # attention projections stored per-head so the kernel can batch over heads
        "wq": w(lk[0], (LAYERS, HEADS, H, DH)),
        "bq": w(lk[1], (LAYERS, HEADS, 1, DH), dtype=jnp.float32),
        "wk": w(lk[2], (LAYERS, HEADS, H, DH)),
        "bk": w(lk[3], (LAYERS, HEADS, 1, DH), dtype=jnp.float32),
        "wv": w(lk[4], (LAYERS, HEADS, H, DH)),
        "bv": w(lk[5], (LAYERS, HEADS, 1, DH), dtype=jnp.float32),
        "wo": w(lk[6], (LAYERS, HEADS, DH, H)),
        "bo": w(lk[7], (LAYERS, 1, H), dtype=jnp.float32),
        "g1": jnp.ones((LAYERS, 1, H), jnp.float32),
        "be1": jnp.zeros((LAYERS, 1, H), jnp.float32),
        "w1": w(lk[8], (LAYERS, H, FFN)),
        "b1": w(lk[9], (LAYERS, 1, FFN), dtype=jnp.float32),
        "w2": w(lk[10], (LAYERS, FFN, H)),
        "b2": w(lk[11], (LAYERS, 1, H), dtype=jnp.float32),
        "g2": jnp.ones((LAYERS, 1, H), jnp.float32),
        "be2": jnp.zeros((LAYERS, 1, H), jnp.float32),
    }
    return tok_emb, pos_emb, emb_g, emb_b, W


# ----------------------------- pure-JAX reference ------------------------------
def _ref_forward(input_ids, attention_mask, params):
    tok_emb, pos_emb, emb_g, emb_b, W = params
    h = jnp.take(tok_emb, input_ids, axis=0) + pos_emb[None, :, :]
    h = _layernorm(h, emb_g, emb_b)
    mask = attention_mask.astype(jnp.float32)                # (B, L)
    bias = (1.0 - mask)[:, None, None, :] * (-1e9)           # (B, 1, 1, L)
    scale = 1.0 / (DH ** 0.5)
    for l in range(LAYERS):
        hb = h.astype(jnp.bfloat16)
        q = jnp.einsum('blc,hcd->bhld', hb, W["wq"][l],
                       preferred_element_type=jnp.float32) + W["bq"][l]
        k = jnp.einsum('blc,hcd->bhld', hb, W["wk"][l],
                       preferred_element_type=jnp.float32) + W["bk"][l]
        v = jnp.einsum('blc,hcd->bhld', hb, W["wv"][l],
                       preferred_element_type=jnp.float32) + W["bv"][l]
        s = jnp.einsum('bhqd,bhkd->bhqk', q.astype(jnp.bfloat16), k.astype(jnp.bfloat16),
                       preferred_element_type=jnp.float32) * scale + bias
        s = s - jnp.max(s, axis=-1, keepdims=True)
        p = jnp.exp(s)
        p = p / jnp.sum(p, axis=-1, keepdims=True)
        ctx = jnp.einsum('bhqk,bhkd->bhqd', p.astype(jnp.bfloat16), v.astype(jnp.bfloat16),
                         preferred_element_type=jnp.float32)
        attn = jnp.einsum('bhld,hdc->blc', ctx.astype(jnp.bfloat16), W["wo"][l],
                          preferred_element_type=jnp.float32) + W["bo"][l]
        h1 = _layernorm(h + attn, W["g1"][l], W["be1"][l])
        f = jnp.einsum('blc,cf->blf', h1.astype(jnp.bfloat16), W["w1"][l],
                       preferred_element_type=jnp.float32) + W["b1"][l]
        f = _gelu(f)
        f = jnp.einsum('blf,fc->blc', f.astype(jnp.bfloat16), W["w2"][l],
                       preferred_element_type=jnp.float32) + W["b2"][l]
        h = _layernorm(h1 + f, W["g2"][l], W["be2"][l])
    me = mask[:, :, None]
    return jnp.sum(h * me, axis=1) / jnp.maximum(jnp.sum(me, axis=1), 1.0)


# ----------------------------- main --------------------------------------------
if __name__ == "__main__":
    key = jax.random.PRNGKey(0)
    pkey, ikey = jax.random.split(key)
    params = init_params(pkey)

    input_ids = jax.random.randint(ikey, (B, L), 0, VOCAB, dtype=jnp.int32)
    attention_mask = jnp.array([[1, 1, 1, 1, 1, 1, 1, 1],
                                [1, 1, 1, 1, 1, 0, 0, 0]], dtype=jnp.int32)

    fwd = jax.jit(ablang_forward)
    out = jax.block_until_ready(fwd(input_ids, attention_mask, params))

    ref = _ref_forward(input_ids, attention_mask, params)
    assert out.shape == (B, H)
    assert bool(jnp.all(jnp.isfinite(out)))
    assert jnp.allclose(out, ref, atol=1e-2, rtol=1e-2), float(jnp.max(jnp.abs(out - ref)))
    print("KERNEL_OK")
</pallas_src>

<mosaic_0001>
module attributes {stable_mosaic.version = 11 : i64} {
  func.func @ablang_fused_kernel(%arg0: i32, %arg1: i32, %arg2: memref<1x8x128xf32, #tpu.memory_space<vmem>>, %arg3: memref<1x1x8xf32, #tpu.memory_space<vmem>>, %arg4: memref<1x8x1xf32, #tpu.memory_space<vmem>>, %arg5: memref<1x4x128x32xbf16, #tpu.memory_space<vmem>>, %arg6: memref<1x4x1x32xf32, #tpu.memory_space<vmem>>, %arg7: memref<1x4x128x32xbf16, #tpu.memory_space<vmem>>, %arg8: memref<1x4x1x32xf32, #tpu.memory_space<vmem>>, %arg9: memref<1x4x128x32xbf16, #tpu.memory_space<vmem>>, %arg10: memref<1x4x1x32xf32, #tpu.memory_space<vmem>>, %arg11: memref<1x4x32x128xbf16, #tpu.memory_space<vmem>>, %arg12: memref<1x1x128xf32, #tpu.memory_space<vmem>>, %arg13: memref<1x1x128xf32, #tpu.memory_space<vmem>>, %arg14: memref<1x1x128xf32, #tpu.memory_space<vmem>>, %arg15: memref<1x128x512xbf16, #tpu.memory_space<vmem>>, %arg16: memref<1x1x512xf32, #tpu.memory_space<vmem>>, %arg17: memref<1x512x128xbf16, #tpu.memory_space<vmem>>, %arg18: memref<1x1x128xf32, #tpu.memory_space<vmem>>, %arg19: memref<1x1x128xf32, #tpu.memory_space<vmem>>, %arg20: memref<1x1x128xf32, #tpu.memory_space<vmem>>, %arg21: memref<1x1x128xf32, #tpu.memory_space<vmem>>, %arg22: memref<8x128xf32, #tpu.memory_space<vmem>>) attributes {dimension_semantics = [#tpu.dimension_semantics<parallel>, #tpu.dimension_semantics<arbitrary>], iteration_bounds = array<i64: 2, 2>, scalar_prefetch = 0 : i64, scratch_operands = 1 : i64, tpu.core_type = #tpu.core_type<tc>, window_params = [{transform_indices = @transform_0, window_bounds = array<i64: 1, 8, 128>}, {transform_indices = @transform_1, window_bounds = array<i64: 1, 1, 8>}, {transform_indices = @transform_2, window_bounds = array<i64: 1, 8, 1>}, {transform_indices = @transform_3, window_bounds = array<i64: 1, 4, 128, 32>}, {transform_indices = @transform_4, window_bounds = array<i64: 1, 4, 1, 32>}, {transform_indices = @transform_5, window_bounds = array<i64: 1, 4, 128, 32>}, {transform_indices = @transform_6, window_bounds = array<i64: 1, 4, 1, 32>}, {transform_indices = @transform_7, window_bounds = array<i64: 1, 4, 128, 32>}, {transform_indices = @transform_8, window_bounds = array<i64: 1, 4, 1, 32>}, {transform_indices = @transform_9, window_bounds = array<i64: 1, 4, 32, 128>}, {transform_indices = @transform_10, window_bounds = array<i64: 1, 1, 128>}, {transform_indices = @transform_11, window_bounds = array<i64: 1, 1, 128>}, {transform_indices = @transform_12, window_bounds = array<i64: 1, 1, 128>}, {transform_indices = @transform_13, window_bounds = array<i64: 1, 128, 512>}, {transform_indices = @transform_14, window_bounds = array<i64: 1, 1, 512>}, {transform_indices = @transform_15, window_bounds = array<i64: 1, 512, 128>}, {transform_indices = @transform_16, window_bounds = array<i64: 1, 1, 128>}, {transform_indices = @transform_17, window_bounds = array<i64: 1, 1, 128>}, {transform_indices = @transform_18, window_bounds = array<i64: 1, 1, 128>}, {transform_indices = @transform_19, window_bounds = array<i64: 1, 1, 128>}]} {
    %c0_i32 = arith.constant 0 : i32
    %0 = arith.cmpi eq, %arg1, %c0_i32 : i32
    %1 = arith.extui %0 : i1 to i32
    %c0_i32_0 = arith.constant 0 : i32
    %2 = arith.cmpi ne, %1, %c0_i32_0 : i32
    scf.if %2 {
      %c0_90 = arith.constant 0 : index
      %c0_91 = arith.constant 0 : index
      %c0_92 = arith.constant 0 : index
      %152 = vector.load %arg2[%c0_90, %c0_91, %c0_92] : memref<1x8x128xf32, #tpu.memory_space<vmem>>, vector<1x8x128xf32>
      %153 = vector.shape_cast %152 : vector<1x8x128xf32> to vector<8x128xf32>
      %c0_93 = arith.constant 0 : index
      %c0_94 = arith.constant 0 : index
      %154 = vector.load %arg22[%c0_93, %c0_94] : memref<8x128xf32, #tpu.memory_space<vmem>>, vector<8x128xf32>
      tpu.vector_store %arg22[%c0_93, %c0_94], %153 {strides = array<i32>} : memref<8x128xf32, #tpu.memory_space<vmem>>, vector<8x128xf32>,
    } else {
    }
    %c0 = arith.constant 0 : index
    %c0_1 = arith.constant 0 : index
    %3 = vector.load %arg22[%c0, %c0_1] : memref<8x128xf32, #tpu.memory_space<vmem>>, vector<8x128xf32>
    %c0_2 = arith.constant 0 : index
    %c0_3 = arith.constant 0 : index
    %c0_4 = arith.constant 0 : index
    %4 = vector.load %arg3[%c0_2, %c0_3, %c0_4] : memref<1x1x8xf32, #tpu.memory_space<vmem>>, vector<1x1x8xf32>
    %5 = vector.shape_cast %4 : vector<1x1x8xf32> to vector<1x8xf32>
    %cst = arith.constant 1.000000e+00 : f32
    %6 = vector.broadcast %cst : f32 to vector<1x8xf32>
    %7 = arith.subf %6, %5 : vector<1x8xf32>
    %cst_5 = arith.constant -1.000000e+09 : f32
    %8 = vector.broadcast %cst_5 : f32 to vector<1x8xf32>
    %9 = arith.mulf %7, %8 : vector<1x8xf32>
    %10 = arith.truncf %3 : vector<8x128xf32> to vector<8x128xbf16>
    %11 = vector.shape_cast %10 : vector<8x128xbf16> to vector<1x8x128xbf16>
    %12 = vector.shape_cast %11 : vector<1x8x128xbf16> to vector<1x8x128xbf16>
    %13 = vector.broadcast %12 : vector<1x8x128xbf16> to vector<4x8x128xbf16>
    %c0_6 = arith.constant 0 : index
    %c0_7 = arith.constant 0 : index
    %c0_8 = arith.constant 0 : index
    %c0_9 = arith.constant 0 : index
    %14 = vector.load %arg5[%c0_6, %c0_7, %c0_8, %c0_9] : memref<1x4x128x32xbf16, #tpu.memory_space<vmem>>, vector<1x4x128x32xbf16>
    %15 = vector.shape_cast %14 : vector<1x4x128x32xbf16> to vector<4x128x32xbf16>
    "tpu.trace_start"() <{level = 10 : i32, message = "hlc,hcd->hld"}> : () -> ()
    %cst_10 = arith.constant dense<0.000000e+00> : vector<4x8x32xf32>
    %16 = tpu.matmul %13, %15, %cst_10 {dimension_numbers = #tpu.dot_dimension_numbers<[2], [1], [1], [2], [0, 0, 0, 1, 1, 2], [0], [0]>} : vector<4x8x128xbf16>, vector<4x128x32xbf16>, vector<4x8x32xf32> -> vector<4x8x32xf32>
    "tpu.trace_stop"() : () -> ()
    %c0_11 = arith.constant 0 : index
    %c0_12 = arith.constant 0 : index
    %c0_13 = arith.constant 0 : index
    %c0_14 = arith.constant 0 : index
    %17 = vector.load %arg6[%c0_11, %c0_12, %c0_13, %c0_14] : memref<1x4x1x32xf32, #tpu.memory_space<vmem>>, vector<1x4x1x32xf32>
    %18 = vector.shape_cast %17 : vector<1x4x1x32xf32> to vector<4x1x32xf32>
    %19 = vector.broadcast %18 : vector<4x1x32xf32> to vector<4x8x32xf32>
    %20 = arith.addf %16, %19 : vector<4x8x32xf32>
    %c0_15 = arith.constant 0 : index
    %c0_16 = arith.constant 0 : index
    %c0_17 = arith.constant 0 : index
    %c0_18 = arith.constant 0 : index
    %21 = vector.load %arg7[%c0_15, %c0_16, %c0_17, %c0_18] : memref<1x4x128x32xbf16, #tpu.memory_space<vmem>>, vector<1x4x128x32xbf16>
    %22 = vector.shape_cast %21 : vector<1x4x128x32xbf16> to vector<4x128x32xbf16>
    "tpu.trace_start"() <{level = 10 : i32, message = "hlc,hcd->hld"}> : () -> ()
    %cst_19 = arith.constant dense<0.000000e+00> : vector<4x8x32xf32>
    %23 = tpu.matmul %13, %22, %cst_19 {dimension_numbers = #tpu.dot_dimension_numbers<[2], [1], [1], [2], [0, 0, 0, 1, 1, 2], [0], [0]>} : vector<4x8x128xbf16>, vector<4x128x32xbf16>, vector<4x8x32xf32> -> vector<4x8x32xf32>
    "tpu.trace_stop"() : () -> ()
    %c0_20 = arith.constant 0 : index
    %c0_21 = arith.constant 0 : index
    %c0_22 = arith.constant 0 : index
    %c0_23 = arith.constant 0 : index
    %24 = vector.load %arg8[%c0_20, %c0_21, %c0_22, %c0_23] : memref<1x4x1x32xf32, #tpu.memory_space<vmem>>, vector<1x4x1x32xf32>
    %25 = vector.shape_cast %24 : vector<1x4x1x32xf32> to vector<4x1x32xf32>
    %26 = vector.broadcast %25 : vector<4x1x32xf32> to vector<4x8x32xf32>
    %27 = arith.addf %23, %26 : vector<4x8x32xf32>
    %c0_24 = arith.constant 0 : index
    %c0_25 = arith.constant 0 : index
    %c0_26 = arith.constant 0 : index
    %c0_27 = arith.constant 0 : index
    %28 = vector.load %arg9[%c0_24, %c0_25, %c0_26, %c0_27] : memref<1x4x128x32xbf16, #tpu.memory_space<vmem>>, vector<1x4x128x32xbf16>
    %29 = vector.shape_cast %28 : vector<1x4x128x32xbf16> to vector<4x128x32xbf16>
    "tpu.trace_start"() <{level = 10 : i32, message = "hlc,hcd->hld"}> : () -> ()
    %cst_28 = arith.constant dense<0.000000e+00> : vector<4x8x32xf32>
    %30 = tpu.matmul %13, %29, %cst_28 {dimension_numbers = #tpu.dot_dimension_numbers<[2], [1], [1], [2], [0, 0, 0, 1, 1, 2], [0], [0]>} : vector<4x8x128xbf16>, vector<4x128x32xbf16>, vector<4x8x32xf32> -> vector<4x8x32xf32>
    "tpu.trace_stop"() : () -> ()
    %c0_29 = arith.constant 0 : index
    %c0_30 = arith.constant 0 : index
    %c0_31 = arith.constant 0 : index
    %c0_32 = arith.constant 0 : index
    %31 = vector.load %arg10[%c0_29, %c0_30, %c0_31, %c0_32] : memref<1x4x1x32xf32, #tpu.memory_space<vmem>>, vector<1x4x1x32xf32>
    %32 = vector.shape_cast %31 : vector<1x4x1x32xf32> to vector<4x1x32xf32>
    %33 = vector.broadcast %32 : vector<4x1x32xf32> to vector<4x8x32xf32>
    %34 = arith.addf %30, %33 : vector<4x8x32xf32>
    %35 = arith.truncf %20 : vector<4x8x32xf32> to vector<4x8x32xbf16>
    %36 = arith.truncf %27 : vector<4x8x32xf32> to vector<4x8x32xbf16>
    "tpu.trace_start"() <{level = 10 : i32, message = "hqd,hkd->hqk"}> : () -> ()
    %cst_33 = arith.constant dense<0.000000e+00> : vector<4x8x8xf32>
    %37 = tpu.matmul %35, %36, %cst_33 {dimension_numbers = #tpu.dot_dimension_numbers<[2], [2], [1], [1], [0, 0, 0, 1, 1, 1], [0], [0]>} : vector<4x8x32xbf16>, vector<4x8x32xbf16>, vector<4x8x8xf32> -> vector<4x8x8xf32>
    "tpu.trace_stop"() : () -> ()
    %cst_34 = arith.constant 0.176776692 : f32
    %38 = vector.broadcast %cst_34 : f32 to vector<4x8x8xf32>
    %39 = arith.mulf %37, %38 : vector<4x8x8xf32>
    %40 = vector.shape_cast %9 : vector<1x8xf32> to vector<1x1x8xf32>
    %41 = vector.broadcast %40 : vector<1x1x8xf32> to vector<4x8x8xf32>
    %42 = arith.addf %39, %41 : vector<4x8x8xf32>
    %cst_35 = arith.constant dense<0xFF800000> : vector<4x8xf32>
    %43 = vector.multi_reduction <maximumf>, %42, %cst_35 [2] : vector<4x8x8xf32> to vector<4x8xf32>
    %44 = vector.shape_cast %43 : vector<4x8xf32> to vector<4x8x1xf32>
    %45 = vector.broadcast %44 : vector<4x8x1xf32> to vector<4x8x8xf32>
    %46 = arith.subf %42, %45 : vector<4x8x8xf32>
    %47 = math.exp %46 : vector<4x8x8xf32>
    %cst_36 = arith.constant dense<0.000000e+00> : vector<4x8xf32>
    %48 = vector.multi_reduction <add>, %47, %cst_36 [2] : vector<4x8x8xf32> to vector<4x8xf32>
    %49 = vector.shape_cast %48 : vector<4x8xf32> to vector<4x8x1xf32>
    %50 = tpu.reciprocal %49 : vector<4x8x1xf32> -> vector<4x8x1xf32>
    %51 = vector.broadcast %50 : vector<4x8x1xf32> to vector<4x8x8xf32>
    %52 = arith.mulf %47, %51 : vector<4x8x8xf32>
    %53 = arith.truncf %52 : vector<4x8x8xf32> to vector<4x8x8xbf16>
    %54 = arith.truncf %34 : vector<4x8x32xf32> to vector<4x8x32xbf16>
    "tpu.trace_start"() <{level = 10 : i32, message = "hqk,hkd->hqd"}> : () -> ()
    %cst_37 = arith.constant dense<0.000000e+00> : vector<4x8x32xf32>
    %55 = tpu.matmul %53, %54, %cst_37 {dimension_numbers = #tpu.dot_dimension_numbers<[2], [1], [1], [2], [0, 0, 0, 1, 1, 2], [0], [0]>} : vector<4x8x8xbf16>, vector<4x8x32xbf16>, vector<4x8x32xf32> -> vector<4x8x32xf32>
    "tpu.trace_stop"() : () -> ()
    %56 = arith.truncf %55 : vector<4x8x32xf32> to vector<4x8x32xbf16>
    %c0_38 = arith.constant 0 : index
    %c0_39 = arith.constant 0 : index
    %c0_40 = arith.constant 0 : index
    %c0_41 = arith.constant 0 : index
    %57 = vector.load %arg11[%c0_38, %c0_39, %c0_40, %c0_41] : memref<1x4x32x128xbf16, #tpu.memory_space<vmem>>, vector<1x4x32x128xbf16>
    %58 = vector.shape_cast %57 : vector<1x4x32x128xbf16> to vector<4x32x128xbf16>
    "tpu.trace_start"() <{level = 10 : i32, message = "hld,hdc->hlc"}> : () -> ()
    %cst_42 = arith.constant dense<0.000000e+00> : vector<4x8x128xf32>
    %59 = tpu.matmul %56, %58, %cst_42 {dimension_numbers = #tpu.dot_dimension_numbers<[2], [1], [1], [2], [0, 0, 0, 1, 1, 2], [0], [0]>} : vector<4x8x32xbf16>, vector<4x32x128xbf16>, vector<4x8x128xf32> -> vector<4x8x128xf32>
    "tpu.trace_stop"() : () -> ()
    %cst_43 = arith.constant dense<0.000000e+00> : vector<8x128xf32>
    %60 = vector.multi_reduction <add>, %59, %cst_43 [0] : vector<4x8x128xf32> to vector<8x128xf32>
    %c0_44 = arith.constant 0 : index
    %c0_45 = arith.constant 0 : index
    %c0_46 = arith.constant 0 : index
    %61 = vector.load %arg12[%c0_44, %c0_45, %c0_46] : memref<1x1x128xf32, #tpu.memory_space<vmem>>, vector<1x1x128xf32>
    %62 = vector.shape_cast %61 : vector<1x1x128xf32> to vector<1x128xf32>
    %63 = vector.broadcast %62 : vector<1x128xf32> to vector<8x128xf32>
    %64 = arith.addf %60, %63 : vector<8x128xf32>
    %65 = arith.addf %3, %64 : vector<8x128xf32>
    %c0_47 = arith.constant 0 : index
    %c0_48 = arith.constant 0 : index
    %c0_49 = arith.constant 0 : index
    %66 = vector.load %arg13[%c0_47, %c0_48, %c0_49] : memref<1x1x128xf32, #tpu.memory_space<vmem>>, vector<1x1x128xf32>
    %67 = vector.shape_cast %66 : vector<1x1x128xf32> to vector<1x128xf32>
    %c0_50 = arith.constant 0 : index
    %c0_51 = arith.constant 0 : index
    %c0_52 = arith.constant 0 : index
    %68 = vector.load %arg14[%c0_50, %c0_51, %c0_52] : memref<1x1x128xf32, #tpu.memory_space<vmem>>, vector<1x1x128xf32>
    %69 = vector.shape_cast %68 : vector<1x1x128xf32> to vector<1x128xf32>
    %cst_53 = arith.constant dense<0.000000e+00> : vector<8xf32>
    %70 = vector.multi_reduction <add>, %65, %cst_53 [1] : vector<8x128xf32> to vector<8xf32>
    %71 = vector.shape_cast %70 : vector<8xf32> to vector<8x1xf32>
    %cst_54 = arith.constant 1.280000e+02 : f32
    %72 = vector.broadcast %cst_54 : f32 to vector<8x1xf32>
    %73 = arith.divf %71, %72 : vector<8x1xf32>
    %74 = vector.broadcast %73 : vector<8x1xf32> to vector<8x128xf32>
    %75 = arith.subf %65, %74 : vector<8x128xf32>
    %76 = arith.mulf %75, %75 : vector<8x128xf32>
    %cst_55 = arith.constant dense<0.000000e+00> : vector<8xf32>
    %77 = vector.multi_reduction <add>, %76, %cst_55 [1] : vector<8x128xf32> to vector<8xf32>
    %78 = vector.shape_cast %77 : vector<8xf32> to vector<8x1xf32>
    %cst_56 = arith.constant 1.280000e+02 : f32
    %79 = vector.broadcast %cst_56 : f32 to vector<8x1xf32>
    %80 = arith.divf %78, %79 : vector<8x1xf32>
    %81 = vector.broadcast %73 : vector<8x1xf32> to vector<8x128xf32>
    %82 = arith.subf %65, %81 : vector<8x128xf32>
    %cst_57 = arith.constant 9.99999996E-13 : f32
    %83 = vector.broadcast %cst_57 : f32 to vector<8x1xf32>
    %84 = arith.addf %80, %83 : vector<8x1xf32>
    %85 = math.rsqrt %84 : vector<8x1xf32>
    %86 = vector.broadcast %85 : vector<8x1xf32> to vector<8x128xf32>
    %87 = arith.mulf %82, %86 : vector<8x128xf32>
    %88 = vector.broadcast %67 : vector<1x128xf32> to vector<8x128xf32>
    %89 = arith.mulf %87, %88 : vector<8x128xf32>
    %90 = vector.broadcast %69 : vector<1x128xf32> to vector<8x128xf32>
    %91 = arith.addf %89, %90 : vector<8x128xf32>
    %92 = arith.truncf %91 : vector<8x128xf32> to vector<8x128xbf16>
    %c0_58 = arith.constant 0 : index
    %c0_59 = arith.constant 0 : index
    %c0_60 = arith.constant 0 : index
    %93 = vector.load %arg15[%c0_58, %c0_59, %c0_60] : memref<1x128x512xbf16, #tpu.memory_space<vmem>>, vector<1x128x512xbf16>
    %94 = vector.shape_cast %93 : vector<1x128x512xbf16> to vector<128x512xbf16>
    %cst_61 = arith.constant dense<0.000000e+00> : vector<8x512xf32>
    %95 = tpu.matmul %92, %94, %cst_61 {dimension_numbers = #tpu.dot_dimension_numbers<[1], [0], [0], [1], [0, 0, 1, 1], [], []>} : vector<8x128xbf16>, vector<128x512xbf16>, vector<8x512xf32> -> vector<8x512xf32>
    %c0_62 = arith.constant 0 : index
    %c0_63 = arith.constant 0 : index
    %c0_64 = arith.constant 0 : index
    %96 = vector.load %arg16[%c0_62, %c0_63, %c0_64] : memref<1x1x512xf32, #tpu.memory_space<vmem>>, vector<1x1x512xf32>
    %97 = vector.shape_cast %96 : vector<1x1x512xf32> to vector<1x512xf32>
    %98 = vector.broadcast %97 : vector<1x512xf32> to vector<8x512xf32>
    %99 = arith.addf %95, %98 : vector<8x512xf32>
    %cst_65 = arith.constant 5.000000e-01 : f32
    %100 = vector.broadcast %cst_65 : f32 to vector<8x512xf32>
    %101 = arith.mulf %100, %99 : vector<8x512xf32>
    %cst_66 = arith.constant 4.471500e-02 : f32
    %102 = vector.broadcast %cst_66 : f32 to vector<8x512xf32>
    %103 = arith.mulf %102, %99 : vector<8x512xf32>
    %104 = arith.mulf %103, %99 : vector<8x512xf32>
    %105 = arith.mulf %104, %99 : vector<8x512xf32>
    %106 = arith.addf %99, %105 : vector<8x512xf32>
    %cst_67 = arith.constant 0.797884583 : f32
    %107 = vector.broadcast %cst_67 : f32 to vector<8x512xf32>
    %108 = arith.mulf %107, %106 : vector<8x512xf32>
    %109 = math.tanh %108 : vector<8x512xf32>
    %cst_68 = arith.constant 1.000000e+00 : f32
    %110 = vector.broadcast %cst_68 : f32 to vector<8x512xf32>
    %111 = arith.addf %110, %109 : vector<8x512xf32>
    %112 = arith.mulf %101, %111 : vector<8x512xf32>
    %113 = arith.truncf %112 : vector<8x512xf32> to vector<8x512xbf16>
    %c0_69 = arith.constant 0 : index
    %c0_70 = arith.constant 0 : index
    %c0_71 = arith.constant 0 : index
    %114 = vector.load %arg17[%c0_69, %c0_70, %c0_71] : memref<1x512x128xbf16, #tpu.memory_space<vmem>>, vector<1x512x128xbf16>
    %115 = vector.shape_cast %114 : vector<1x512x128xbf16> to vector<512x128xbf16>
    %cst_72 = arith.constant dense<0.000000e+00> : vector<8x128xf32>
    %116 = tpu.matmul %113, %115, %cst_72 {dimension_numbers = #tpu.dot_dimension_numbers<[1], [0], [0], [1], [0, 0, 1, 1], [], []>} : vector<8x512xbf16>, vector<512x128xbf16>, vector<8x128xf32> -> vector<8x128xf32>
    %c0_73 = arith.constant 0 : index
    %c0_74 = arith.constant 0 : index
    %c0_75 = arith.constant 0 : index
    %117 = vector.load %arg18[%c0_73, %c0_74, %c0_75] : memref<1x1x128xf32, #tpu.memory_space<vmem>>, vector<1x1x128xf32>
    %118 = vector.shape_cast %117 : vector<1x1x128xf32> to vector<1x128xf32>
    %119 = vector.broadcast %118 : vector<1x128xf32> to vector<8x128xf32>
    %120 = arith.addf %116, %119 : vector<8x128xf32>
    %121 = arith.addf %91, %120 : vector<8x128xf32>
    %c0_76 = arith.constant 0 : index
    %c0_77 = arith.constant 0 : index
    %c0_78 = arith.constant 0 : index
    %122 = vector.load %arg19[%c0_76, %c0_77, %c0_78] : memref<1x1x128xf32, #tpu.memory_space<vmem>>, vector<1x1x128xf32>
    %123 = vector.shape_cast %122 : vector<1x1x128xf32> to vector<1x128xf32>
    %c0_79 = arith.constant 0 : index
    %c0_80 = arith.constant 0 : index
    %c0_81 = arith.constant 0 : index
    %124 = vector.load %arg20[%c0_79, %c0_80, %c0_81] : memref<1x1x128xf32, #tpu.memory_space<vmem>>, vector<1x1x128xf32>
    %125 = vector.shape_cast %124 : vector<1x1x128xf32> to vector<1x128xf32>
    %cst_82 = arith.constant dense<0.000000e+00> : vector<8xf32>
    %126 = vector.multi_reduction <add>, %121, %cst_82 [1] : vector<8x128xf32> to vector<8xf32>
    %127 = vector.shape_cast %126 : vector<8xf32> to vector<8x1xf32>
    %cst_83 = arith.constant 1.280000e+02 : f32
    %128 = vector.broadcast %cst_83 : f32 to vector<8x1xf32>
    %129 = arith.divf %127, %128 : vector<8x1xf32>
    %130 = vector.broadcast %129 : vector<8x1xf32> to vector<8x128xf32>
    %131 = arith.subf %121, %130 : vector<8x128xf32>
    %132 = arith.mulf %131, %131 : vector<8x128xf32>
    %cst_84 = arith.constant dense<0.000000e+00> : vector<8xf32>
    %133 = vector.multi_reduction <add>, %132, %cst_84 [1] : vector<8x128xf32> to vector<8xf32>
    %134 = vector.shape_cast %133 : vector<8xf32> to vector<8x1xf32>
    %cst_85 = arith.constant 1.280000e+02 : f32
    %135 = vector.broadcast %cst_85 : f32 to vector<8x1xf32>
    %136 = arith.divf %134, %135 : vector<8x1xf32>
    %137 = vector.broadcast %129 : vector<8x1xf32> to vector<8x128xf32>
    %138 = arith.subf %121, %137 : vector<8x128xf32>
    %cst_86 = arith.constant 9.99999996E-13 : f32
    %139 = vector.broadcast %cst_86 : f32 to vector<8x1xf32>
    %140 = arith.addf %136, %139 : vector<8x1xf32>
    %141 = math.rsqrt %140 : vector<8x1xf32>
    %142 = vector.broadcast %141 : vector<8x1xf32> to vector<8x128xf32>
    %143 = arith.mulf %138, %142 : vector<8x128xf32>
    %144 = vector.broadcast %123 : vector<1x128xf32> to vector<8x128xf32>
    %145 = arith.mulf %143, %144 : vector<8x128xf32>
    %146 = vector.broadcast %125 : vector<1x128xf32> to vector<8x128xf32>
    %147 = arith.addf %145, %146 : vector<8x128xf32>
    %c0_87 = arith.constant 0 : index
    %c0_88 = arith.constant 0 : index
    %148 = vector.load %arg22[%c0_87, %c0_88] : memref<8x128xf32, #tpu.memory_space<vmem>>, vector<8x128xf32>
    tpu.vector_store %arg22[%c0_87, %c0_88], %147 {strides = array<i32>} : memref<8x128xf32, #tpu.memory_space<vmem>>, vector<8x128xf32>,
    %c1_i32 = arith.constant 1 : i32
    %149 = arith.cmpi eq, %arg1, %c1_i32 : i32
    %150 = arith.extui %149 : i1 to i32
    %c0_i32_89 = arith.constant 0 : i32
    %151 = arith.cmpi ne, %150, %c0_i32_89 : i32
    scf.if %151 {
      %c0_90 = arith.constant 0 : index
      %c0_91 = arith.constant 0 : index
      %c0_92 = arith.constant 0 : index
      %152 = vector.load %arg4[%c0_90, %c0_91, %c0_92] : memref<1x8x1xf32, #tpu.memory_space<vmem>>, vector<1x8x1xf32>
      %153 = vector.shape_cast %152 : vector<1x8x1xf32> to vector<8x1xf32>
      %154 = vector.broadcast %153 : vector<8x1xf32> to vector<8x128xf32>
      %155 = arith.mulf %147, %154 : vector<8x128xf32>
      %cst_93 = arith.constant dense<0.000000e+00> : vector<128xf32>
      %156 = vector.multi_reduction <add>, %155, %cst_93 [0] : vector<8x128xf32> to vector<128xf32>
      %157 = vector.shape_cast %156 : vector<128xf32> to vector<1x128xf32>
      %158 = vector.shape_cast %153 : vector<8x1xf32> to vector<1x8x1xf32>
      %cst_94 = arith.constant dense<0.000000e+00> : vector<1xf32>
      %159 = vector.multi_reduction <add>, %158, %cst_94 [1, 2] : vector<1x8x1xf32> to vector<1xf32>
      %160 = vector.shape_cast %159 : vector<1xf32> to vector<1x1x1xf32>
      %161 = vector.extract %160[0, 0, 0] : f32 from vector<1x1x1xf32>
      %cst_95 = arith.constant 1.000000e+00 : f32
      %162 = arith.maximumf %161, %cst_95 : f32
      %cst_96 = arith.constant 1.000000e+00 : f32
      %163 = arith.divf %cst_96, %162 : f32
      %164 = vector.broadcast %163 : f32 to vector<1x128xf32>
      %165 = arith.mulf %157, %164 : vector<1x128xf32>
      %c0_97 = arith.constant 0 : index
      %c0_98 = arith.constant 0 : index
      %c0_99 = arith.constant 0 : index
      %166 = vector.load %arg21[%c0_97, %c0_98, %c0_99] : memref<1x1x128xf32, #tpu.memory_space<vmem>>, vector<1x1x128xf32>
      %167 = vector.shape_cast %166 : vector<1x1x128xf32> to vector<1x128xf32>
      %168 = vector.shape_cast %165 : vector<1x128xf32> to vector<1x1x128xf32>
      tpu.vector_store %arg21[%c0_97, %c0_98, %c0_99], %168 {strides = array<i32>} : memref<1x1x128xf32, #tpu.memory_space<vmem>>, vector<1x1x128xf32>,
    } else {
    }
    return
  }
  func.func @transform_0(%arg0: i32, %arg1: i32) -> (i32, i32, i32) {
    %c0_i32 = arith.constant 0 : i32
    %c0_i32_0 = arith.constant 0 : i32
    %c0_i32_1 = arith.constant 0 : i32
    return %arg0, %c0_i32, %c0_i32_0 : i32, i32, i32
  }
  func.func @transform_1(%arg0: i32, %arg1: i32) -> (i32, i32, i32) {
    %c0_i32 = arith.constant 0 : i32
    %c0_i32_0 = arith.constant 0 : i32
    %c0_i32_1 = arith.constant 0 : i32
    return %arg0, %c0_i32, %c0_i32_0 : i32, i32, i32
  }
  func.func @transform_2(%arg0: i32, %arg1: i32) -> (i32, i32, i32) {
    %c0_i32 = arith.constant 0 : i32
    %c0_i32_0 = arith.constant 0 : i32
    %c0_i32_1 = arith.constant 0 : i32
    return %arg0, %c0_i32, %c0_i32_0 : i32, i32, i32
  }
  func.func @transform_3(%arg0: i32, %arg1: i32) -> (i32, i32, i32, i32) {
    %c0_i32 = arith.constant 0 : i32
    %c0_i32_0 = arith.constant 0 : i32
    %c0_i32_1 = arith.constant 0 : i32
    %c0_i32_2 = arith.constant 0 : i32
    return %arg1, %c0_i32, %c0_i32_0, %c0_i32_1 : i32, i32, i32, i32
  }
  func.func @transform_4(%arg0: i32, %arg1: i32) -> (i32, i32, i32, i32) {
    %c0_i32 = arith.constant 0 : i32
    %c0_i32_0 = arith.constant 0 : i32
    %c0_i32_1 = arith.constant 0 : i32
    %c0_i32_2 = arith.constant 0 : i32
    return %arg1, %c0_i32, %c0_i32_0, %c0_i32_1 : i32, i32, i32, i32
  }
  func.func @transform_5(%arg0: i32, %arg1: i32) -> (i32, i32, i32, i32) {
    %c0_i32 = arith.constant 0 : i32
    %c0_i32_0 = arith.constant 0 : i32
    %c0_i32_1 = arith.constant 0 : i32
    %c0_i32_2 = arith.constant 0 : i32
    return %arg1, %c0_i32, %c0_i32_0, %c0_i32_1 : i32, i32, i32, i32
  }
  func.func @transform_6(%arg0: i32, %arg1: i32) -> (i32, i32, i32, i32) {
    %c0_i32 = arith.constant 0 : i32
    %c0_i32_0 = arith.constant 0 : i32
    %c0_i32_1 = arith.constant 0 : i32
    %c0_i32_2 = arith.constant 0 : i32
    return %arg1, %c0_i32, %c0_i32_0, %c0_i32_1 : i32, i32, i32, i32
  }
  func.func @transform_7(%arg0: i32, %arg1: i32) -> (i32, i32, i32, i32) {
    %c0_i32 = arith.constant 0 : i32
    %c0_i32_0 = arith.constant 0 : i32
    %c0_i32_1 = arith.constant 0 : i32
    %c0_i32_2 = arith.constant 0 : i32
    return %arg1, %c0_i32, %c0_i32_0, %c0_i32_1 : i32, i32, i32, i32
  }
  func.func @transform_8(%arg0: i32, %arg1: i32) -> (i32, i32, i32, i32) {
    %c0_i32 = arith.constant 0 : i32
    %c0_i32_0 = arith.constant 0 : i32
    %c0_i32_1 = arith.constant 0 : i32
    %c0_i32_2 = arith.constant 0 : i32
    return %arg1, %c0_i32, %c0_i32_0, %c0_i32_1 : i32, i32, i32, i32
  }
  func.func @transform_9(%arg0: i32, %arg1: i32) -> (i32, i32, i32, i32) {
    %c0_i32 = arith.constant 0 : i32
    %c0_i32_0 = arith.constant 0 : i32
    %c0_i32_1 = arith.constant 0 : i32
    %c0_i32_2 = arith.constant 0 : i32
    return %arg1, %c0_i32, %c0_i32_0, %c0_i32_1 : i32, i32, i32, i32
  }
  func.func @transform_10(%arg0: i32, %arg1: i32) -> (i32, i32, i32) {
    %c0_i32 = arith.constant 0 : i32
    %c0_i32_0 = arith.constant 0 : i32
    %c0_i32_1 = arith.constant 0 : i32
    return %arg1, %c0_i32, %c0_i32_0 : i32, i32, i32
  }
  func.func @transform_11(%arg0: i32, %arg1: i32) -> (i32, i32, i32) {
    %c0_i32 = arith.constant 0 : i32
    %c0_i32_0 = arith.constant 0 : i32
    %c0_i32_1 = arith.constant 0 : i32
    return %arg1, %c0_i32, %c0_i32_0 : i32, i32, i32
  }
  func.func @transform_12(%arg0: i32, %arg1: i32) -> (i32, i32, i32) {
    %c0_i32 = arith.constant 0 : i32
    %c0_i32_0 = arith.constant 0 : i32
    %c0_i32_1 = arith.constant 0 : i32
    return %arg1, %c0_i32, %c0_i32_0 : i32, i32, i32
  }
  func.func @transform_13(%arg0: i32, %arg1: i32) -> (i32, i32, i32) {
    %c0_i32 = arith.constant 0 : i32
    %c0_i32_0 = arith.constant 0 : i32
    %c0_i32_1 = arith.constant 0 : i32
    return %arg1, %c0_i32, %c0_i32_0 : i32, i32, i32
  }
  func.func @transform_14(%arg0: i32, %arg1: i32) -> (i32, i32, i32) {
    %c0_i32 = arith.constant 0 : i32
    %c0_i32_0 = arith.constant 0 : i32
    %c0_i32_1 = arith.constant 0 : i32
    return %arg1, %c0_i32, %c0_i32_0 : i32, i32, i32
  }
  func.func @transform_15(%arg0: i32, %arg1: i32) -> (i32, i32, i32) {
    %c0_i32 = arith.constant 0 : i32
    %c0_i32_0 = arith.constant 0 : i32
    %c0_i32_1 = arith.constant 0 : i32
    return %arg1, %c0_i32, %c0_i32_0 : i32, i32, i32
  }
  func.func @transform_16(%arg0: i32, %arg1: i32) -> (i32, i32, i32) {
    %c0_i32 = arith.constant 0 : i32
    %c0_i32_0 = arith.constant 0 : i32
    %c0_i32_1 = arith.constant 0 : i32
    return %arg1, %c0_i32, %c0_i32_0 : i32, i32, i32
  }
  func.func @transform_17(%arg0: i32, %arg1: i32) -> (i32, i32, i32) {
    %c0_i32 = arith.constant 0 : i32
    %c0_i32_0 = arith.constant 0 : i32
    %c0_i32_1 = arith.constant 0 : i32
    return %arg1, %c0_i32, %c0_i32_0 : i32, i32, i32
  }
  func.func @transform_18(%arg0: i32, %arg1: i32) -> (i32, i32, i32) {
    %c0_i32 = arith.constant 0 : i32
    %c0_i32_0 = arith.constant 0 : i32
    %c0_i32_1 = arith.constant 0 : i32
    return %arg1, %c0_i32, %c0_i32_0 : i32, i32, i32
  }
  func.func @transform_19(%arg0: i32, %arg1: i32) -> (i32, i32, i32) {
    %c0_i32 = arith.constant 0 : i32
    %c0_i32_0 = arith.constant 0 : i32
    %c0_i32_1 = arith.constant 0 : i32
    return %arg0, %c0_i32, %c0_i32_0 : i32, i32, i32
  }
}

</mosaic_0001>

<llo_original>
// kernel: ablang_forward.1
$region0: #{ablang_forward.1}
  #allocation0 [shape = 'u32[]', space=smem, size = 0x4, offset = 0x4, fixed_abs, tag = 'smem constant byte address 0x4 - core index']
  #allocation1 [shape = 'u32[72,128]{1,0:T(1,128)}', space=vmem, size = 0x9000, scoped, tag = 'internal scratch']
  #allocation2 [shape = 'f32[8,128]{1,0:T(8,128)}', space=vmem, size = 0x1000, scoped, tag = 'scratch operand']
  %s0 = inlined_call_operand.vmem [shape: f32[2,8,128], index: 0, kind: input, shape index: {}]
  %s1 = inlined_call_operand.vmem [shape: f32[2,1,8], index: 1, kind: input, shape index: {}]
  %s2 = inlined_call_operand.vmem [shape: f32[2,8,1], index: 2, kind: input, shape index: {}]
  %s3 = inlined_call_operand.vmem [shape: bf16[2,4,128,32], index: 3, kind: input, shape index: {}]
  %s4 = inlined_call_operand.vmem [shape: f32[2,4,1,32], index: 4, kind: input, shape index: {}]
  %s5 = inlined_call_operand.vmem [shape: bf16[2,4,128,32], index: 5, kind: input, shape index: {}]
  %s6 = inlined_call_operand.vmem [shape: f32[2,4,1,32], index: 6, kind: input, shape index: {}]
  %s7 = inlined_call_operand.vmem [shape: bf16[2,4,128,32], index: 7, kind: input, shape index: {}]
  %s8 = inlined_call_operand.vmem [shape: f32[2,4,1,32], index: 8, kind: input, shape index: {}]
  %s9 = inlined_call_operand.vmem [shape: bf16[2,4,32,128], index: 9, kind: input, shape index: {}]
  %s10 = inlined_call_operand.vmem [shape: f32[2,1,128], index: 10, kind: input, shape index: {}]
  %s11 = inlined_call_operand.vmem [shape: f32[2,1,128], index: 11, kind: input, shape index: {}]
  %s12 = inlined_call_operand.vmem [shape: f32[2,1,128], index: 12, kind: input, shape index: {}]
  %s13 = inlined_call_operand.vmem [shape: bf16[2,128,512], index: 13, kind: input, shape index: {}]
  %s14 = inlined_call_operand.vmem [shape: f32[2,1,512], index: 14, kind: input, shape index: {}]
  %s15 = inlined_call_operand.vmem [shape: bf16[2,512,128], index: 15, kind: input, shape index: {}]
  %s16 = inlined_call_operand.vmem [shape: f32[2,1,128], index: 16, kind: input, shape index: {}]
  %s17 = inlined_call_operand.vmem [shape: f32[2,1,128], index: 17, kind: input, shape index: {}]
  %s18 = inlined_call_operand.vmem [shape: f32[2,1,128], index: 18, kind: input, shape index: {}]
  %s19 = inlined_call_operand.hbm [shape: f32[2,1,128], index: 19, kind: output, shape index: {}]
  %s20 = sld [smem:[#allocation0]]
  $region117: #{ablang_forward.1} parent=0
    _
  %s22 = ssub.s32 1, %s20
  %s23 = scalar_select 0, %s22, %s20
  $region1: #{ablang_forward.1} parent=0
    #allocation3 [shape = 'u8[1024]{0}', space=vmem, size = 0x400, scoped, tag = 'output window, operand 0']
    #allocation4 [shape = 's32[2]{0}', space=sflag, size = 0x8, scoped, tag = 'scoped memory for ablang_forward.1']
    %24 = vsyncpa [#allocation4], 0
    %s25 = scalar_lea.sflag [#allocation4], 1
    %26 = vsyncpa %s25, 0
    loop: start=0, step=1, limit=6
    $region2: #{ablang_forward.1} parent=1 // loop_pre_header
      _
    $region3: #{ablang_forward.1} parent=1 // loop_header
      %s28 = sphi 0, %s32
      %p29 = scmp.ge.s32.totalorder %s28, 6
      %s35 = sphi 0, %s47
      %s36 = sphi 0, %s43
      %s37 = sphi 0, %s35
      %s38 = sphi 0, %s36
      %s39 = sphi 0, %s37
      %s40 = sphi 0, %s38
      %s50 = sphi 0, %s52
      %s53 = sphi 0, %s50
      %s54 = sphi 0, %s53
      %s70 = sphi 0, %s54
      %s76 = sphi 0, %s78
      %s79 = sphi 0, %s76
      %s80 = sphi 0, %s79
      %s96 = sphi 0, %s80
      %s102 = sphi 0, %s104
      %s105 = sphi 0, %s102
      %s106 = sphi 0, %s105
      %s122 = sphi 0, %s106
      %s128 = sphi 0, %s130
      %s131 = sphi 0, %s128
      %s132 = sphi 0, %s131
      %s148 = sphi 0, %s132
      %s154 = sphi 0, %s156
      %s157 = sphi 0, %s154
      %s158 = sphi 0, %s157
      %s174 = sphi 0, %s158
      %s180 = sphi 0, %s182
      %s183 = sphi 0, %s180
      %s184 = sphi 0, %s183
      %s200 = sphi 0, %s184
      %s206 = sphi 0, %s208
      %s209 = sphi 0, %s206
      %s210 = sphi 0, %s209
      %s226 = sphi 0, %s210
      %s232 = sphi 0, %s234
      %s235 = sphi 0, %s232
      %s236 = sphi 0, %s235
      %s252 = sphi 0, %s236
      %s258 = sphi 0, %s260
      %s261 = sphi 0, %s258
      %s262 = sphi 0, %s261
      %s278 = sphi 0, %s262
      %s284 = sphi 0, %s286
      %s287 = sphi 0, %s284
      %s288 = sphi 0, %s287
      %s304 = sphi 0, %s288
      %s310 = sphi 0, %s312
      %s313 = sphi 0, %s310
      %s314 = sphi 0, %s313
      %s330 = sphi 0, %s314
      %s336 = sphi 0, %s338
      %s339 = sphi 0, %s336
      %s340 = sphi 0, %s339
      %s356 = sphi 0, %s340
      %s362 = sphi 0, %s364
      %s365 = sphi 0, %s362
      %s366 = sphi 0, %s365
      %s382 = sphi 0, %s366
      %s388 = sphi 0, %s390
      %s391 = sphi 0, %s388
      %s392 = sphi 0, %s391
      %s408 = sphi 0, %s392
      %s414 = sphi 0, %s416
      %s417 = sphi 0, %s414
      %s418 = sphi 0, %s417
      %s434 = sphi 0, %s418
      %s440 = sphi 0, %s442
      %s443 = sphi 0, %s440
      %s444 = sphi 0, %s443
      %s460 = sphi 0, %s444
      %s466 = sphi 0, %s468
      %s469 = sphi 0, %s466
      %s470 = sphi 0, %s469
      %s486 = sphi 0, %s470
      %s492 = sphi 0, %s494
      %s495 = sphi 0, %s492
      %s496 = sphi 0, %s495
      %s512 = sphi 0, %s496
      %s518 = sphi 0, %s520
      %s521 = sphi 0, %s518
      %s522 = sphi 0, %s521
      %s538 = sphi 0, %s522
      %s544 = sphi 0, %s546
      %s547 = sphi 0, %s544
      %s548 = sphi 0, %s547
      %s564 = sphi 0, %s548
    $region4: #{ablang_forward.1} parent=1 // loop_header_branch
      %31 = sbr.rel (%p29) target = $region8
    $region5: #{ablang_forward.1} parent=1 // loop_body
      %s33 = ssub.s32 %s28, 1
      %s34 = ssub.s32 %s28, 2
      %s41 = sadd.s32 1, %s36
      %p42 = scmp.ge.s32.totalorder %s41, 2
      %s43 = scalar_select %p42, 0, %s41
      %s44 = sadd.s32 1, %s35
      %s45 = scalar_select %p42, %s44, %s35
      %p46 = scmp.ge.s32.totalorder %s45, 2
      %s47 = scalar_select %p46, 0, %s45
      %s48 = ssub.s32 %s35, %s47
      %p49 = scmp.eq.s32.totalorder %s48, 0
      %s51 = sadd.s32 %s50, 1
      %s52 = scalar_select %p49, %s50, %s51
      %p55 = pneg %p49
      %p56 = scmp.eq.s32.totalorder %s28, 3
      %p57 = por %p55, %p56
      %p58 = scmp.ne.s32.totalorder %s50, %s53
      %p59 = scmp.eq.s32.totalorder %s28, 0
      %p60 = por %p58, %p59
      %p61 = scmp.ne.s32.totalorder %s50, %s53
      %p62 = scmp.eq.s32.totalorder %s33, 3
      %p63 = por %p61, %p62
      %p64 = scmp.ne.s32.totalorder %s53, %s54
      %p65 = scmp.eq.s32.totalorder %s33, 0
      %p66 = por %p64, %p65
      %p67 = scmp.ne.s32.totalorder %s53, %s54
      %p68 = scmp.eq.s32.totalorder %s34, 3
      %p69 = por %p67, %p68
      %p71 = scmp.ne.s32.totalorder %s54, %s70
      %p72 = scmp.eq.s32.totalorder %s34, 0
      %p73 = por %p71, %p72
      %s74 = ssub.s32 %s35, %s47
      %p75 = scmp.eq.s32.totalorder %s74, 0
      %s77 = sadd.s32 %s76, 1
      %s78 = scalar_select %p75, %s76, %s77
      %p81 = pneg %p75
      %p82 = scmp.eq.s32.totalorder %s28, 3
      %p83 = por %p81, %p82
      %p84 = scmp.ne.s32.totalorder %s76, %s79
      %p85 = scmp.eq.s32.totalorder %s28, 0
      %p86 = por %p84, %p85
      %p87 = scmp.ne.s32.totalorder %s76, %s79
      %p88 = scmp.eq.s32.totalorder %s33, 3
      %p89 = por %p87, %p88
      %p90 = scmp.ne.s32.totalorder %s79, %s80
      %p91 = scmp.eq.s32.totalorder %s33, 0
      %p92 = por %p90, %p91
      %p93 = scmp.ne.s32.totalorder %s79, %s80
      %p94 = scmp.eq.s32.totalorder %s34, 3
      %p95 = por %p93, %p94
      %p97 = scmp.ne.s32.totalorder %s80, %s96
      %p98 = scmp.eq.s32.totalorder %s34, 0
      %p99 = por %p97, %p98
      %s100 = ssub.s32 %s35, %s47
      %p101 = scmp.eq.s32.totalorder %s100, 0
      %s103 = sadd.s32 %s102, 1
      %s104 = scalar_select %p101, %s102, %s103
      %p107 = pneg %p101
      %p108 = scmp.eq.s32.totalorder %s28, 3
      %p109 = por %p107, %p108
      %p110 = scmp.ne.s32.totalorder %s102, %s105
      %p111 = scmp.eq.s32.totalorder %s28, 0
      %p112 = por %p110, %p111
      %p113 = scmp.ne.s32.totalorder %s102, %s105
      %p114 = scmp.eq.s32.totalorder %s33, 3
      %p115 = por %p113, %p114
      %p116 = scmp.ne.s32.totalorder %s105, %s106
      %p117 = scmp.eq.s32.totalorder %s33, 0
      %p118 = por %p116, %p117
      %p119 = scmp.ne.s32.totalorder %s105, %s106
      %p120 = scmp.eq.s32.totalorder %s34, 3
      %p121 = por %p119, %p120
      %p123 = scmp.ne.s32.totalorder %s106, %s122
      %p124 = scmp.eq.s32.totalorder %s34, 0
      %p125 = por %p123, %p124
      %s126 = ssub.s32 %s36, %s43
      %p127 = scmp.eq.s32.totalorder %s126, 0
      %s129 = sadd.s32 %s128, 1
      %s130 = scalar_select %p127, %s128, %s129
      %p133 = pneg %p127
      %p134 = scmp.eq.s32.totalorder %s28, 3
      %p135 = por %p133, %p134
      %p136 = scmp.ne.s32.totalorder %s128, %s131
      %p137 = scmp.eq.s32.totalorder %s28, 0
      %p138 = por %p136, %p137
      %p139 = scmp.ne.s32.totalorder %s128, %s131
      %p140 = scmp.eq.s32.totalorder %s33, 3
      %p141 = por %p139, %p140
      %p142 = scmp.ne.s32.totalorder %s131, %s132
      %p143 = scmp.eq.s32.totalorder %s33, 0
      %p144 = por %p142, %p143
      %p145 = scmp.ne.s32.totalorder %s131, %s132
      %p146 = scmp.eq.s32.totalorder %s34, 3
      %p147 = por %p145, %p146
      %p149 = scmp.ne.s32.totalorder %s132, %s148
      %p150 = scmp.eq.s32.totalorder %s34, 0
      %p151 = por %p149, %p150
      %s152 = ssub.s32 %s36, %s43
      %p153 = scmp.eq.s32.totalorder %s152, 0
      %s155 = sadd.s32 %s154, 1
      %s156 = scalar_select %p153, %s154, %s155
      %p159 = pneg %p153
      %p160 = scmp.eq.s32.totalorder %s28, 3
      %p161 = por %p159, %p160
      %p162 = scmp.ne.s32.totalorder %s154, %s157
      %p163 = scmp.eq.s32.totalorder %s28, 0
      %p164 = por %p162, %p163
      %p165 = scmp.ne.s32.totalorder %s154, %s157
      %p166 = scmp.eq.s32.totalorder %s33, 3
      %p167 = por %p165, %p166
      %p168 = scmp.ne.s32.totalorder %s157, %s158
      %p169 = scmp.eq.s32.totalorder %s33, 0
      %p170 = por %p168, %p169
      %p171 = scmp.ne.s32.totalorder %s157, %s158
      %p172 = scmp.eq.s32.totalorder %s34, 3
      %p173 = por %p171, %p172
      %p175 = scmp.ne.s32.totalorder %s158, %s174
      %p176 = scmp.eq.s32.totalorder %s34, 0
      %p177 = por %p175, %p176
      %s178 = ssub.s32 %s36, %s43
      %p179 = scmp.eq.s32.totalorder %s178, 0
      %s181 = sadd.s32 %s180, 1
      %s182 = scalar_select %p179, %s180, %s181
      %p185 = pneg %p179
      %p186 = scmp.eq.s32.totalorder %s28, 3
      %p187 = por %p185, %p186
      %p188 = scmp.ne.s32.totalorder %s180, %s183
      %p189 = scmp.eq.s32.totalorder %s28, 0
      %p190 = por %p188, %p189
      %p191 = scmp.ne.s32.totalorder %s180, %s183
      %p192 = scmp.eq.s32.totalorder %s33, 3
      %p193 = por %p191, %p192
      %p194 = scmp.ne.s32.totalorder %s183, %s184
      %p195 = scmp.eq.s32.totalorder %s33, 0
      %p196 = por %p194, %p195
      %p197 = scmp.ne.s32.totalorder %s183, %s184
      %p198 = scmp.eq.s32.totalorder %s34, 3
      %p199 = por %p197, %p198
      %p201 = scmp.ne.s32.totalorder %s184, %s200
      %p202 = scmp.eq.s32.totalorder %s34, 0
      %p203 = por %p201, %p202
      %s204 = ssub.s32 %s36, %s43
      %p205 = scmp.eq.s32.totalorder %s204, 0
      %s207 = sadd.s32 %s206, 1
      %s208 = scalar_select %p205, %s206, %s207
      %p211 = pneg %p205
      %p212 = scmp.eq.s32.totalorder %s28, 3
      %p213 = por %p211, %p212
      %p214 = scmp.ne.s32.totalorder %s206, %s209
      %p215 = scmp.eq.s32.totalorder %s28, 0
      %p216 = por %p214, %p215
      %p217 = scmp.ne.s32.totalorder %s206, %s209
      %p218 = scmp.eq.s32.totalorder %s33, 3
      %p219 = por %p217, %p218
      %p220 = scmp.ne.s32.totalorder %s209, %s210
      %p221 = scmp.eq.s32.totalorder %s33, 0
      %p222 = por %p220, %p221
      %p223 = scmp.ne.s32.totalorder %s209, %s210
      %p224 = scmp.eq.s32.totalorder %s34, 3
      %p225 = por %p223, %p224
      %p227 = scmp.ne.s32.totalorder %s210, %s226
      %p228 = scmp.eq.s32.totalorder %s34, 0
      %p229 = por %p227, %p228
      %s230 = ssub.s32 %s36, %s43
      %p231 = scmp.eq.s32.totalorder %s230, 0
      %s233 = sadd.s32 %s232, 1
      %s234 = scalar_select %p231, %s232, %s233
      %p237 = pneg %p231
      %p238 = scmp.eq.s32.totalorder %s28, 3
      %p239 = por %p237, %p238
      %p240 = scmp.ne.s32.totalorder %s232, %s235
      %p241 = scmp.eq.s32.totalorder %s28, 0
      %p242 = por %p240, %p241
      %p243 = scmp.ne.s32.totalorder %s232, %s235
      %p244 = scmp.eq.s32.totalorder %s33, 3
      %p245 = por %p243, %p244
      %p246 = scmp.ne.s32.totalorder %s235, %s236
      %p247 = scmp.eq.s32.totalorder %s33, 0
      %p248 = por %p246, %p247
      %p249 = scmp.ne.s32.totalorder %s235, %s236
      %p250 = scmp.eq.s32.totalorder %s34, 3
      %p251 = por %p249, %p250
      %p253 = scmp.ne.s32.totalorder %s236, %s252
      %p254 = scmp.eq.s32.totalorder %s34, 0
      %p255 = por %p253, %p254
      %s256 = ssub.s32 %s36, %s43
      %p257 = scmp.eq.s32.totalorder %s256, 0
      %s259 = sadd.s32 %s258, 1
      %s260 = scalar_select %p257, %s258, %s259
      %p263 = pneg %p257
      %p264 = scmp.eq.s32.totalorder %s28, 3
      %p265 = por %p263, %p264
      %p266 = scmp.ne.s32.totalorder %s258, %s261
      %p267 = scmp.eq.s32.totalorder %s28, 0
      %p268 = por %p266, %p267
      %p269 = scmp.ne.s32.totalorder %s258, %s261
      %p270 = scmp.eq.s32.totalorder %s33, 3
      %p271 = por %p269, %p270
      %p272 = scmp.ne.s32.totalorder %s261, %s262
      %p273 = scmp.eq.s32.totalorder %s33, 0
      %p274 = por %p272, %p273
      %p275 = scmp.ne.s32.totalorder %s261, %s262
      %p276 = scmp.eq.s32.totalorder %s34, 3
      %p277 = por %p275, %p276
      %p279 = scmp.ne.s32.totalorder %s262, %s278
      %p280 = scmp.eq.s32.totalorder %s34, 0
      %p281 = por %p279, %p280
      %s282 = ssub.s32 %s36, %s43
      %p283 = scmp.eq.s32.totalorder %s282, 0
      %s285 = sadd.s32 %s284, 1
      %s286 = scalar_select %p283, %s284, %s285
      %p289 = pneg %p283
      %p290 = scmp.eq.s32.totalorder %s28, 3
      %p291 = por %p289, %p290
      %p292 = scmp.ne.s32.totalorder %s284, %s287
      %p293 = scmp.eq.s32.totalorder %s28, 0
      %p294 = por %p292, %p293
      %p295 = scmp.ne.s32.totalorder %s284, %s287
      %p296 = scmp.eq.s32.totalorder %s33, 3
      %p297 = por %p295, %p296
      %p298 = scmp.ne.s32.totalorder %s287, %s288
      %p299 = scmp.eq.s32.totalorder %s33, 0
      %p300 = por %p298, %p299
      %p301 = scmp.ne.s32.totalorder %s287, %s288
      %p302 = scmp.eq.s32.totalorder %s34, 3
      %p303 = por %p301, %p302
      %p305 = scmp.ne.s32.totalorder %s288, %s304
      %p306 = scmp.eq.s32.totalorder %s34, 0
      %p307 = por %p305, %p306
      %s308 = ssub.s32 %s36, %s43
      %p309 = scmp.eq.s32.totalorder %s308, 0
      %s311 = sadd.s32 %s310, 1
      %s312 = scalar_select %p309, %s310, %s311
      %p315 = pneg %p309
      %p316 = scmp.eq.s32.totalorder %s28, 3
      %p317 = por %p315, %p316
      %p318 = scmp.ne.s32.totalorder %s310, %s313
      %p319 = scmp.eq.s32.totalorder %s28, 0
      %p320 = por %p318, %p319
      %p321 = scmp.ne.s32.totalorder %s310, %s313
      %p322 = scmp.eq.s32.totalorder %s33, 3
      %p323 = por %p321, %p322
      %p324 = scmp.ne.s32.totalorder %s313, %s314
      %p325 = scmp.eq.s32.totalorder %s33, 0
      %p326 = por %p324, %p325
      %p327 = scmp.ne.s32.totalorder %s313, %s314
      %p328 = scmp.eq.s32.totalorder %s34, 3
      %p329 = por %p327, %p328
      %p331 = scmp.ne.s32.totalorder %s314, %s330
      %p332 = scmp.eq.s32.totalorder %s34, 0
      %p333 = por %p331, %p332
      %s334 = ssub.s32 %s36, %s43
      %p335 = scmp.eq.s32.totalorder %s334, 0
      %s337 = sadd.s32 %s336, 1
      %s338 = scalar_select %p335, %s336, %s337
      %p341 = pneg %p335
      %p342 = scmp.eq.s32.totalorder %s28, 3
      %p343 = por %p341, %p342
      %p344 = scmp.ne.s32.totalorder %s336, %s339
      %p345 = scmp.eq.s32.totalorder %s28, 0
      %p346 = por %p344, %p345
      %p347 = scmp.ne.s32.totalorder %s336, %s339
      %p348 = scmp.eq.s32.totalorder %s33, 3
      %p349 = por %p347, %p348
      %p350 = scmp.ne.s32.totalorder %s339, %s340
      %p351 = scmp.eq.s32.totalorder %s33, 0
      %p352 = por %p350, %p351
      %p353 = scmp.ne.s32.totalorder %s339, %s340
      %p354 = scmp.eq.s32.totalorder %s34, 3
      %p355 = por %p353, %p354
      %p357 = scmp.ne.s32.totalorder %s340, %s356
      %p358 = scmp.eq.s32.totalorder %s34, 0
      %p359 = por %p357, %p358
      %s360 = ssub.s32 %s36, %s43
      %p361 = scmp.eq.s32.totalorder %s360, 0
      %s363 = sadd.s32 %s362, 1
      %s364 = scalar_select %p361, %s362, %s363
      %p367 = pneg %p361
      %p368 = scmp.eq.s32.totalorder %s28, 3
      %p369 = por %p367, %p368
      %p370 = scmp.ne.s32.totalorder %s362, %s365
      %p371 = scmp.eq.s32.totalorder %s28, 0
      %p372 = por %p370, %p371
      %p373 = scmp.ne.s32.totalorder %s362, %s365
      %p374 = scmp.eq.s32.totalorder %s33, 3
      %p375 = por %p373, %p374
      %p376 = scmp.ne.s32.totalorder %s365, %s366
      %p377 = scmp.eq.s32.totalorder %s33, 0
      %p378 = por %p376, %p377
      %p379 = scmp.ne.s32.totalorder %s365, %s366
      %p380 = scmp.eq.s32.totalorder %s34, 3
      %p381 = por %p379, %p380
      %p383 = scmp.ne.s32.totalorder %s366, %s382
      %p384 = scmp.eq.s32.totalorder %s34, 0
      %p385 = por %p383, %p384
      %s386 = ssub.s32 %s36, %s43
      %p387 = scmp.eq.s32.totalorder %s386, 0
      %s389 = sadd.s32 %s388, 1
      %s390 = scalar_select %p387, %s388, %s389
      %p393 = pneg %p387
      %p394 = scmp.eq.s32.totalorder %s28, 3
      %p395 = por %p393, %p394
      %p396 = scmp.ne.s32.totalorder %s388, %s391
      %p397 = scmp.eq.s32.totalorder %s28, 0
      %p398 = por %p396, %p397
      %p399 = scmp.ne.s32.totalorder %s388, %s391
      %p400 = scmp.eq.s32.totalorder %s33, 3
      %p401 = por %p399, %p400
      %p402 = scmp.ne.s32.totalorder %s391, %s392
      %p403 = scmp.eq.s32.totalorder %s33, 0
      %p404 = por %p402, %p403
      %p405 = scmp.ne.s32.totalorder %s391, %s392
      %p406 = scmp.eq.s32.totalorder %s34, 3
      %p407 = por %p405, %p406
      %p409 = scmp.ne.s32.totalorder %s392, %s408
      %p410 = scmp.eq.s32.totalorder %s34, 0
      %p411 = por %p409, %p410
      %s412 = ssub.s32 %s36, %s43
      %p413 = scmp.eq.s32.totalorder %s412, 0
      %s415 = sadd.s32 %s414, 1
      %s416 = scalar_select %p413, %s414, %s415
      %p419 = pneg %p413
      %p420 = scmp.eq.s32.totalorder %s28, 3
      %p421 = por %p419, %p420
      %p422 = scmp.ne.s32.totalorder %s414, %s417
      %p423 = scmp.eq.s32.totalorder %s28, 0
      %p424 = por %p422, %p423
      %p425 = scmp.ne.s32.totalorder %s414, %s417
      %p426 = scmp.eq.s32.totalorder %s33, 3
      %p427 = por %p425, %p426
      %p428 = scmp.ne.s32.totalorder %s417, %s418
      %p429 = scmp.eq.s32.totalorder %s33, 0
      %p430 = por %p428, %p429
      %p431 = scmp.ne.s32.totalorder %s417, %s418
      %p432 = scmp.eq.s32.totalorder %s34, 3
      %p433 = por %p431, %p432
      %p435 = scmp.ne.s32.totalorder %s418, %s434
      %p436 = scmp.eq.s32.totalorder %s34, 0
      %p437 = por %p435, %p436
      %s438 = ssub.s32 %s36, %s43
      %p439 = scmp.eq.s32.totalorder %s438, 0
      %s441 = sadd.s32 %s440, 1
      %s442 = scalar_select %p439, %s440, %s441
      %p445 = pneg %p439
      %p446 = scmp.eq.s32.totalorder %s28, 3
      %p447 = por %p445, %p446
      %p448 = scmp.ne.s32.totalorder %s440, %s443
      %p449 = scmp.eq.s32.totalorder %s28, 0
      %p450 = por %p448, %p449
      %p451 = scmp.ne.s32.totalorder %s440, %s443
      %p452 = scmp.eq.s32.totalorder %s33, 3
      %p453 = por %p451, %p452
      %p454 = scmp.ne.s32.totalorder %s443, %s444
      %p455 = scmp.eq.s32.totalorder %s33, 0
      %p456 = por %p454, %p455
      %p457 = scmp.ne.s32.totalorder %s443, %s444
      %p458 = scmp.eq.s32.totalorder %s34, 3
      %p459 = por %p457, %p458
      %p461 = scmp.ne.s32.totalorder %s444, %s460
      %p462 = scmp.eq.s32.totalorder %s34, 0
      %p463 = por %p461, %p462
      %s464 = ssub.s32 %s36, %s43
      %p465 = scmp.eq.s32.totalorder %s464, 0
      %s467 = sadd.s32 %s466, 1
      %s468 = scalar_select %p465, %s466, %s467
      %p471 = pneg %p465
      %p472 = scmp.eq.s32.totalorder %s28, 3
      %p473 = por %p471, %p472
      %p474 = scmp.ne.s32.totalorder %s466, %s469
      %p475 = scmp.eq.s32.totalorder %s28, 0
      %p476 = por %p474, %p475
      %p477 = scmp.ne.s32.totalorder %s466, %s469
      %p478 = scmp.eq.s32.totalorder %s33, 3
      %p479 = por %p477, %p478
      %p480 = scmp.ne.s32.totalorder %s469, %s470
      %p481 = scmp.eq.s32.totalorder %s33, 0
      %p482 = por %p480, %p481
      %p483 = scmp.ne.s32.totalorder %s469, %s470
      %p484 = scmp.eq.s32.totalorder %s34, 3
      %p485 = por %p483, %p484
      %p487 = scmp.ne.s32.totalorder %s470, %s486
      %p488 = scmp.eq.s32.totalorder %s34, 0
      %p489 = por %p487, %p488
      %s490 = ssub.s32 %s36, %s43
      %p491 = scmp.eq.s32.totalorder %s490, 0
      %s493 = sadd.s32 %s492, 1
      %s494 = scalar_select %p491, %s492, %s493
      %p497 = pneg %p491
      %p498 = scmp.eq.s32.totalorder %s28, 3
      %p499 = por %p497, %p498
      %p500 = scmp.ne.s32.totalorder %s492, %s495
      %p501 = scmp.eq.s32.totalorder %s28, 0
      %p502 = por %p500, %p501
      %p503 = scmp.ne.s32.totalorder %s492, %s495
      %p504 = scmp.eq.s32.totalorder %s33, 3
      %p505 = por %p503, %p504
      %p506 = scmp.ne.s32.totalorder %s495, %s496
      %p507 = scmp.eq.s32.totalorder %s33, 0
      %p508 = por %p506, %p507
      %p509 = scmp.ne.s32.totalorder %s495, %s496
      %p510 = scmp.eq.s32.totalorder %s34, 3
      %p511 = por %p509, %p510
      %p513 = scmp.ne.s32.totalorder %s496, %s512
      %p514 = scmp.eq.s32.totalorder %s34, 0
      %p515 = por %p513, %p514
      %s516 = ssub.s32 %s36, %s43
      %p517 = scmp.eq.s32.totalorder %s516, 0
      %s519 = sadd.s32 %s518, 1
      %s520 = scalar_select %p517, %s518, %s519
      %p523 = pneg %p517
      %p524 = scmp.eq.s32.totalorder %s28, 3
      %p525 = por %p523, %p524
      %p526 = scmp.ne.s32.totalorder %s518, %s521
      %p527 = scmp.eq.s32.totalorder %s28, 0
      %p528 = por %p526, %p527
      %p529 = scmp.ne.s32.totalorder %s518, %s521
      %p530 = scmp.eq.s32.totalorder %s33, 3
      %p531 = por %p529, %p530
      %p532 = scmp.ne.s32.totalorder %s521, %s522
      %p533 = scmp.eq.s32.totalorder %s33, 0
      %p534 = por %p532, %p533
      %p535 = scmp.ne.s32.totalorder %s521, %s522
      %p536 = scmp.eq.s32.totalorder %s34, 3
      %p537 = por %p535, %p536
      %p539 = scmp.ne.s32.totalorder %s522, %s538
      %p540 = scmp.eq.s32.totalorder %s34, 0
      %p541 = por %p539, %p540
      %s542 = ssub.s32 %s35, %s47
      %p543 = scmp.eq.s32.totalorder %s542, 0
      %s545 = sadd.s32 %s544, 1
      %s546 = scalar_select %p543, %s544, %s545
      %p549 = pneg %p543
      %p550 = scmp.eq.s32.totalorder %s28, 3
      %p551 = por %p549, %p550
      %p552 = scmp.ne.s32.totalorder %s544, %s547
      %p553 = scmp.eq.s32.totalorder %s28, 0
      %p554 = por %p552, %p553
      %p555 = scmp.ne.s32.totalorder %s544, %s547
      %p556 = scmp.eq.s32.totalorder %s33, 3
      %p557 = por %p555, %p556
      %p558 = scmp.ne.s32.totalorder %s547, %s548
      %p559 = scmp.eq.s32.totalorder %s33, 0
      %p560 = por %p558, %p559
      %p561 = scmp.ne.s32.totalorder %s547, %s548
      %p562 = scmp.eq.s32.totalorder %s34, 3
      %p563 = por %p561, %p562
      %p565 = scmp.ne.s32.totalorder %s548, %s564
      %p566 = scmp.eq.s32.totalorder %s34, 0
      %p567 = por %p565, %p566
      %p568 = scmp.le.s32.totalorder 1, %s28
      %p569 = scmp.lt.s32.totalorder %s28, 5
      %p570 = pnand %p568, %p569
      %p571 = pneg %p570
      // Predicated region
      $region9: #{ablang_forward.1} parent=5 // pred_check
        _
      $region10: #{ablang_forward.1} parent=5 // pred_check_branch
        %573 = sbr.rel (%p570) target = $region12
      $region11: #{ablang_forward.1} parent=5 // pred_region
        %s574 = ssub.s32 %s28, 1
      $region12: #{ablang_forward.1} parent=5 // pred_fallthru
        _
      %p575 = scmp.lt.s32.totalorder %s28, 4
      // Predicated region
      $region13: #{ablang_forward.1} parent=5 // pred_check
        %p576 = pneg %p575
      $region14: #{ablang_forward.1} parent=5 // pred_check_branch
        %578 = sbr.rel (%p576) target = $region16
      $region15: #{ablang_forward.1} parent=5 // pred_region
        // Predicated region
        $region17: #{ablang_forward.1} parent=15 // pred_check
          %p579 = pneg %p60
        $region18: #{ablang_forward.1} parent=15 // pred_check_branch
          %581 = sbr.rel (%p579) target = $region20
        $region19: #{ablang_forward.1} parent=15 // pred_region
          %p582 = scmp.lt.s32.totalorder %s35, 1
          %s583 = scalar_select %p582, %s35, 1
          %s584 = smul.addr %s583, 8
          %s585 = scalar_lea.vmem %s0, %s584
        $region20: #{ablang_forward.1} parent=15 // pred_fallthru
          _
        // Predicated region
        $region21: #{ablang_forward.1} parent=15 // pred_check
          %p586 = pneg %p86
        $region22: #{ablang_forward.1} parent=15 // pred_check_branch
          %588 = sbr.rel (%p586) target = $region24
        $region23: #{ablang_forward.1} parent=15 // pred_region
          %p589 = scmp.lt.s32.totalorder %s35, 1
          %s590 = scalar_select %p589, %s35, 1
          %s591 = scalar_lea.vmem %s1, %s590
        $region24: #{ablang_forward.1} parent=15 // pred_fallthru
          _
        // Predicated region
        $region25: #{ablang_forward.1} parent=15 // pred_check
          %p592 = pneg %p112
        $region26: #{ablang_forward.1} parent=15 // pred_check_branch
          %594 = sbr.rel (%p592) target = $region28
        $region27: #{ablang_forward.1} parent=15 // pred_region
          %p595 = scmp.lt.s32.totalorder %s35, 1
          %s596 = scalar_select %p595, %s35, 1
          %s597 = smul.addr %s596, 8
          %s598 = scalar_lea.vmem %s2, %s597
        $region28: #{ablang_forward.1} parent=15 // pred_fallthru
          _
        // Predicated region
        $region29: #{ablang_forward.1} parent=15 // pred_check
          %p599 = pneg %p138
        $region30: #{ablang_forward.1} parent=15 // pred_check_branch
          %601 = sbr.rel (%p599) target = $region32
        $region31: #{ablang_forward.1} parent=15 // pred_region
          %p602 = scmp.lt.s32.totalorder %s36, 1
          %s603 = scalar_select %p602, %s36, 1
          %s604 = smul.addr %s603, 64
          %s605 = smul.addr %s604, 4
          %s606 = scalar_lea.vmem %s3, %s605
        $region32: #{ablang_forward.1} parent=15 // pred_fallthru
          _
        // Predicated region
        $region33: #{ablang_forward.1} parent=15 // pred_check
          %p607 = pneg %p164
        $region34: #{ablang_forward.1} parent=15 // pred_check_branch
          %609 = sbr.rel (%p607) target = $region36
        $region35: #{ablang_forward.1} parent=15 // pred_region
          %p610 = scmp.lt.s32.totalorder %s36, 1
          %s611 = scalar_select %p610, %s36, 1
          %s612 = smul.addr %s611, 4
          %s613 = scalar_lea.vmem %s4, %s612
        $region36: #{ablang_forward.1} parent=15 // pred_fallthru
          _
        // Predicated region
        $region37: #{ablang_forward.1} parent=15 // pred_check
          %p614 = pneg %p190
        $region38: #{ablang_forward.1} parent=15 // pred_check_branch
          %616 = sbr.rel (%p614) target = $region40
        $region39: #{ablang_forward.1} parent=15 // pred_region
          %p617 = scmp.lt.s32.totalorder %s36, 1
          %s618 = scalar_select %p617, %s36, 1
          %s619 = smul.addr %s618, 64
          %s620 = smul.addr %s619, 4
          %s621 = scalar_lea.vmem %s5, %s620
        $region40: #{ablang_forward.1} parent=15 // pred_fallthru
          _
        // Predicated region
        $region41: #{ablang_forward.1} parent=15 // pred_check
          %p622 = pneg %p216
        $region42: #{ablang_forward.1} parent=15 // pred_check_branch
          %624 = sbr.rel (%p622) target = $region44
        $region43: #{ablang_forward.1} parent=15 // pred_region
          %p625 = scmp.lt.s32.totalorder %s36, 1
          %s626 = scalar_select %p625, %s36, 1
          %s627 = smul.addr %s626, 4
          %s628 = scalar_lea.vmem %s6, %s627
        $region44: #{ablang_forward.1} parent=15 // pred_fallthru
          _
        // Predicated region
        $region45: #{ablang_forward.1} parent=15 // pred_check
          %p629 = pneg %p242
        $region46: #{ablang_forward.1} parent=15 // pred_check_branch
          %631 = sbr.rel (%p629) target = $region48
        $region47: #{ablang_forward.1} parent=15 // pred_region
          %p632 = scmp.lt.s32.totalorder %s36, 1
          %s633 = scalar_select %p632, %s36, 1
          %s634 = smul.addr %s633, 64
          %s635 = smul.addr %s634, 4
          %s636 = scalar_lea.vmem %s7, %s635
        $region48: #{ablang_forward.1} parent=15 // pred_fallthru
          _
        // Predicated region
        $region49: #{ablang_forward.1} parent=15 // pred_check
          %p637 = pneg %p268
        $region50: #{ablang_forward.1} parent=15 // pred_check_branch
          %639 = sbr.rel (%p637) target = $region52
        $region51: #{ablang_forward.1} parent=15 // pred_region
          %p640 = scmp.lt.s32.totalorder %s36, 1
          %s641 = scalar_select %p640, %s36, 1
          %s642 = smul.addr %s641, 4
          %s643 = scalar_lea.vmem %s8, %s642
        $region52: #{ablang_forward.1} parent=15 // pred_fallthru
          _
        // Predicated region
        $region53: #{ablang_forward.1} parent=15 // pred_check
          %p644 = pneg %p294
        $region54: #{ablang_forward.1} parent=15 // pred_check_branch
          %646 = sbr.rel (%p644) target = $region56
        $region55: #{ablang_forward.1} parent=15 // pred_region
          %p647 = scmp.lt.s32.totalorder %s36, 1
          %s648 = scalar_select %p647, %s36, 1
          %s649 = smul.addr %s648, 16
          %s650 = smul.addr %s649, 4
          %s651 = scalar_lea.vmem %s9, %s650
        $region56: #{ablang_forward.1} parent=15 // pred_fallthru
          _
        // Predicated region
        $region57: #{ablang_forward.1} parent=15 // pred_check
          %p652 = pneg %p320
        $region58: #{ablang_forward.1} parent=15 // pred_check_branch
          %654 = sbr.rel (%p652) target = $region60
        $region59: #{ablang_forward.1} parent=15 // pred_region
          %p655 = scmp.lt.s32.totalorder %s36, 1
          %s656 = scalar_select %p655, %s36, 1
          %s657 = scalar_lea.vmem %s10, %s656
        $region60: #{ablang_forward.1} parent=15 // pred_fallthru
          _
        // Predicated region
        $region61: #{ablang_forward.1} parent=15 // pred_check
          %p658 = pneg %p346
        $region62: #{ablang_forward.1} parent=15 // pred_check_branch
          %660 = sbr.rel (%p658) target = $region64
        $region63: #{ablang_forward.1} parent=15 // pred_region
          %p661 = scmp.lt.s32.totalorder %s36, 1
          %s662 = scalar_select %p661, %s36, 1
          %s663 = scalar_lea.vmem %s11, %s662
        $region64: #{ablang_forward.1} parent=15 // pred_fallthru
          _
        // Predicated region
        $region65: #{ablang_forward.1} parent=15 // pred_check
          %p664 = pneg %p372
        $region66: #{ablang_forward.1} parent=15 // pred_check_branch
          %666 = sbr.rel (%p664) target = $region68
        $region67: #{ablang_forward.1} parent=15 // pred_region
          %p667 = scmp.lt.s32.totalorder %s36, 1
          %s668 = scalar_select %p667, %s36, 1
          %s669 = scalar_lea.vmem %s12, %s668
        $region68: #{ablang_forward.1} parent=15 // pred_fallthru
          _
        // Predicated region
        $region69: #{ablang_forward.1} parent=15 // pred_check
          %p670 = pneg %p398
        $region70: #{ablang_forward.1} parent=15 // pred_check_branch
          %672 = sbr.rel (%p670) target = $region72
        $region71: #{ablang_forward.1} parent=15 // pred_region
          %p673 = scmp.lt.s32.totalorder %s36, 1
          %s674 = scalar_select %p673, %s36, 1
          %s675 = smul.addr %s674, 64
          %s676 = smul.addr %s675, 4
          %s677 = scalar_lea.vmem %s13, %s676
        $region72: #{ablang_forward.1} parent=15 // pred_fallthru
          _
        // Predicated region
        $region73: #{ablang_forward.1} parent=15 // pred_check
          %p678 = pneg %p424
        $region74: #{ablang_forward.1} parent=15 // pred_check_branch
          %680 = sbr.rel (%p678) target = $region76
        $region75: #{ablang_forward.1} parent=15 // pred_region
          %p681 = scmp.lt.s32.totalorder %s36, 1
          %s682 = scalar_select %p681, %s36, 1
          %s683 = smul.addr %s682, 4
          %s684 = scalar_lea.vmem %s14, %s683
        $region76: #{ablang_forward.1} parent=15 // pred_fallthru
          _
        // Predicated region
        $region77: #{ablang_forward.1} parent=15 // pred_check
          %p685 = pneg %p450
        $region78: #{ablang_forward.1} parent=15 // pred_check_branch
          %687 = sbr.rel (%p685) target = $region80
        $region79: #{ablang_forward.1} parent=15 // pred_region
          %p688 = scmp.lt.s32.totalorder %s36, 1
          %s689 = scalar_select %p688, %s36, 1
          %s690 = smul.addr %s689, 64
          %s691 = smul.addr %s690, 4
          %s692 = scalar_lea.vmem %s15, %s691
        $region80: #{ablang_forward.1} parent=15 // pred_fallthru
          _
        // Predicated region
        $region81: #{ablang_forward.1} parent=15 // pred_check
          %p693 = pneg %p476
        $region82: #{ablang_forward.1} parent=15 // pred_check_branch
          %695 = sbr.rel (%p693) target = $region84
        $region83: #{ablang_forward.1} parent=15 // pred_region
          %p696 = scmp.lt.s32.totalorder %s36, 1
          %s697 = scalar_select %p696, %s36, 1
          %s698 = scalar_lea.vmem %s16, %s697
        $region84: #{ablang_forward.1} parent=15 // pred_fallthru
          _
        // Predicated region
        $region85: #{ablang_forward.1} parent=15 // pred_check
          %p699 = pneg %p502
        $region86: #{ablang_forward.1} parent=15 // pred_check_branch
          %701 = sbr.rel (%p699) target = $region88
        $region87: #{ablang_forward.1} parent=15 // pred_region
          %p702 = scmp.lt.s32.totalorder %s36, 1
          %s703 = scalar_select %p702, %s36, 1
          %s704 = scalar_lea.vmem %s17, %s703
        $region88: #{ablang_forward.1} parent=15 // pred_fallthru
          _
        // Predicated region
        $region89: #{ablang_forward.1} parent=15 // pred_check
          %p705 = pneg %p528
        $region90: #{ablang_forward.1} parent=15 // pred_check_branch
          %707 = sbr.rel (%p705) target = $region92
        $region91: #{ablang_forward.1} parent=15 // pred_region
          %p708 = scmp.lt.s32.totalorder %s36, 1
          %s709 = scalar_select %p708, %s36, 1
          %s710 = scalar_lea.vmem %s18, %s709
        $region92: #{ablang_forward.1} parent=15 // pred_fallthru
          _
      $region16: #{ablang_forward.1} parent=5 // pred_fallthru
        _
      %p711 = scmp.le.s32.totalorder 1, %s28
      %p712 = scmp.lt.s32.totalorder %s28, 5
      %p713 = pnand %p711, %p712
      %p714 = pneg %p713
      // Predicated region
      $region93: #{ablang_forward.1} parent=5 // pred_check
        _
      $region94: #{ablang_forward.1} parent=5 // pred_check_branch
        %716 = sbr.rel (%p713) target = $region96
      $region95: #{ablang_forward.1} parent=5 // pred_region
        %s717 = ssub.s32 %s28, 1
        %p718 = scmp.lt.s32.totalorder %s37, 1
        %s719 = scalar_select %p718, %s37, 1
        %s720 = smul.addr %s719, 8
        %s721 = scalar_lea.vmem %s0, %s720
        %p722 = pneg %p66
        %p723 = pneg %p63
        %p724 = scmp.lt.s32.totalorder %s37, 1
        %s725 = scalar_select %p724, %s37, 1
        %s726 = scalar_lea.vmem %s1, %s725
        %p727 = pneg %p92
        %p728 = pneg %p89
        %p729 = scmp.lt.s32.totalorder %s37, 1
        %s730 = scalar_select %p729, %s37, 1
        %s731 = smul.addr %s730, 8
        %s732 = scalar_lea.vmem %s2, %s731
        %p733 = pneg %p118
        %p734 = pneg %p115
        %p735 = scmp.lt.s32.totalorder %s38, 1
        %s736 = scalar_select %p735, %s38, 1
        %s737 = smul.addr %s736, 64
        %s738 = smul.addr %s737, 4
        %s739 = scalar_lea.vmem %s3, %s738
        %p740 = pneg %p144
        %p741 = pneg %p141
        %p742 = scmp.lt.s32.totalorder %s38, 1
        %s743 = scalar_select %p742, %s38, 1
        %s744 = smul.addr %s743, 4
        %s745 = scalar_lea.vmem %s4, %s744
        %p746 = pneg %p170
        %p747 = pneg %p167
        %p748 = scmp.lt.s32.totalorder %s38, 1
        %s749 = scalar_select %p748, %s38, 1
        %s750 = smul.addr %s749, 64
        %s751 = smul.addr %s750, 4
        %s752 = scalar_lea.vmem %s5, %s751
        %p753 = pneg %p196
        %p754 = pneg %p193
        %p755 = scmp.lt.s32.totalorder %s38, 1
        %s756 = scalar_select %p755, %s38, 1
        %s757 = smul.addr %s756, 4
        %s758 = scalar_lea.vmem %s6, %s757
        %p759 = pneg %p222
        %p760 = pneg %p219
        %p761 = scmp.lt.s32.totalorder %s38, 1
        %s762 = scalar_select %p761, %s38, 1
        %s763 = smul.addr %s762, 64
        %s764 = smul.addr %s763, 4
        %s765 = scalar_lea.vmem %s7, %s764
        %p766 = pneg %p248
        %p767 = pneg %p245
        %p768 = scmp.lt.s32.totalorder %s38, 1
        %s769 = scalar_select %p768, %s38, 1
        %s770 = smul.addr %s769, 4
        %s771 = scalar_lea.vmem %s8, %s770
        %p772 = pneg %p274
        %p773 = pneg %p271
        %p774 = scmp.lt.s32.totalorder %s38, 1
        %s775 = scalar_select %p774, %s38, 1
        %s776 = smul.addr %s775, 16
        %s777 = smul.addr %s776, 4
        %s778 = scalar_lea.vmem %s9, %s777
        %p779 = pneg %p300
        %p780 = pneg %p297
        %p781 = scmp.lt.s32.totalorder %s38, 1
        %s782 = scalar_select %p781, %s38, 1
        %s783 = scalar_lea.vmem %s10, %s782
        %p784 = pneg %p326
        %p785 = pneg %p323
        %p786 = scmp.lt.s32.totalorder %s38, 1
        %s787 = scalar_select %p786, %s38, 1
        %s788 = scalar_lea.vmem %s11, %s787
        %p789 = pneg %p352
        %p790 = pneg %p349
        %p791 = scmp.lt.s32.totalorder %s38, 1
        %s792 = scalar_select %p791, %s38, 1
        %s793 = scalar_lea.vmem %s12, %s792
        %p794 = pneg %p378
        %p795 = pneg %p375
        %p796 = scmp.lt.s32.totalorder %s38, 1
        %s797 = scalar_select %p796, %s38, 1
        %s798 = smul.addr %s797, 64
        %s799 = smul.addr %s798, 4
        %s800 = scalar_lea.vmem %s13, %s799
        %p801 = pneg %p404
        %p802 = pneg %p401
        %p803 = scmp.lt.s32.totalorder %s38, 1
        %s804 = scalar_select %p803, %s38, 1
        %s805 = smul.addr %s804, 4
        %s806 = scalar_lea.vmem %s14, %s805
        %p807 = pneg %p430
        %p808 = pneg %p427
        %p809 = scmp.lt.s32.totalorder %s38, 1
        %s810 = scalar_select %p809, %s38, 1
        %s811 = smul.addr %s810, 64
        %s812 = smul.addr %s811, 4
        %s813 = scalar_lea.vmem %s15, %s812
        %p814 = pneg %p456
        %p815 = pneg %p453
        %p816 = scmp.lt.s32.totalorder %s38, 1
        %s817 = scalar_select %p816, %s38, 1
        %s818 = scalar_lea.vmem %s16, %s817
        %p819 = pneg %p482
        %p820 = pneg %p479
        %p821 = scmp.lt.s32.totalorder %s38, 1
        %s822 = scalar_select %p821, %s38, 1
        %s823 = scalar_lea.vmem %s17, %s822
        %p824 = pneg %p508
        %p825 = pneg %p505
        %p826 = scmp.lt.s32.totalorder %s38, 1
        %s827 = scalar_select %p826, %s38, 1
        %s828 = scalar_lea.vmem %s18, %s827
        %p829 = pneg %p534
        %p830 = pneg %p531
        %p831 = pneg %p560
        %p832 = pneg %p557
        %s833 = sand.u32 %s547, 1
        %s834 = scalar_lea.sflag [#allocation4], %s833
        %s835 = sand.u32 %s547, 1
        %s836 = scalar_lea.vmem [#allocation3], %s835
        %p837 = scmp.lt.s32.totalorder %s37, 1
        %s838 = scalar_select %p837, %s37, 1
        %s839 = smul.addr %s838, 8
        %s840 = scalar_lea.vmem %s0, %s839
        %p841 = scmp.lt.s32.totalorder %s37, 1
        %s842 = scalar_select %p841, %s37, 1
        %s843 = scalar_lea.vmem %s1, %s842
        %p844 = scmp.lt.s32.totalorder %s37, 1
        %s845 = scalar_select %p844, %s37, 1
        %s846 = smul.addr %s845, 8
        %s847 = scalar_lea.vmem %s2, %s846
        %p848 = scmp.lt.s32.totalorder %s38, 1
        %s849 = scalar_select %p848, %s38, 1
        %s850 = smul.addr %s849, 64
        %s851 = smul.addr %s850, 4
        %s852 = scalar_lea.vmem %s3, %s851
        %p853 = scmp.lt.s32.totalorder %s38, 1
        %s854 = scalar_select %p853, %s38, 1
        %s855 = smul.addr %s854, 4
        %s856 = scalar_lea.vmem %s4, %s855
        %p857 = scmp.lt.s32.totalorder %s38, 1
        %s858 = scalar_select %p857, %s38, 1
        %s859 = smul.addr %s858, 64
        %s860 = smul.addr %s859, 4
        %s861 = scalar_lea.vmem %s5, %s860
        %p862 = scmp.lt.s32.totalorder %s38, 1
        %s863 = scalar_select %p862, %s38, 1
        %s864 = smul.addr %s863, 4
        %s865 = scalar_lea.vmem %s6, %s864
        %p866 = scmp.lt.s32.totalorder %s38, 1
        %s867 = scalar_select %p866, %s38, 1
        %s868 = smul.addr %s867, 64
        %s869 = smul.addr %s868, 4
        %s870 = scalar_lea.vmem %s7, %s869
        %p871 = scmp.lt.s32.totalorder %s38, 1
        %s872 = scalar_select %p871, %s38, 1
        %s873 = smul.addr %s872, 4
        %s874 = scalar_lea.vmem %s8, %s873
        %p875 = scmp.lt.s32.totalorder %s38, 1
        %s876 = scalar_select %p875, %s38, 1
        %s877 = smul.addr %s876, 16
        %s878 = smul.addr %s877, 4
        %s879 = scalar_lea.vmem %s9, %s878
        %p880 = scmp.lt.s32.totalorder %s38, 1
        %s881 = scalar_select %p880, %s38, 1
        %s882 = scalar_lea.vmem %s10, %s881
        %p883 = scmp.lt.s32.totalorder %s38, 1
        %s884 = scalar_select %p883, %s38, 1
        %s885 = scalar_lea.vmem %s11, %s884
        %p886 = scmp.lt.s32.totalorder %s38, 1
        %s887 = scalar_select %p886, %s38, 1
        %s888 = scalar_lea.vmem %s12, %s887
        %p889 = scmp.lt.s32.totalorder %s38, 1
        %s890 = scalar_select %p889, %s38, 1
        %s891 = smul.addr %s890, 64
        %s892 = smul.addr %s891, 4
        %s893 = scalar_lea.vmem %s13, %s892
        %p894 = scmp.lt.s32.totalorder %s38, 1
        %s895 = scalar_select %p894, %s38, 1
        %s896 = smul.addr %s895, 4
        %s897 = scalar_lea.vmem %s14, %s896
        %p898 = scmp.lt.s32.totalorder %s38, 1
        %s899 = scalar_select %p898, %s38, 1
        %s900 = smul.addr %s899, 64
        %s901 = smul.addr %s900, 4
        %s902 = scalar_lea.vmem %s15, %s901
        %p903 = scmp.lt.s32.totalorder %s38, 1
        %s904 = scalar_select %p903, %s38, 1
        %s905 = scalar_lea.vmem %s16, %s904
        %p906 = scmp.lt.s32.totalorder %s38, 1
        %s907 = scalar_select %p906, %s38, 1
        %s908 = scalar_lea.vmem %s17, %s907
        %p909 = scmp.lt.s32.totalorder %s38, 1
        %s910 = scalar_select %p909, %s38, 1
        %s911 = scalar_lea.vmem %s18, %s910
        %p913 = scmp.eq.s32.totalorder %s38, 0
        // Predicated region
        $region97: #{ablang_forward.1} parent=95 // pred_check
          %p914 = pneg %p913
        $region98: #{ablang_forward.1} parent=95 // pred_check_branch
          %916 = sbr.rel (%p914) target = $region100
        $region99: #{ablang_forward.1} parent=95 // pred_region
          %v917 = vld [vmem:[%s840] sm:$0xff]
          %918 = vst [vmem:[#allocation2] sm:$0xff] %v917
        $region100: #{ablang_forward.1} parent=95 // pred_fallthru
          _
        %v919 = vld [vmem:[#allocation2] sm:$0xff]
        %v920 = vld [vmem:[%s843] sm:$0x1]
        %v921 = vsub.f32 1.0, %v920
        %v922 = vmul.f32 %v921, -1e+09
        %v923 = vpack.c.bf16 %v919, %v919
        %v924 = vld [vmem:[%s852] sm:$0xf]
        %v925 = vld [vmem:[%s852 + $0x4] sm:$0xf]
        %v926 = vld [vmem:[%s852 + $0x8] sm:$0xf]
        %v927 = vld [vmem:[%s852 + $0xc] sm:$0xf]
        %v928 = vld [vmem:[%s852 + $0x10] sm:$0xf]
        %v929 = vld [vmem:[%s852 + $0x14] sm:$0xf]
        %v930 = vld [vmem:[%s852 + $0x18] sm:$0xf]
        %v931 = vld [vmem:[%s852 + $0x1c] sm:$0xf]
        %v932 = vld [vmem:[%s852 + $0x20] sm:$0xf]
        %v933 = vld [vmem:[%s852 + $0x24] sm:$0xf]
        %v934 = vld [vmem:[%s852 + $0x28] sm:$0xf]
        %v935 = vld [vmem:[%s852 + $0x2c] sm:$0xf]
        %v936 = vld [vmem:[%s852 + $0x30] sm:$0xf]
        %v937 = vld [vmem:[%s852 + $0x34] sm:$0xf]
        %v938 = vld [vmem:[%s852 + $0x38] sm:$0xf]
        %v939 = vld [vmem:[%s852 + $0x3c] sm:$0xf]
        %v940 = vld [vmem:[%s852 + $0x40] sm:$0xf]
        %v941 = vld [vmem:[%s852 + $0x44] sm:$0xf]
        %v942 = vld [vmem:[%s852 + $0x48] sm:$0xf]
        %v943 = vld [vmem:[%s852 + $0x4c] sm:$0xf]
        %v944 = vld [vmem:[%s852 + $0x50] sm:$0xf]
        %v945 = vld [vmem:[%s852 + $0x54] sm:$0xf]
        %v946 = vld [vmem:[%s852 + $0x58] sm:$0xf]
        %v947 = vld [vmem:[%s852 + $0x5c] sm:$0xf]
        %v948 = vld [vmem:[%s852 + $0x60] sm:$0xf]
        %v949 = vld [vmem:[%s852 + $0x64] sm:$0xf]
        %v950 = vld [vmem:[%s852 + $0x68] sm:$0xf]
        %v951 = vld [vmem:[%s852 + $0x6c] sm:$0xf]
        %v952 = vld [vmem:[%s852 + $0x70] sm:$0xf]
        %v953 = vld [vmem:[%s852 + $0x74] sm:$0xf]
        %v954 = vld [vmem:[%s852 + $0x78] sm:$0xf]
        %v955 = vld [vmem:[%s852 + $0x7c] sm:$0xf]
        %v956 = vld [vmem:[%s852 + $0x80] sm:$0xf]
        %v957 = vld [vmem:[%s852 + $0x84] sm:$0xf]
        %v958 = vld [vmem:[%s852 + $0x88] sm:$0xf]
        %v959 = vld [vmem:[%s852 + $0x8c] sm:$0xf]
        %v960 = vld [vmem:[%s852 + $0x90] sm:$0xf]
        %v961 = vld [vmem:[%s852 + $0x94] sm:$0xf]
        %v962 = vld [vmem:[%s852 + $0x98] sm:$0xf]
        %v963 = vld [vmem:[%s852 + $0x9c] sm:$0xf]
        %v964 = vld [vmem:[%s852 + $0xa0] sm:$0xf]
        %v965 = vld [vmem:[%s852 + $0xa4] sm:$0xf]
        %v966 = vld [vmem:[%s852 + $0xa8] sm:$0xf]
        %v967 = vld [vmem:[%s852 + $0xac] sm:$0xf]
        %v968 = vld [vmem:[%s852 + $0xb0] sm:$0xf]
        %v969 = vld [vmem:[%s852 + $0xb4] sm:$0xf]
        %v970 = vld [vmem:[%s852 + $0xb8] sm:$0xf]
        %v971 = vld [vmem:[%s852 + $0xbc] sm:$0xf]
        %v972 = vld [vmem:[%s852 + $0xc0] sm:$0xf]
        %v973 = vld [vmem:[%s852 + $0xc4] sm:$0xf]
        %v974 = vld [vmem:[%s852 + $0xc8] sm:$0xf]
        %v975 = vld [vmem:[%s852 + $0xcc] sm:$0xf]
        %v976 = vld [vmem:[%s852 + $0xd0] sm:$0xf]
        %v977 = vld [vmem:[%s852 + $0xd4] sm:$0xf]
        %v978 = vld [vmem:[%s852 + $0xd8] sm:$0xf]
        %v979 = vld [vmem:[%s852 + $0xdc] sm:$0xf]
        %v980 = vld [vmem:[%s852 + $0xe0] sm:$0xf]
        %v981 = vld [vmem:[%s852 + $0xe4] sm:$0xf]
        %v982 = vld [vmem:[%s852 + $0xe8] sm:$0xf]
        %v983 = vld [vmem:[%s852 + $0xec] sm:$0xf]
        %v984 = vld [vmem:[%s852 + $0xf0] sm:$0xf]
        %v985 = vld [vmem:[%s852 + $0xf4] sm:$0xf]
        %v986 = vld [vmem:[%s852 + $0xf8] sm:$0xf]
        %v987 = vld [vmem:[%s852 + $0xfc] sm:$0xf]
        %v988 = vld [vmem:[%s856] sm:$0x1]
        %v989 = vld [vmem:[%s856 + $0x1] sm:$0x1]
        %v990 = vld [vmem:[%s856 + $0x2] sm:$0x1]
        %v991 = vld [vmem:[%s856 + $0x3] sm:$0x1]
        %v996 = vperm.slane %v988, 0
        %v997 = vperm.slane %v989, 0
        %v998 = vperm.slane %v990, 0
        %v999 = vperm.slane %v991, 0
        %v1020 = vunpack.c.l.b16 %v924
        %v1021 = vunpack.c.l.b16 %v925
        %v1022 = vunpack.c.l.b16 %v926
        %v1023 = vunpack.c.l.b16 %v927
        %v1024 = vunpack.c.l.b16 %v928
        %v1025 = vunpack.c.l.b16 %v929
        %v1026 = vunpack.c.l.b16 %v930
        %v1027 = vunpack.c.l.b16 %v931
        %v1028 = vunpack.c.l.b16 %v932
        %v1029 = vunpack.c.l.b16 %v933
        %v1030 = vunpack.c.l.b16 %v934
        %v1031 = vunpack.c.l.b16 %v935
        %v1032 = vunpack.c.l.b16 %v936
        %v1033 = vunpack.c.l.b16 %v937
        %v1034 = vunpack.c.l.b16 %v938
        %v1035 = vunpack.c.l.b16 %v939
        %v1036 = vpack.c.b16 %v1021, %v1020
        %v1037 = vpack.c.b16 %v1023, %v1022
        %v1038 = vpack.c.b16 %v1025, %v1024
        %v1039 = vpack.c.b16 %v1027, %v1026
        %v1040 = vpack.c.b16 %v1029, %v1028
        %v1041 = vpack.c.b16 %v1031, %v1030
        %v1042 = vpack.c.b16 %v1033, %v1032
        %v1043 = vpack.c.b16 %v1035, %v1034
        %1052 = vmatpush.bf16.msra.mxu0 %v1043
        %1053 = vmatpush.bf16.msra.mxu0 %v1042
        %1054 = vmatpush.bf16.msra.mxu0 %v1041
        %1055 = vmatpush.bf16.msra.mxu0 %v1040
        %1056 = vmatpush.bf16.msra.mxu0 %v1039
        %1057 = vmatpush.bf16.msra.mxu0 %v1038
        %1058 = vmatpush.bf16.msra.mxu0 %v1037
        %1059 = vmatpush.bf16.msra.mxu0 %v1036
        %1060 = vmatmul.bf16.gmra.mxu0 %v923
        %v1061 = vpop.f32.mrf.mxu0
        %v1062 = vadd.f32 %v996, %v1061
        %v1063 = vpop.f32.mrf.mxu0
        %1064 = vdwg.mxu0
        %v1081 = vunpack.c.l.b16 %v940
        %v1082 = vunpack.c.l.b16 %v941
        %v1083 = vunpack.c.l.b16 %v942
        %v1084 = vunpack.c.l.b16 %v943
        %v1085 = vunpack.c.l.b16 %v944
        %v1086 = vunpack.c.l.b16 %v945
        %v1087 = vunpack.c.l.b16 %v946
        %v1088 = vunpack.c.l.b16 %v947
        %v1089 = vunpack.c.l.b16 %v948
        %v1090 = vunpack.c.l.b16 %v949
        %v1091 = vunpack.c.l.b16 %v950
        %v1092 = vunpack.c.l.b16 %v951
        %v1093 = vunpack.c.l.b16 %v952
        %v1094 = vunpack.c.l.b16 %v953
        %v1095 = vunpack.c.l.b16 %v954
        %v1096 = vunpack.c.l.b16 %v955
        %v1097 = vpack.c.b16 %v1082, %v1081
        %v1098 = vpack.c.b16 %v1084, %v1083
        %v1099 = vpack.c.b16 %v1086, %v1085
        %v1100 = vpack.c.b16 %v1088, %v1087
        %v1101 = vpack.c.b16 %v1090, %v1089
        %v1102 = vpack.c.b16 %v1092, %v1091
        %v1103 = vpack.c.b16 %v1094, %v1093
        %v1104 = vpack.c.b16 %v1096, %v1095
        %1113 = vmatpush.bf16.msra.mxu0 %v1104
        %1114 = vmatpush.bf16.msra.mxu0 %v1103
        %1115 = vmatpush.bf16.msra.mxu0 %v1102
        %1116 = vmatpush.bf16.msra.mxu0 %v1101
        %1117 = vmatpush.bf16.msra.mxu0 %v1100
        %1118 = vmatpush.bf16.msra.mxu0 %v1099
        %1119 = vmatpush.bf16.msra.mxu0 %v1098
        %1120 = vmatpush.bf16.msra.mxu0 %v1097
        %1121 = vmatmul.bf16.gmra.mxu0 %v923
        %v1122 = vpop.f32.mrf.mxu0
        %v1123 = vadd.f32 %v997, %v1122
        %v1124 = vpop.f32.mrf.mxu0
        %1125 = vdwg.mxu0
        %v1142 = vunpack.c.l.b16 %v956
        %v1143 = vunpack.c.l.b16 %v957
        %v1144 = vunpack.c.l.b16 %v958
        %v1145 = vunpack.c.l.b16 %v959
        %v1146 = vunpack.c.l.b16 %v960
        %v1147 = vunpack.c.l.b16 %v961
        %v1148 = vunpack.c.l.b16 %v962
        %v1149 = vunpack.c.l.b16 %v963
        %v1150 = vunpack.c.l.b16 %v964
        %v1151 = vunpack.c.l.b16 %v965
        %v1152 = vunpack.c.l.b16 %v966
        %v1153 = vunpack.c.l.b16 %v967
        %v1154 = vunpack.c.l.b16 %v968
        %v1155 = vunpack.c.l.b16 %v969
        %v1156 = vunpack.c.l.b16 %v970
        %v1157 = vunpack.c.l.b16 %v971
        %v1158 = vpack.c.b16 %v1143, %v1142
        %v1159 = vpack.c.b16 %v1145, %v1144
        %v1160 = vpack.c.b16 %v1147, %v1146
        %v1161 = vpack.c.b16 %v1149, %v1148
        %v1162 = vpack.c.b16 %v1151, %v1150
        %v1163 = vpack.c.b16 %v1153, %v1152
        %v1164 = vpack.c.b16 %v1155, %v1154
        %v1165 = vpack.c.b16 %v1157, %v1156
        %1174 = vmatpush.bf16.msra.mxu0 %v1165
        %1175 = vmatpush.bf16.msra.mxu0 %v1164
        %1176 = vmatpush.bf16.msra.mxu0 %v1163
        %1177 = vmatpush.bf16.msra.mxu0 %v1162
        %1178 = vmatpush.bf16.msra.mxu0 %v1161
        %1179 = vmatpush.bf16.msra.mxu0 %v1160
        %1180 = vmatpush.bf16.msra.mxu0 %v1159
        %1181 = vmatpush.bf16.msra.mxu0 %v1158
        %1182 = vmatmul.bf16.gmra.mxu0 %v923
        %v1183 = vpop.f32.mrf.mxu0
        %v1184 = vadd.f32 %v998, %v1183
        %v1185 = vpop.f32.mrf.mxu0
        %1186 = vdwg.mxu0
        %v1203 = vunpack.c.l.b16 %v972
        %v1204 = vunpack.c.l.b16 %v973
        %v1205 = vunpack.c.l.b16 %v974
        %v1206 = vunpack.c.l.b16 %v975
        %v1207 = vunpack.c.l.b16 %v976
        %v1208 = vunpack.c.l.b16 %v977
        %v1209 = vunpack.c.l.b16 %v978
        %v1210 = vunpack.c.l.b16 %v979
        %v1211 = vunpack.c.l.b16 %v980
        %v1212 = vunpack.c.l.b16 %v981
        %v1213 = vunpack.c.l.b16 %v982
        %v1214 = vunpack.c.l.b16 %v983
        %v1215 = vunpack.c.l.b16 %v984
        %v1216 = vunpack.c.l.b16 %v985
        %v1217 = vunpack.c.l.b16 %v986
        %v1218 = vunpack.c.l.b16 %v987
        %v1219 = vpack.c.b16 %v1204, %v1203
        %v1220 = vpack.c.b16 %v1206, %v1205
        %v1221 = vpack.c.b16 %v1208, %v1207
        %v1222 = vpack.c.b16 %v1210, %v1209
        %v1223 = vpack.c.b16 %v1212, %v1211
        %v1224 = vpack.c.b16 %v1214, %v1213
        %v1225 = vpack.c.b16 %v1216, %v1215
        %v1226 = vpack.c.b16 %v1218, %v1217
        %1235 = vmatpush.bf16.msra.mxu0 %v1226
        %1236 = vmatpush.bf16.msra.mxu0 %v1225
        %1237 = vmatpush.bf16.msra.mxu0 %v1224
        %1238 = vmatpush.bf16.msra.mxu0 %v1223
        %1239 = vmatpush.bf16.msra.mxu0 %v1222
        %1240 = vmatpush.bf16.msra.mxu0 %v1221
        %1241 = vmatpush.bf16.msra.mxu0 %v1220
        %1242 = vmatpush.bf16.msra.mxu0 %v1219
        %1243 = vmatmul.bf16.gmra.mxu0 %v923
        %v1244 = vpop.f32.mrf.mxu0
        %v1245 = vadd.f32 %v999, %v1244
        %v1246 = vpop.f32.mrf.mxu0
        %1247 = vdwg.mxu0
        %v1248 = vld [vmem:[%s861] sm:$0xf]
        %v1249 = vld [vmem:[%s861 + $0x4] sm:$0xf]
        %v1250 = vld [vmem:[%s861 + $0x8] sm:$0xf]
        %v1251 = vld [vmem:[%s861 + $0xc] sm:$0xf]
        %v1252 = vld [vmem:[%s861 + $0x10] sm:$0xf]
        %v1253 = vld [vmem:[%s861 + $0x14] sm:$0xf]
        %v1254 = vld [vmem:[%s861 + $0x18] sm:$0xf]
        %v1255 = vld [vmem:[%s861 + $0x1c] sm:$0xf]
        %v1256 = vld [vmem:[%s861 + $0x20] sm:$0xf]
        %v1257 = vld [vmem:[%s861 + $0x24] sm:$0xf]
        %v1258 = vld [vmem:[%s861 + $0x28] sm:$0xf]
        %v1259 = vld [vmem:[%s861 + $0x2c] sm:$0xf]
        %v1260 = vld [vmem:[%s861 + $0x30] sm:$0xf]
        %v1261 = vld [vmem:[%s861 + $0x34] sm:$0xf]
        %v1262 = vld [vmem:[%s861 + $0x38] sm:$0xf]
        %v1263 = vld [vmem:[%s861 + $0x3c] sm:$0xf]
        %v1264 = vld [vmem:[%s861 + $0x40] sm:$0xf]
        %v1265 = vld [vmem:[%s861 + $0x44] sm:$0xf]
        %v1266 = vld [vmem:[%s861 + $0x48] sm:$0xf]
        %v1267 = vld [vmem:[%s861 + $0x4c] sm:$0xf]
        %v1268 = vld [vmem:[%s861 + $0x50] sm:$0xf]
        %v1269 = vld [vmem:[%s861 + $0x54] sm:$0xf]
        %v1270 = vld [vmem:[%s861 + $0x58] sm:$0xf]
        %v1271 = vld [vmem:[%s861 + $0x5c] sm:$0xf]
        %v1272 = vld [vmem:[%s861 + $0x60] sm:$0xf]
        %v1273 = vld [vmem:[%s861 + $0x64] sm:$0xf]
        %v1274 = vld [vmem:[%s861 + $0x68] sm:$0xf]
        %v1275 = vld [vmem:[%s861 + $0x6c] sm:$0xf]
        %v1276 = vld [vmem:[%s861 + $0x70] sm:$0xf]
        %v1277 = vld [vmem:[%s861 + $0x74] sm:$0xf]
        %v1278 = vld [vmem:[%s861 + $0x78] sm:$0xf]
        %v1279 = vld [vmem:[%s861 + $0x7c] sm:$0xf]
        %v1280 = vld [vmem:[%s861 + $0x80] sm:$0xf]
        %v1281 = vld [vmem:[%s861 + $0x84] sm:$0xf]
        %v1282 = vld [vmem:[%s861 + $0x88] sm:$0xf]
        %v1283 = vld [vmem:[%s861 + $0x8c] sm:$0xf]
        %v1284 = vld [vmem:[%s861 + $0x90] sm:$0xf]
        %v1285 = vld [vmem:[%s861 + $0x94] sm:$0xf]
        %v1286 = vld [vmem:[%s861 + $0x98] sm:$0xf]
        %v1287 = vld [vmem:[%s861 + $0x9c] sm:$0xf]
        %v1288 = vld [vmem:[%s861 + $0xa0] sm:$0xf]
        %v1289 = vld [vmem:[%s861 + $0xa4] sm:$0xf]
        %v1290 = vld [vmem:[%s861 + $0xa8] sm:$0xf]
        %v1291 = vld [vmem:[%s861 + $0xac] sm:$0xf]
        %v1292 = vld [vmem:[%s861 + $0xb0] sm:$0xf]
        %v1293 = vld [vmem:[%s861 + $0xb4] sm:$0xf]
        %v1294 = vld [vmem:[%s861 + $0xb8] sm:$0xf]
        %v1295 = vld [vmem:[%s861 + $0xbc] sm:$0xf]
        %v1296 = vld [vmem:[%s861 + $0xc0] sm:$0xf]
        %v1297 = vld [vmem:[%s861 + $0xc4] sm:$0xf]
        %v1298 = vld [vmem:[%s861 + $0xc8] sm:$0xf]
        %v1299 = vld [vmem:[%s861 + $0xcc] sm:$0xf]
        %v1300 = vld [vmem:[%s861 + $0xd0] sm:$0xf]
        %v1301 = vld [vmem:[%s861 + $0xd4] sm:$0xf]
        %v1302 = vld [vmem:[%s861 + $0xd8] sm:$0xf]
        %v1303 = vld [vmem:[%s861 + $0xdc] sm:$0xf]
        %v1304 = vld [vmem:[%s861 + $0xe0] sm:$0xf]
        %v1305 = vld [vmem:[%s861 + $0xe4] sm:$0xf]
        %v1306 = vld [vmem:[%s861 + $0xe8] sm:$0xf]
        %v1307 = vld [vmem:[%s861 + $0xec] sm:$0xf]
        %v1308 = vld [vmem:[%s861 + $0xf0] sm:$0xf]
        %v1309 = vld [vmem:[%s861 + $0xf4] sm:$0xf]
        %v1310 = vld [vmem:[%s861 + $0xf8] sm:$0xf]
        %v1311 = vld [vmem:[%s861 + $0xfc] sm:$0xf]
        %v1312 = vld [vmem:[%s865] sm:$0x1]
        %v1313 = vld [vmem:[%s865 + $0x1] sm:$0x1]
        %v1314 = vld [vmem:[%s865 + $0x2] sm:$0x1]
        %v1315 = vld [vmem:[%s865 + $0x3] sm:$0x1]
        %v1320 = vperm.slane %v1312, 0
        %v1321 = vperm.slane %v1313, 0
        %v1322 = vperm.slane %v1314, 0
        %v1323 = vperm.slane %v1315, 0
        %v1344 = vunpack.c.l.b16 %v1248
        %v1345 = vunpack.c.l.b16 %v1249
        %v1346 = vunpack.c.l.b16 %v1250
        %v1347 = vunpack.c.l.b16 %v1251
        %v1348 = vunpack.c.l.b16 %v1252
        %v1349 = vunpack.c.l.b16 %v1253
        %v1350 = vunpack.c.l.b16 %v1254
        %v1351 = vunpack.c.l.b16 %v1255
        %v1352 = vunpack.c.l.b16 %v1256
        %v1353 = vunpack.c.l.b16 %v1257
        %v1354 = vunpack.c.l.b16 %v1258
        %v1355 = vunpack.c.l.b16 %v1259
        %v1356 = vunpack.c.l.b16 %v1260
        %v1357 = vunpack.c.l.b16 %v1261
        %v1358 = vunpack.c.l.b16 %v1262
        %v1359 = vunpack.c.l.b16 %v1263
        %v1360 = vpack.c.b16 %v1345, %v1344
        %v1361 = vpack.c.b16 %v1347, %v1346
        %v1362 = vpack.c.b16 %v1349, %v1348
        %v1363 = vpack.c.b16 %v1351, %v1350
        %v1364 = vpack.c.b16 %v1353, %v1352
        %v1365 = vpack.c.b16 %v1355, %v1354
        %v1366 = vpack.c.b16 %v1357, %v1356
        %v1367 = vpack.c.b16 %v1359, %v1358
        %1376 = vmatpush.bf16.msra.mxu0 %v1367
        %1377 = vmatpush.bf16.msra.mxu0 %v1366
        %1378 = vmatpush.bf16.msra.mxu0 %v1365
        %1379 = vmatpush.bf16.msra.mxu0 %v1364
        %1380 = vmatpush.bf16.msra.mxu0 %v1363
        %1381 = vmatpush.bf16.msra.mxu0 %v1362
        %1382 = vmatpush.bf16.msra.mxu0 %v1361
        %1383 = vmatpush.bf16.msra.mxu0 %v1360
        %1384 = vmatmul.bf16.gmra.mxu0 %v923
        %v1385 = vpop.f32.mrf.mxu0
        %v1386 = vadd.f32 %v1320, %v1385
        %v1387 = vpop.f32.mrf.mxu0
        %1388 = vdwg.mxu0
        %v1405 = vunpack.c.l.b16 %v1264
        %v1406 = vunpack.c.l.b16 %v1265
        %v1407 = vunpack.c.l.b16 %v1266
        %v1408 = vunpack.c.l.b16 %v1267
        %v1409 = vunpack.c.l.b16 %v1268
        %v1410 = vunpack.c.l.b16 %v1269
        %v1411 = vunpack.c.l.b16 %v1270
        %v1412 = vunpack.c.l.b16 %v1271
        %v1413 = vunpack.c.l.b16 %v1272
        %v1414 = vunpack.c.l.b16 %v1273
        %v1415 = vunpack.c.l.b16 %v1274
        %v1416 = vunpack.c.l.b16 %v1275
        %v1417 = vunpack.c.l.b16 %v1276
        %v1418 = vunpack.c.l.b16 %v1277
        %v1419 = vunpack.c.l.b16 %v1278
        %v1420 = vunpack.c.l.b16 %v1279
        %v1421 = vpack.c.b16 %v1406, %v1405
        %v1422 = vpack.c.b16 %v1408, %v1407
        %v1423 = vpack.c.b16 %v1410, %v1409
        %v1424 = vpack.c.b16 %v1412, %v1411
        %v1425 = vpack.c.b16 %v1414, %v1413
        %v1426 = vpack.c.b16 %v1416, %v1415
        %v1427 = vpack.c.b16 %v1418, %v1417
        %v1428 = vpack.c.b16 %v1420, %v1419
        %1437 = vmatpush.bf16.msra.mxu0 %v1428
        %1438 = vmatpush.bf16.msra.mxu0 %v1427
        %1439 = vmatpush.bf16.msra.mxu0 %v1426
        %1440 = vmatpush.bf16.msra.mxu0 %v1425
        %1441 = vmatpush.bf16.msra.mxu0 %v1424
        %1442 = vmatpush.bf16.msra.mxu0 %v1423
        %1443 = vmatpush.bf16.msra.mxu0 %v1422
        %1444 = vmatpush.bf16.msra.mxu0 %v1421
        %1445 = vmatmul.bf16.gmra.mxu0 %v923
        %v1446 = vpop.f32.mrf.mxu0
        %v1447 = vadd.f32 %v1321, %v1446
        %v1448 = vpop.f32.mrf.mxu0
        %1449 = vdwg.mxu0
        %v1466 = vunpack.c.l.b16 %v1280
        %v1467 = vunpack.c.l.b16 %v1281
        %v1468 = vunpack.c.l.b16 %v1282
        %v1469 = vunpack.c.l.b16 %v1283
        %v1470 = vunpack.c.l.b16 %v1284
        %v1471 = vunpack.c.l.b16 %v1285
        %v1472 = vunpack.c.l.b16 %v1286
        %v1473 = vunpack.c.l.b16 %v1287
        %v1474 = vunpack.c.l.b16 %v1288
        %v1475 = vunpack.c.l.b16 %v1289
        %v1476 = vunpack.c.l.b16 %v1290
        %v1477 = vunpack.c.l.b16 %v1291
        %v1478 = vunpack.c.l.b16 %v1292
        %v1479 = vunpack.c.l.b16 %v1293
        %v1480 = vunpack.c.l.b16 %v1294
        %v1481 = vunpack.c.l.b16 %v1295
        %v1482 = vpack.c.b16 %v1467, %v1466
        %v1483 = vpack.c.b16 %v1469, %v1468
        %v1484 = vpack.c.b16 %v1471, %v1470
        %v1485 = vpack.c.b16 %v1473, %v1472
        %v1486 = vpack.c.b16 %v1475, %v1474
        %v1487 = vpack.c.b16 %v1477, %v1476
        %v1488 = vpack.c.b16 %v1479, %v1478
        %v1489 = vpack.c.b16 %v1481, %v1480
        %1498 = vmatpush.bf16.msra.mxu0 %v1489
        %1499 = vmatpush.bf16.msra.mxu0 %v1488
        %1500 = vmatpush.bf16.msra.mxu0 %v1487
        %1501 = vmatpush.bf16.msra.mxu0 %v1486
        %1502 = vmatpush.bf16.msra.mxu0 %v1485
        %1503 = vmatpush.bf16.msra.mxu0 %v1484
        %1504 = vmatpush.bf16.msra.mxu0 %v1483
        %1505 = vmatpush.bf16.msra.mxu0 %v1482
        %1506 = vmatmul.bf16.gmra.mxu0 %v923
        %v1507 = vpop.f32.mrf.mxu0
        %v1508 = vadd.f32 %v1322, %v1507
        %v1509 = vpop.f32.mrf.mxu0
        %1510 = vdwg.mxu0
        %v1527 = vunpack.c.l.b16 %v1296
        %v1528 = vunpack.c.l.b16 %v1297
        %v1529 = vunpack.c.l.b16 %v1298
        %v1530 = vunpack.c.l.b16 %v1299
        %v1531 = vunpack.c.l.b16 %v1300
        %v1532 = vunpack.c.l.b16 %v1301
        %v1533 = vunpack.c.l.b16 %v1302
        %v1534 = vunpack.c.l.b16 %v1303
        %v1535 = vunpack.c.l.b16 %v1304
        %v1536 = vunpack.c.l.b16 %v1305
        %v1537 = vunpack.c.l.b16 %v1306
        %v1538 = vunpack.c.l.b16 %v1307
        %v1539 = vunpack.c.l.b16 %v1308
        %v1540 = vunpack.c.l.b16 %v1309
        %v1541 = vunpack.c.l.b16 %v1310
        %v1542 = vunpack.c.l.b16 %v1311
        %v1543 = vpack.c.b16 %v1528, %v1527
        %v1544 = vpack.c.b16 %v1530, %v1529
        %v1545 = vpack.c.b16 %v1532, %v1531
        %v1546 = vpack.c.b16 %v1534, %v1533
        %v1547 = vpack.c.b16 %v1536, %v1535
        %v1548 = vpack.c.b16 %v1538, %v1537
        %v1549 = vpack.c.b16 %v1540, %v1539
        %v1550 = vpack.c.b16 %v1542, %v1541
        %1559 = vmatpush.bf16.msra.mxu0 %v1550
        %1560 = vmatpush.bf16.msra.mxu0 %v1549
        %1561 = vmatpush.bf16.msra.mxu0 %v1548
        %1562 = vmatpush.bf16.msra.mxu0 %v1547
        %1563 = vmatpush.bf16.msra.mxu0 %v1546
        %1564 = vmatpush.bf16.msra.mxu0 %v1545
        %1565 = vmatpush.bf16.msra.mxu0 %v1544
        %1566 = vmatpush.bf16.msra.mxu0 %v1543
        %1567 = vmatmul.bf16.gmra.mxu0 %v923
        %v1568 = vpop.f32.mrf.mxu0
        %v1569 = vadd.f32 %v1323, %v1568
        %v1570 = vpop.f32.mrf.mxu0
        %1571 = vdwg.mxu0
        %v1572 = vld [vmem:[%s870] sm:$0xf]
        %v1573 = vld [vmem:[%s870 + $0x4] sm:$0xf]
        %v1574 = vld [vmem:[%s870 + $0x8] sm:$0xf]
        %v1575 = vld [vmem:[%s870 + $0xc] sm:$0xf]
        %v1576 = vld [vmem:[%s870 + $0x10] sm:$0xf]
        %v1577 = vld [vmem:[%s870 + $0x14] sm:$0xf]
        %v1578 = vld [vmem:[%s870 + $0x18] sm:$0xf]
        %v1579 = vld [vmem:[%s870 + $0x1c] sm:$0xf]
        %v1580 = vld [vmem:[%s870 + $0x20] sm:$0xf]
        %v1581 = vld [vmem:[%s870 + $0x24] sm:$0xf]
        %v1582 = vld [vmem:[%s870 + $0x28] sm:$0xf]
        %v1583 = vld [vmem:[%s870 + $0x2c] sm:$0xf]
        %v1584 = vld [vmem:[%s870 + $0x30] sm:$0xf]
        %v1585 = vld [vmem:[%s870 + $0x34] sm:$0xf]
        %v1586 = vld [vmem:[%s870 + $0x38] sm:$0xf]
        %v1587 = vld [vmem:[%s870 + $0x3c] sm:$0xf]
        %v1588 = vld [vmem:[%s870 + $0x40] sm:$0xf]
        %v1589 = vld [vmem:[%s870 + $0x44] sm:$0xf]
        %v1590 = vld [vmem:[%s870 + $0x48] sm:$0xf]
        %v1591 = vld [vmem:[%s870 + $0x4c] sm:$0xf]
        %v1592 = vld [vmem:[%s870 + $0x50] sm:$0xf]
        %v1593 = vld [vmem:[%s870 + $0x54] sm:$0xf]
        %v1594 = vld [vmem:[%s870 + $0x58] sm:$0xf]
        %v1595 = vld [vmem:[%s870 + $0x5c] sm:$0xf]
        %v1596 = vld [vmem:[%s870 + $0x60] sm:$0xf]
        %v1597 = vld [vmem:[%s870 + $0x64] sm:$0xf]
        %v1598 = vld [vmem:[%s870 + $0x68] sm:$0xf]
        %v1599 = vld [vmem:[%s870 + $0x6c] sm:$0xf]
        %v1600 = vld [vmem:[%s870 + $0x70] sm:$0xf]
        %v1601 = vld [vmem:[%s870 + $0x74] sm:$0xf]
        %v1602 = vld [vmem:[%s870 + $0x78] sm:$0xf]
        %v1603 = vld [vmem:[%s870 + $0x7c] sm:$0xf]
        %v1604 = vld [vmem:[%s870 + $0x80] sm:$0xf]
        %v1605 = vld [vmem:[%s870 + $0x84] sm:$0xf]
        %v1606 = vld [vmem:[%s870 + $0x88] sm:$0xf]
        %v1607 = vld [vmem:[%s870 + $0x8c] sm:$0xf]
        %v1608 = vld [vmem:[%s870 + $0x90] sm:$0xf]
        %v1609 = vld [vmem:[%s870 + $0x94] sm:$0xf]
        %v1610 = vld [vmem:[%s870 + $0x98] sm:$0xf]
        %v1611 = vld [vmem:[%s870 + $0x9c] sm:$0xf]
        %v1612 = vld [vmem:[%s870 + $0xa0] sm:$0xf]
        %v1613 = vld [vmem:[%s870 + $0xa4] sm:$0xf]
        %v1614 = vld [vmem:[%s870 + $0xa8] sm:$0xf]
        %v1615 = vld [vmem:[%s870 + $0xac] sm:$0xf]
        %v1616 = vld [vmem:[%s870 + $0xb0] sm:$0xf]
        %v1617 = vld [vmem:[%s870 + $0xb4] sm:$0xf]
        %v1618 = vld [vmem:[%s870 + $0xb8] sm:$0xf]
        %v1619 = vld [vmem:[%s870 + $0xbc] sm:$0xf]
        %v1620 = vld [vmem:[%s870 + $0xc0] sm:$0xf]
        %v1621 = vld [vmem:[%s870 + $0xc4] sm:$0xf]
        %v1622 = vld [vmem:[%s870 + $0xc8] sm:$0xf]
        %v1623 = vld [vmem:[%s870 + $0xcc] sm:$0xf]
        %v1624 = vld [vmem:[%s870 + $0xd0] sm:$0xf]
        %v1625 = vld [vmem:[%s870 + $0xd4] sm:$0xf]
        %v1626 = vld [vmem:[%s870 + $0xd8] sm:$0xf]
        %v1627 = vld [vmem:[%s870 + $0xdc] sm:$0xf]
        %v1628 = vld [vmem:[%s870 + $0xe0] sm:$0xf]
        %v1629 = vld [vmem:[%s870 + $0xe4] sm:$0xf]
        %v1630 = vld [vmem:[%s870 + $0xe8] sm:$0xf]
        %v1631 = vld [vmem:[%s870 + $0xec] sm:$0xf]
        %v1632 = vld [vmem:[%s870 + $0xf0] sm:$0xf]
        %v1633 = vld [vmem:[%s870 + $0xf4] sm:$0xf]
        %v1634 = vld [vmem:[%s870 + $0xf8] sm:$0xf]
        %v1635 = vld [vmem:[%s870 + $0xfc] sm:$0xf]
        %v1636 = vld [vmem:[%s874] sm:$0x1]
        %v1637 = vld [vmem:[%s874 + $0x1] sm:$0x1]
        %v1638 = vld [vmem:[%s874 + $0x2] sm:$0x1]
        %v1639 = vld [vmem:[%s874 + $0x3] sm:$0x1]
        %v1644 = vperm.slane %v1636, 0
        %v1645 = vperm.slane %v1637, 0
        %v1646 = vperm.slane %v1638, 0
        %v1647 = vperm.slane %v1639, 0
        %v1668 = vunpack.c.l.b16 %v1572
        %v1669 = vunpack.c.l.b16 %v1573
        %v1670 = vunpack.c.l.b16 %v1574
        %v1671 = vunpack.c.l.b16 %v1575
        %v1672 = vunpack.c.l.b16 %v1576
        %v1673 = vunpack.c.l.b16 %v1577
        %v1674 = vunpack.c.l.b16 %v1578
        %v1675 = vunpack.c.l.b16 %v1579
        %v1676 = vunpack.c.l.b16 %v1580
        %v1677 = vunpack.c.l.b16 %v1581
        %v1678 = vunpack.c.l.b16 %v1582
        %v1679 = vunpack.c.l.b16 %v1583
        %v1680 = vunpack.c.l.b16 %v1584
        %v1681 = vunpack.c.l.b16 %v1585
        %v1682 = vunpack.c.l.b16 %v1586
        %v1683 = vunpack.c.l.b16 %v1587
        %v1684 = vpack.c.b16 %v1669, %v1668
        %v1685 = vpack.c.b16 %v1671, %v1670
        %v1686 = vpack.c.b16 %v1673, %v1672
        %v1687 = vpack.c.b16 %v1675, %v1674
        %v1688 = vpack.c.b16 %v1677, %v1676
        %v1689 = vpack.c.b16 %v1679, %v1678
        %v1690 = vpack.c.b16 %v1681, %v1680
        %v1691 = vpack.c.b16 %v1683, %v1682
        %1700 = vmatpush.bf16.msra.mxu0 %v1691
        %1701 = vmatpush.bf16.msra.mxu0 %v1690
        %1702 = vmatpush.bf16.msra.mxu0 %v1689
        %1703 = vmatpush.bf16.msra.mxu0 %v1688
        %1704 = vmatpush.bf16.msra.mxu0 %v1687
        %1705 = vmatpush.bf16.msra.mxu0 %v1686
        %1706 = vmatpush.bf16.msra.mxu0 %v1685
        %1707 = vmatpush.bf16.msra.mxu0 %v1684
        %1708 = vmatmul.bf16.gmra.mxu0 %v923
        %v1709 = vpop.f32.mrf.mxu0
        %v1710 = vadd.f32 %v1644, %v1709
        %v1711 = vpop.f32.mrf.mxu0
        %1712 = vdwg.mxu0
        %v1729 = vunpack.c.l.b16 %v1588
        %v1730 = vunpack.c.l.b16 %v1589
        %v1731 = vunpack.c.l.b16 %v1590
        %v1732 = vunpack.c.l.b16 %v1591
        %v1733 = vunpack.c.l.b16 %v1592
        %v1734 = vunpack.c.l.b16 %v1593
        %v1735 = vunpack.c.l.b16 %v1594
        %v1736 = vunpack.c.l.b16 %v1595
        %v1737 = vunpack.c.l.b16 %v1596
        %v1738 = vunpack.c.l.b16 %v1597
        %v1739 = vunpack.c.l.b16 %v1598
        %v1740 = vunpack.c.l.b16 %v1599
        %v1741 = vunpack.c.l.b16 %v1600
        %v1742 = vunpack.c.l.b16 %v1601
        %v1743 = vunpack.c.l.b16 %v1602
        %v1744 = vunpack.c.l.b16 %v1603
        %v1745 = vpack.c.b16 %v1730, %v1729
        %v1746 = vpack.c.b16 %v1732, %v1731
        %v1747 = vpack.c.b16 %v1734, %v1733
        %v1748 = vpack.c.b16 %v1736, %v1735
        %v1749 = vpack.c.b16 %v1738, %v1737
        %v1750 = vpack.c.b16 %v1740, %v1739
        %v1751 = vpack.c.b16 %v1742, %v1741
        %v1752 = vpack.c.b16 %v1744, %v1743
        %1761 = vmatpush.bf16.msra.mxu0 %v1752
        %1762 = vmatpush.bf16.msra.mxu0 %v1751
        %1763 = vmatpush.bf16.msra.mxu0 %v1750
        %1764 = vmatpush.bf16.msra.mxu0 %v1749
        %1765 = vmatpush.bf16.msra.mxu0 %v1748
        %1766 = vmatpush.bf16.msra.mxu0 %v1747
        %1767 = vmatpush.bf16.msra.mxu0 %v1746
        %1768 = vmatpush.bf16.msra.mxu0 %v1745
        %1769 = vmatmul.bf16.gmra.mxu0 %v923
        %v1770 = vpop.f32.mrf.mxu0
        %v1771 = vadd.f32 %v1645, %v1770
        %v1772 = vpop.f32.mrf.mxu0
        %1773 = vdwg.mxu0
        %v1790 = vunpack.c.l.b16 %v1604
        %v1791 = vunpack.c.l.b16 %v1605
        %v1792 = vunpack.c.l.b16 %v1606
        %v1793 = vunpack.c.l.b16 %v1607
        %v1794 = vunpack.c.l.b16 %v1608
        %v1795 = vunpack.c.l.b16 %v1609
        %v1796 = vunpack.c.l.b16 %v1610
        %v1797 = vunpack.c.l.b16 %v1611
        %v1798 = vunpack.c.l.b16 %v1612
        %v1799 = vunpack.c.l.b16 %v1613
        %v1800 = vunpack.c.l.b16 %v1614
        %v1801 = vunpack.c.l.b16 %v1615
        %v1802 = vunpack.c.l.b16 %v1616
        %v1803 = vunpack.c.l.b16 %v1617
        %v1804 = vunpack.c.l.b16 %v1618
        %v1805 = vunpack.c.l.b16 %v1619
        %v1806 = vpack.c.b16 %v1791, %v1790
        %v1807 = vpack.c.b16 %v1793, %v1792
        %v1808 = vpack.c.b16 %v1795, %v1794
        %v1809 = vpack.c.b16 %v1797, %v1796
        %v1810 = vpack.c.b16 %v1799, %v1798
        %v1811 = vpack.c.b16 %v1801, %v1800
        %v1812 = vpack.c.b16 %v1803, %v1802
        %v1813 = vpack.c.b16 %v1805, %v1804
        %1822 = vmatpush.bf16.msra.mxu0 %v1813
        %1823 = vmatpush.bf16.msra.mxu0 %v1812
        %1824 = vmatpush.bf16.msra.mxu0 %v1811
        %1825 = vmatpush.bf16.msra.mxu0 %v1810
        %1826 = vmatpush.bf16.msra.mxu0 %v1809
        %1827 = vmatpush.bf16.msra.mxu0 %v1808
        %1828 = vmatpush.bf16.msra.mxu0 %v1807
        %1829 = vmatpush.bf16.msra.mxu0 %v1806
        %1830 = vmatmul.bf16.gmra.mxu0 %v923
        %v1831 = vpop.f32.mrf.mxu0
        %v1832 = vadd.f32 %v1646, %v1831
        %v1833 = vpop.f32.mrf.mxu0
        %1834 = vdwg.mxu0
        %v1851 = vunpack.c.l.b16 %v1620
        %v1852 = vunpack.c.l.b16 %v1621
        %v1853 = vunpack.c.l.b16 %v1622
        %v1854 = vunpack.c.l.b16 %v1623
        %v1855 = vunpack.c.l.b16 %v1624
        %v1856 = vunpack.c.l.b16 %v1625
        %v1857 = vunpack.c.l.b16 %v1626
        %v1858 = vunpack.c.l.b16 %v1627
        %v1859 = vunpack.c.l.b16 %v1628
        %v1860 = vunpack.c.l.b16 %v1629
        %v1861 = vunpack.c.l.b16 %v1630
        %v1862 = vunpack.c.l.b16 %v1631
        %v1863 = vunpack.c.l.b16 %v1632
        %v1864 = vunpack.c.l.b16 %v1633
        %v1865 = vunpack.c.l.b16 %v1634
        %v1866 = vunpack.c.l.b16 %v1635
        %v1867 = vpack.c.b16 %v1852, %v1851
        %v1868 = vpack.c.b16 %v1854, %v1853
        %v1869 = vpack.c.b16 %v1856, %v1855
        %v1870 = vpack.c.b16 %v1858, %v1857
        %v1871 = vpack.c.b16 %v1860, %v1859
        %v1872 = vpack.c.b16 %v1862, %v1861
        %v1873 = vpack.c.b16 %v1864, %v1863
        %v1874 = vpack.c.b16 %v1866, %v1865
        %1883 = vmatpush.bf16.msra.mxu0 %v1874
        %1884 = vmatpush.bf16.msra.mxu0 %v1873
        %1885 = vmatpush.bf16.msra.mxu0 %v1872
        %1886 = vmatpush.bf16.msra.mxu0 %v1871
        %1887 = vmatpush.bf16.msra.mxu0 %v1870
        %1888 = vmatpush.bf16.msra.mxu0 %v1869
        %1889 = vmatpush.bf16.msra.mxu0 %v1868
        %1890 = vmatpush.bf16.msra.mxu0 %v1867
        %1891 = vmatmul.bf16.gmra.mxu0 %v923
        %v1892 = vpop.f32.mrf.mxu0
        %v1893 = vadd.f32 %v1647, %v1892
        %v1894 = vpop.f32.mrf.mxu0
        %1895 = vdwg.mxu0
        %v1896 = vpack.c.bf16 %v1062, %v1062
        %v1897 = vpack.c.bf16 %v1123, %v1123
        %v1898 = vpack.c.bf16 %v1184, %v1184
        %v1899 = vpack.c.bf16 %v1245, %v1245
        %v1900 = vpack.c.bf16 %v1386, %v1386
        %v1901 = vpack.c.bf16 %v1447, %v1447
        %v1902 = vpack.c.bf16 %v1508, %v1508
        %v1903 = vpack.c.bf16 %v1569, %v1569
        %vm1904 = vcmask 261120
        %v1906 = vsel %vm1904, %v1896, 0
        %v1909 = vsel %vm1904, %v1900, 0
        %1911 = vmatpush.bf16.xpose.msra.mxu0 0
        %1912 = vmatpush.bf16.xpose.msra.mxu0 0
        %1913 = vmatpush.bf16.xpose.msra.mxu0 0
        %1914 = vmatpush.bf16.xpose.msra.mxu0 0
        %1915 = vmatpush.bf16.xpose.msra.mxu0 0
        %1916 = vmatpush.bf16.xpose.msra.mxu0 0
        %1917 = vmatpush.bf16.xpose.msra.mxu0 0
        %1918 = vmatpush.bf16.xpose.msra.mxu0 %v1909
        %1919 = vmatmul.bf16.gmra.mxu0 %v1906
        %v1920 = vpop.f32.mrf.mxu0
        %v1921 = vadd.f32 0.0, %v1920
        %v1922 = vpop.f32.mrf.mxu0
        %1923 = vdwg.mxu0
        %v1925 = vsel %vm1904, %v1897, 0
        %v1928 = vsel %vm1904, %v1901, 0
        %1930 = vmatpush.bf16.xpose.msra.mxu0 0
        %1931 = vmatpush.bf16.xpose.msra.mxu0 0
        %1932 = vmatpush.bf16.xpose.msra.mxu0 0
        %1933 = vmatpush.bf16.xpose.msra.mxu0 0
        %1934 = vmatpush.bf16.xpose.msra.mxu0 0
        %1935 = vmatpush.bf16.xpose.msra.mxu0 0
        %1936 = vmatpush.bf16.xpose.msra.mxu0 0
        %1937 = vmatpush.bf16.xpose.msra.mxu0 %v1928
        %1938 = vmatmul.bf16.gmra.mxu0 %v1925
        %v1939 = vpop.f32.mrf.mxu0
        %v1940 = vadd.f32 0.0, %v1939
        %v1941 = vpop.f32.mrf.mxu0
        %1942 = vdwg.mxu0
        %v1944 = vsel %vm1904, %v1898, 0
        %v1947 = vsel %vm1904, %v1902, 0
        %1949 = vmatpush.bf16.xpose.msra.mxu0 0
        %1950 = vmatpush.bf16.xpose.msra.mxu0 0
        %1951 = vmatpush.bf16.xpose.msra.mxu0 0
        %1952 = vmatpush.bf16.xpose.msra.mxu0 0
        %1953 = vmatpush.bf16.xpose.msra.mxu0 0
        %1954 = vmatpush.bf16.xpose.msra.mxu0 0
        %1955 = vmatpush.bf16.xpose.msra.mxu0 0
        %1956 = vmatpush.bf16.xpose.msra.mxu0 %v1947
        %1957 = vmatmul.bf16.gmra.mxu0 %v1944
        %v1958 = vpop.f32.mrf.mxu0
        %v1959 = vadd.f32 0.0, %v1958
        %v1960 = vpop.f32.mrf.mxu0
        %1961 = vdwg.mxu0
        %v1963 = vsel %vm1904, %v1899, 0
        %v1966 = vsel %vm1904, %v1903, 0
        %1968 = vmatpush.bf16.xpose.msra.mxu0 0
        %1969 = vmatpush.bf16.xpose.msra.mxu0 0
        %1970 = vmatpush.bf16.xpose.msra.mxu0 0
        %1971 = vmatpush.bf16.xpose.msra.mxu0 0
        %1972 = vmatpush.bf16.xpose.msra.mxu0 0
        %1973 = vmatpush.bf16.xpose.msra.mxu0 0
        %1974 = vmatpush.bf16.xpose.msra.mxu0 0
        %1975 = vmatpush.bf16.xpose.msra.mxu0 %v1966
        %1976 = vmatmul.bf16.gmra.mxu0 %v1963
        %v1977 = vpop.f32.mrf.mxu0
        %v1978 = vadd.f32 0.0, %v1977
        %v1979 = vpop.f32.mrf.mxu0
        %1980 = vdwg.mxu0
        %v1981 = vmul.f32 %v1921, 0.17677669
        %v1982 = vmul.f32 %v1940, 0.17677669
        %v1983 = vmul.f32 %v1959, 0.17677669
        %v1984 = vmul.f32 %v1978, 0.17677669
        %v1986 = vperm.slane %v922, 0
        %v1988 = vadd.f32 %v1981, %v1986
        %v1989 = vadd.f32 %v1982, %v1986
        %v1990 = vadd.f32 %v1983, %v1986
        %v1991 = vadd.f32 %v1984, %v1986
        %vm1992 = vcmask 64512
        %v1993 = vsel %vm1992, %v1988, -inf
        %1994 = vmax.xlane.f32.xlu0 %v1993
        %v1995 = vpop.xlane.xlu0 %1994
        %v1996 = vsel %vm1992, %v1989, -inf
        %1997 = vmax.xlane.f32.xlu0 %v1996
        %v1998 = vpop.xlane.xlu0 %1997
        %v1999 = vsel %vm1992, %v1990, -inf
        %2000 = vmax.xlane.f32.xlu0 %v1999
        %v2001 = vpop.xlane.xlu0 %2000
        %v2002 = vsel %vm1992, %v1991, -inf
        %2003 = vmax.xlane.f32.xlu0 %v2002
        %v2004 = vpop.xlane.xlu0 %2003
        %v2005 = vsub.f32 %v1988, %v1995
        %v2006 = vsub.f32 %v1989, %v1998
        %v2007 = vsub.f32 %v1990, %v2001
        %v2008 = vsub.f32 %v1991, %v2004
        %v2009 = vmul.f32 %v2005, 1.442695
        %v2010 = vpow.pop %v2009
        %v2011 = vmul.f32 %v2006, 1.442695
        %v2012 = vpow.pop %v2011
        %v2013 = vmul.f32 %v2007, 1.442695
        %v2014 = vpow.pop %v2013
        %v2015 = vmul.f32 %v2008, 1.442695
        %v2016 = vpow.pop %v2015
        %v2017 = vsel %vm1992, %v2010, 0.0
        %2018 = vadd.xlane.f32.xlu0 %v2017
        %v2019 = vpop.xlane.xlu0 %2018
        %v2020 = vsel %vm1992, %v2012, 0.0
        %2021 = vadd.xlane.f32.xlu0 %v2020
        %v2022 = vpop.xlane.xlu0 %2021
        %v2023 = vsel %vm1992, %v2014, 0.0
        %2024 = vadd.xlane.f32.xlu0 %v2023
        %v2025 = vpop.xlane.xlu0 %2024
        %v2026 = vsel %vm1992, %v2016, 0.0
        %2027 = vadd.xlane.f32.xlu0 %v2026
        %v2028 = vpop.xlane.xlu0 %2027
        %v2029 = vrcp.pop %v2019
        %v2030 = vmul.f32 %v2019, %v2029
        %v2031 = vsub.f32 1.0, %v2030
        %v2032 = vmul.f32 %v2029, %v2031
        %v2033 = vadd.f32 %v2029, %v2032
        %vm2034 = vweird.f32 %v2019
        %vm2035 = vweird.f32 %v2029
        %vm2036 = vmor %vm2034, %vm2035
        %v2037 = vsel %vm2036, %v2029, %v2033
        %v2038 = vand.u32 2147483647, %v2019
        %vm2039 = vcmp.eq.f32.partialorder %v2038, 8.507059e+37
        %v2040 = vand.u32 %v2019, 2147483648
        %v2041 = vor.u32 1.1754944e-38, %v2040
        %v2042 = vsel %vm2039, %v2041, %v2037
        %v2043 = vrcp.pop %v2022
        %v2044 = vmul.f32 %v2022, %v2043
        %v2045 = vsub.f32 1.0, %v2044
        %v2046 = vmul.f32 %v2043, %v2045
        %v2047 = vadd.f32 %v2043, %v2046
        %vm2048 = vweird.f32 %v2022
        %vm2049 = vweird.f32 %v2043
        %vm2050 = vmor %vm2048, %vm2049
        %v2051 = vsel %vm2050, %v2043, %v2047
        %v2052 = vand.u32 2147483647, %v2022
        %vm2053 = vcmp.eq.f32.partialorder %v2052, 8.507059e+37
        %v2054 = vand.u32 %v2022, 2147483648
        %v2055 = vor.u32 1.1754944e-38, %v2054
        %v2056 = vsel %vm2053, %v2055, %v2051
        %v2057 = vrcp.pop %v2025
        %v2058 = vmul.f32 %v2025, %v2057
        %v2059 = vsub.f32 1.0, %v2058
        %v2060 = vmul.f32 %v2057, %v2059
        %v2061 = vadd.f32 %v2057, %v2060
        %vm2062 = vweird.f32 %v2025
        %vm2063 = vweird.f32 %v2057
        %vm2064 = vmor %vm2062, %vm2063
        %v2065 = vsel %vm2064, %v2057, %v2061
        %v2066 = vand.u32 2147483647, %v2025
        %vm2067 = vcmp.eq.f32.partialorder %v2066, 8.507059e+37
        %v2068 = vand.u32 %v2025, 2147483648
        %v2069 = vor.u32 1.1754944e-38, %v2068
        %v2070 = vsel %vm2067, %v2069, %v2065
        %v2071 = vrcp.pop %v2028
        %v2072 = vmul.f32 %v2028, %v2071
        %v2073 = vsub.f32 1.0, %v2072
        %v2074 = vmul.f32 %v2071, %v2073
        %v2075 = vadd.f32 %v2071, %v2074
        %vm2076 = vweird.f32 %v2028
        %vm2077 = vweird.f32 %v2071
        %vm2078 = vmor %vm2076, %vm2077
        %v2079 = vsel %vm2078, %v2071, %v2075
        %v2080 = vand.u32 2147483647, %v2028
        %vm2081 = vcmp.eq.f32.partialorder %v2080, 8.507059e+37
        %v2082 = vand.u32 %v2028, 2147483648
        %v2083 = vor.u32 1.1754944e-38, %v2082
        %v2084 = vsel %vm2081, %v2083, %v2079
        %v2085 = vmul.f32 %v2010, %v2042
        %v2086 = vmul.f32 %v2012, %v2056
        %v2087 = vmul.f32 %v2014, %v2070
        %v2088 = vmul.f32 %v2016, %v2084
        %v2089 = vpack.c.bf16 %v2085, %v2085
        %v2090 = vpack.c.bf16 %v2086, %v2086
        %v2091 = vpack.c.bf16 %v2087, %v2087
        %v2092 = vpack.c.bf16 %v2088, %v2088
        %v2093 = vpack.c.bf16 %v1710, %v1710
        %v2094 = vpack.c.bf16 %v1771, %v1771
        %v2095 = vpack.c.bf16 %v1832, %v1832
        %v2096 = vpack.c.bf16 %v1893, %v1893
        %v2098 = vsel %vm1992, %v2089, 0
        %vm2100 = vcmask 1043456
        %v2102 = vsel %vm2100, %v2093, 0
        %2104 = vmatpush.bf16.msra.mxu0 0
        %2105 = vmatpush.bf16.msra.mxu0 0
        %2106 = vmatpush.bf16.msra.mxu0 0
        %2107 = vmatpush.bf16.msra.mxu0 0
        %2108 = vmatpush.bf16.msra.mxu0 0
        %2109 = vmatpush.bf16.msra.mxu0 0
        %2110 = vmatpush.bf16.msra.mxu0 0
        %2111 = vmatpush.bf16.msra.mxu0 %v2102
        %2112 = vmatmul.bf16.gmra.mxu0 %v2098
        %v2113 = vpop.f32.mrf.mxu0
        %v2114 = vadd.f32 0.0, %v2113
        %v2115 = vpop.f32.mrf.mxu0
        %2116 = vdwg.mxu0
        %v2118 = vsel %vm1992, %v2090, 0
        %v2121 = vsel %vm2100, %v2094, 0
        %2123 = vmatpush.bf16.msra.mxu0 0
        %2124 = vmatpush.bf16.msra.mxu0 0
        %2125 = vmatpush.bf16.msra.mxu0 0
        %2126 = vmatpush.bf16.msra.mxu0 0
        %2127 = vmatpush.bf16.msra.mxu0 0
        %2128 = vmatpush.bf16.msra.mxu0 0
        %2129 = vmatpush.bf16.msra.mxu0 0
        %2130 = vmatpush.bf16.msra.mxu0 %v2121
        %2131 = vmatmul.bf16.gmra.mxu0 %v2118
        %v2132 = vpop.f32.mrf.mxu0
        %v2133 = vadd.f32 0.0, %v2132
        %v2134 = vpop.f32.mrf.mxu0
        %2135 = vdwg.mxu0
        %v2137 = vsel %vm1992, %v2091, 0
        %v2140 = vsel %vm2100, %v2095, 0
        %2142 = vmatpush.bf16.msra.mxu0 0
        %2143 = vmatpush.bf16.msra.mxu0 0
        %2144 = vmatpush.bf16.msra.mxu0 0
        %2145 = vmatpush.bf16.msra.mxu0 0
        %2146 = vmatpush.bf16.msra.mxu0 0
        %2147 = vmatpush.bf16.msra.mxu0 0
        %2148 = vmatpush.bf16.msra.mxu0 0
        %2149 = vmatpush.bf16.msra.mxu0 %v2140
        %2150 = vmatmul.bf16.gmra.mxu0 %v2137
        %v2151 = vpop.f32.mrf.mxu0
        %v2152 = vadd.f32 0.0, %v2151
        %v2153 = vpop.f32.mrf.mxu0
        %2154 = vdwg.mxu0
        %v2156 = vsel %vm1992, %v2092, 0
        %v2159 = vsel %vm2100, %v2096, 0
        %2161 = vmatpush.bf16.msra.mxu0 0
        %2162 = vmatpush.bf16.msra.mxu0 0
        %2163 = vmatpush.bf16.msra.mxu0 0
        %2164 = vmatpush.bf16.msra.mxu0 0
        %2165 = vmatpush.bf16.msra.mxu0 0
        %2166 = vmatpush.bf16.msra.mxu0 0
        %2167 = vmatpush.bf16.msra.mxu0 0
        %2168 = vmatpush.bf16.msra.mxu0 %v2159
        %2169 = vmatmul.bf16.gmra.mxu0 %v2156
        %v2170 = vpop.f32.mrf.mxu0
        %v2171 = vadd.f32 0.0, %v2170
        %v2172 = vpop.f32.mrf.mxu0
        %2173 = vdwg.mxu0
        %v2174 = vpack.c.bf16 %v2114, %v2114
        %v2175 = vpack.c.bf16 %v2133, %v2133
        %v2176 = vpack.c.bf16 %v2152, %v2152
        %v2177 = vpack.c.bf16 %v2171, %v2171
        %v2178 = vld [vmem:[%s879] sm:$0xf]
        %v2179 = vld [vmem:[%s879 + $0x4] sm:$0xf]
        %v2180 = vld [vmem:[%s879 + $0x8] sm:$0xf]
        %v2181 = vld [vmem:[%s879 + $0xc] sm:$0xf]
        %v2182 = vld [vmem:[%s879 + $0x10] sm:$0xf]
        %v2183 = vld [vmem:[%s879 + $0x14] sm:$0xf]
        %v2184 = vld [vmem:[%s879 + $0x18] sm:$0xf]
        %v2185 = vld [vmem:[%s879 + $0x1c] sm:$0xf]
        %v2186 = vld [vmem:[%s879 + $0x20] sm:$0xf]
        %v2187 = vld [vmem:[%s879 + $0x24] sm:$0xf]
        %v2188 = vld [vmem:[%s879 + $0x28] sm:$0xf]
        %v2189 = vld [vmem:[%s879 + $0x2c] sm:$0xf]
        %v2190 = vld [vmem:[%s879 + $0x30] sm:$0xf]
        %v2191 = vld [vmem:[%s879 + $0x34] sm:$0xf]
        %v2192 = vld [vmem:[%s879 + $0x38] sm:$0xf]
        %v2193 = vld [vmem:[%s879 + $0x3c] sm:$0xf]
        %v2198 = vunpack.c.l.b16 %v2178
        %v2199 = vunpack.c.l.b16 %v2179
        %v2200 = vunpack.c.l.b16 %v2180
        %v2201 = vunpack.c.l.b16 %v2181
        %v2202 = vpack.c.b16 %v2199, %v2198
        %v2203 = vpack.c.b16 %v2201, %v2200
        %v2207 = vsel %vm1904, %v2174, 0
        %2209 = vmatpush.bf16.msra.mxu0 0
        %2210 = vmatpush.bf16.msra.mxu0 0
        %2211 = vmatpush.bf16.msra.mxu0 0
        %2212 = vmatpush.bf16.msra.mxu0 0
        %2213 = vmatpush.bf16.msra.mxu0 0
        %2214 = vmatpush.bf16.msra.mxu0 0
        %2215 = vmatpush.bf16.msra.mxu0 %v2203
        %2216 = vmatpush.bf16.msra.mxu0 %v2202
        %2217 = vmatmul.bf16.gmra.mxu0 %v2207
        %v2218 = vpop.f32.mrf.mxu0
        %v2219 = vadd.f32 0.0, %v2218
        %v2220 = vpop.f32.mrf.mxu0
        %2221 = vdwg.mxu0
        %v2226 = vunpack.c.l.b16 %v2182
        %v2227 = vunpack.c.l.b16 %v2183
        %v2228 = vunpack.c.l.b16 %v2184
        %v2229 = vunpack.c.l.b16 %v2185
        %v2230 = vpack.c.b16 %v2227, %v2226
        %v2231 = vpack.c.b16 %v2229, %v2228
        %v2235 = vsel %vm1904, %v2175, 0
        %2237 = vmatpush.bf16.msra.mxu0 0
        %2238 = vmatpush.bf16.msra.mxu0 0
        %2239 = vmatpush.bf16.msra.mxu0 0
        %2240 = vmatpush.bf16.msra.mxu0 0
        %2241 = vmatpush.bf16.msra.mxu0 0
        %2242 = vmatpush.bf16.msra.mxu0 0
        %2243 = vmatpush.bf16.msra.mxu0 %v2231
        %2244 = vmatpush.bf16.msra.mxu0 %v2230
        %2245 = vmatmul.bf16.gmra.mxu0 %v2235
        %v2246 = vpop.f32.mrf.mxu0
        %v2247 = vadd.f32 0.0, %v2246
        %v2248 = vpop.f32.mrf.mxu0
        %2249 = vdwg.mxu0
        %v2254 = vunpack.c.l.b16 %v2186
        %v2255 = vunpack.c.l.b16 %v2187
        %v2256 = vunpack.c.l.b16 %v2188
        %v2257 = vunpack.c.l.b16 %v2189
        %v2258 = vpack.c.b16 %v2255, %v2254
        %v2259 = vpack.c.b16 %v2257, %v2256
        %v2263 = vsel %vm1904, %v2176, 0
        %2265 = vmatpush.bf16.msra.mxu0 0
        %2266 = vmatpush.bf16.msra.mxu0 0
        %2267 = vmatpush.bf16.msra.mxu0 0
        %2268 = vmatpush.bf16.msra.mxu0 0
        %2269 = vmatpush.bf16.msra.mxu0 0
        %2270 = vmatpush.bf16.msra.mxu0 0
        %2271 = vmatpush.bf16.msra.mxu0 %v2259
        %2272 = vmatpush.bf16.msra.mxu0 %v2258
        %2273 = vmatmul.bf16.gmra.mxu0 %v2263
        %v2274 = vpop.f32.mrf.mxu0
        %v2275 = vadd.f32 0.0, %v2274
        %v2276 = vpop.f32.mrf.mxu0
        %2277 = vdwg.mxu0
        %v2282 = vunpack.c.l.b16 %v2190
        %v2283 = vunpack.c.l.b16 %v2191
        %v2284 = vunpack.c.l.b16 %v2192
        %v2285 = vunpack.c.l.b16 %v2193
        %v2286 = vpack.c.b16 %v2283, %v2282
        %v2287 = vpack.c.b16 %v2285, %v2284
        %v2291 = vsel %vm1904, %v2177, 0
        %2293 = vmatpush.bf16.msra.mxu0 0
        %2294 = vmatpush.bf16.msra.mxu0 0
        %2295 = vmatpush.bf16.msra.mxu0 0
        %2296 = vmatpush.bf16.msra.mxu0 0
        %2297 = vmatpush.bf16.msra.mxu0 0
        %2298 = vmatpush.bf16.msra.mxu0 0
        %2299 = vmatpush.bf16.msra.mxu0 %v2287
        %2300 = vmatpush.bf16.msra.mxu0 %v2286
        %2301 = vmatmul.bf16.gmra.mxu0 %v2291
        %v2302 = vpop.f32.mrf.mxu0
        %v2303 = vadd.f32 0.0, %v2302
        %v2304 = vpop.f32.mrf.mxu0
        %2305 = vdwg.mxu0
        %v2306 = vadd.f32 %v2219, %v2247
        %v2307 = vadd.f32 %v2306, %v2275
        %v2308 = vadd.f32 %v2307, %v2303
        %v2309 = vld [vmem:[%s882] sm:$0x1]
        %v2311 = vperm.slane %v2309, 0
        %v2313 = vadd.f32 %v2308, %v2311
        %v2314 = vadd.f32 %v919, %v2313
        %v2315 = vld [vmem:[%s885] sm:$0x1]
        %v2316 = vld [vmem:[%s888] sm:$0x1]
        %2317 = vadd.xlane.f32.xlu0 %v2314
        %v2318 = vpop.xlane.xlu0 %2317
        %v2319 = vrcp.pop 128.0
        %v2320 = vmul.f32 128.0, %v2319
        %v2321 = vsub.f32 1.0, %v2320
        %v2322 = vmul.f32 %v2319, %v2321
        %v2323 = vadd.f32 %v2319, %v2322
        %vm2324 = vweird.f32 %v2319
        %v2325 = vsel %vm2324, %v2319, %v2323
        %v2326 = vmul.f32 %v2318, %v2325
        %v2327 = vsub.f32 %v2314, %v2326
        %v2328 = vmul.f32 %v2327, %v2327
        %2329 = vadd.xlane.f32.xlu0 %v2328
        %v2330 = vpop.xlane.xlu0 %2329
        %v2331 = vmul.f32 %v2330, %v2325
        %v2332 = vadd.f32 %v2331, 1e-12
        %v2333 = vrsqrt.pop %v2332
        %v2334 = vmul.f32 %v2333, %v2332
        %v2335 = vmul.f32 %v2334, %v2333
        %v2336 = vmul.f32 0.5, %v2335
        %v2337 = vsub.f32 1.5, %v2336
        %v2338 = vmul.f32 %v2333, %v2337
        %vm2339 = vweird.f32 %v2332
        %vm2340 = vweird.f32 %v2333
        %vm2341 = vmor %vm2339, %vm2340
        %v2342 = vsel %vm2341, %v2333, %v2338
        %v2343 = vmul.f32 %v2327, %v2342
        %v2345 = vperm.slane %v2315, 0
        %v2347 = vmul.f32 %v2343, %v2345
        %v2349 = vperm.slane %v2316, 0
        %v2351 = vadd.f32 %v2347, %v2349
        %v2352 = vpack.c.bf16 %v2351, %v2351
        %v2353 = vld [vmem:[%s893] sm:$0xff]
        %v2354 = vld [vmem:[%s893 + $0x8] sm:$0xff]
        %v2355 = vld [vmem:[%s893 + $0x10] sm:$0xff]
        %v2356 = vld [vmem:[%s893 + $0x18] sm:$0xff]
        %v2357 = vld [vmem:[%s893 + $0x20] sm:$0xff]
        %v2358 = vld [vmem:[%s893 + $0x28] sm:$0xff]
        %v2359 = vld [vmem:[%s893 + $0x30] sm:$0xff]
        %v2360 = vld [vmem:[%s893 + $0x38] sm:$0xff]
        %v2361 = vld [vmem:[%s893 + $0x40] sm:$0xff]
        %v2362 = vld [vmem:[%s893 + $0x48] sm:$0xff]
        %v2363 = vld [vmem:[%s893 + $0x50] sm:$0xff]
        %v2364 = vld [vmem:[%s893 + $0x58] sm:$0xff]
        %v2365 = vld [vmem:[%s893 + $0x60] sm:$0xff]
        %v2366 = vld [vmem:[%s893 + $0x68] sm:$0xff]
        %v2367 = vld [vmem:[%s893 + $0x70] sm:$0xff]
        %v2368 = vld [vmem:[%s893 + $0x78] sm:$0xff]
        %v2369 = vld [vmem:[%s893 + $0x80] sm:$0xff]
        %v2370 = vld [vmem:[%s893 + $0x88] sm:$0xff]
        %v2371 = vld [vmem:[%s893 + $0x90] sm:$0xff]
        %v2372 = vld [vmem:[%s893 + $0x98] sm:$0xff]
        %v2373 = vld [vmem:[%s893 + $0xa0] sm:$0xff]
        %v2374 = vld [vmem:[%s893 + $0xa8] sm:$0xff]
        %v2375 = vld [vmem:[%s893 + $0xb0] sm:$0xff]
        %v2376 = vld [vmem:[%s893 + $0xb8] sm:$0xff]
        %v2377 = vld [vmem:[%s893 + $0xc0] sm:$0xff]
        %v2378 = vld [vmem:[%s893 + $0xc8] sm:$0xff]
        %v2379 = vld [vmem:[%s893 + $0xd0] sm:$0xff]
        %v2380 = vld [vmem:[%s893 + $0xd8] sm:$0xff]
        %v2381 = vld [vmem:[%s893 + $0xe0] sm:$0xff]
        %v2382 = vld [vmem:[%s893 + $0xe8] sm:$0xff]
        %v2383 = vld [vmem:[%s893 + $0xf0] sm:$0xff]
        %v2384 = vld [vmem:[%s893 + $0xf8] sm:$0xff]
        %v2385 = vld [vmem:[%s897] sm:$0xf]
        %v2387 = vperm.slane %v2385, 0
        %v2388 = vperm.slane %v2385, 1
        %v2389 = vperm.slane %v2385, 2
        %v2390 = vperm.slane %v2385, 3
        %v2427 = vunpack.c.l.b16 %v2353
        %v2428 = vunpack.c.h.b16 %v2353
        %v2429 = vunpack.c.l.b16 %v2354
        %v2430 = vunpack.c.h.b16 %v2354
        %v2431 = vunpack.c.l.b16 %v2355
        %v2432 = vunpack.c.h.b16 %v2355
        %v2433 = vunpack.c.l.b16 %v2356
        %v2434 = vunpack.c.h.b16 %v2356
        %v2435 = vunpack.c.l.b16 %v2357
        %v2436 = vunpack.c.h.b16 %v2357
        %v2437 = vunpack.c.l.b16 %v2358
        %v2438 = vunpack.c.h.b16 %v2358
        %v2439 = vunpack.c.l.b16 %v2359
        %v2440 = vunpack.c.h.b16 %v2359
        %v2441 = vunpack.c.l.b16 %v2360
        %v2442 = vunpack.c.h.b16 %v2360
        %v2443 = vunpack.c.l.b16 %v2361
        %v2444 = vunpack.c.h.b16 %v2361
        %v2445 = vunpack.c.l.b16 %v2362
        %v2446 = vunpack.c.h.b16 %v2362
        %v2447 = vunpack.c.l.b16 %v2363
        %v2448 = vunpack.c.h.b16 %v2363
        %v2449 = vunpack.c.l.b16 %v2364
        %v2450 = vunpack.c.h.b16 %v2364
        %v2451 = vunpack.c.l.b16 %v2365
        %v2452 = vunpack.c.h.b16 %v2365
        %v2453 = vunpack.c.l.b16 %v2366
        %v2454 = vunpack.c.h.b16 %v2366
        %v2455 = vunpack.c.l.b16 %v2367
        %v2456 = vunpack.c.h.b16 %v2367
        %v2457 = vunpack.c.l.b16 %v2368
        %v2458 = vunpack.c.h.b16 %v2368
        %v2459 = vunpack.c.l.b16 %v2369
        %v2460 = vunpack.c.h.b16 %v2369
        %v2461 = vunpack.c.l.b16 %v2370
        %v2462 = vunpack.c.h.b16 %v2370
        %v2463 = vunpack.c.l.b16 %v2371
        %v2464 = vunpack.c.h.b16 %v2371
        %v2465 = vunpack.c.l.b16 %v2372
        %v2466 = vunpack.c.h.b16 %v2372
        %v2467 = vunpack.c.l.b16 %v2373
        %v2468 = vunpack.c.h.b16 %v2373
        %v2469 = vunpack.c.l.b16 %v2374
        %v2470 = vunpack.c.h.b16 %v2374
        %v2471 = vunpack.c.l.b16 %v2375
        %v2472 = vunpack.c.h.b16 %v2375
        %v2473 = vunpack.c.l.b16 %v2376
        %v2474 = vunpack.c.h.b16 %v2376
        %v2475 = vunpack.c.l.b16 %v2377
        %v2476 = vunpack.c.h.b16 %v2377
        %v2477 = vunpack.c.l.b16 %v2378
        %v2478 = vunpack.c.h.b16 %v2378
        %v2479 = vunpack.c.l.b16 %v2379
        %v2480 = vunpack.c.h.b16 %v2379
        %v2481 = vunpack.c.l.b16 %v2380
        %v2482 = vunpack.c.h.b16 %v2380
        %v2483 = vunpack.c.l.b16 %v2381
        %v2484 = vunpack.c.h.b16 %v2381
        %v2485 = vunpack.c.l.b16 %v2382
        %v2486 = vunpack.c.h.b16 %v2382
        %v2487 = vunpack.c.l.b16 %v2383
        %v2488 = vunpack.c.h.b16 %v2383
        %v2489 = vunpack.c.l.b16 %v2384
        %v2490 = vunpack.c.h.b16 %v2384
        %v2491 = vpack.c.b16 %v2431, %v2427
        %v2492 = vpack.c.b16 %v2432, %v2428
        %v2493 = vpack.c.b16 %v2433, %v2429
        %v2494 = vpack.c.b16 %v2434, %v2430
        %v2495 = vpack.c.b16 %v2439, %v2435
        %v2496 = vpack.c.b16 %v2440, %v2436
        %v2497 = vpack.c.b16 %v2441, %v2437
        %v2498 = vpack.c.b16 %v2442, %v2438
        %v2499 = vpack.c.b16 %v2447, %v2443
        %v2500 = vpack.c.b16 %v2448, %v2444
        %v2501 = vpack.c.b16 %v2449, %v2445
        %v2502 = vpack.c.b16 %v2450, %v2446
        %v2503 = vpack.c.b16 %v2455, %v2451
        %v2504 = vpack.c.b16 %v2456, %v2452
        %v2505 = vpack.c.b16 %v2457, %v2453
        %v2506 = vpack.c.b16 %v2458, %v2454
        %v2507 = vpack.c.b16 %v2463, %v2459
        %v2508 = vpack.c.b16 %v2464, %v2460
        %v2509 = vpack.c.b16 %v2465, %v2461
        %v2510 = vpack.c.b16 %v2466, %v2462
        %v2511 = vpack.c.b16 %v2471, %v2467
        %v2512 = vpack.c.b16 %v2472, %v2468
        %v2513 = vpack.c.b16 %v2473, %v2469
        %v2514 = vpack.c.b16 %v2474, %v2470
        %v2515 = vpack.c.b16 %v2479, %v2475
        %v2516 = vpack.c.b16 %v2480, %v2476
        %v2517 = vpack.c.b16 %v2481, %v2477
        %v2518 = vpack.c.b16 %v2482, %v2478
        %v2519 = vpack.c.b16 %v2487, %v2483
        %v2520 = vpack.c.b16 %v2488, %v2484
        %v2521 = vpack.c.b16 %v2489, %v2485
        %v2522 = vpack.c.b16 %v2490, %v2486
        %2555 = vmatpush.bf16.msra.mxu0 %v2519
        %2556 = vmatpush.bf16.msra.mxu0 %v2515
        %2557 = vmatpush.bf16.msra.mxu0 %v2511
        %2558 = vmatpush.bf16.msra.mxu0 %v2507
        %2559 = vmatpush.bf16.msra.mxu0 %v2503
        %2560 = vmatpush.bf16.msra.mxu0 %v2499
        %2561 = vmatpush.bf16.msra.mxu0 %v2495
        %2562 = vmatpush.bf16.msra.mxu0 %v2491
        %2563 = vmatmul.bf16.gmra.mxu0 %v2352
        %v2564 = vpop.f32.mrf.mxu0
        %v2565 = vadd.f32 %v2387, %v2564
        %v2566 = vpop.f32.mrf.mxu0
        %2567 = vdwg.mxu0
        %2568 = vmatpush.bf16.msra.mxu0 %v2520
        %2569 = vmatpush.bf16.msra.mxu0 %v2516
        %2570 = vmatpush.bf16.msra.mxu0 %v2512
        %2571 = vmatpush.bf16.msra.mxu0 %v2508
        %2572 = vmatpush.bf16.msra.mxu0 %v2504
        %2573 = vmatpush.bf16.msra.mxu0 %v2500
        %2574 = vmatpush.bf16.msra.mxu0 %v2496
        %2575 = vmatpush.bf16.msra.mxu0 %v2492
        %2576 = vmatmul.bf16.gmra.mxu0 %v2352
        %v2577 = vpop.f32.mrf.mxu0
        %v2578 = vadd.f32 %v2388, %v2577
        %v2579 = vpop.f32.mrf.mxu0
        %2580 = vdwg.mxu0
        %2581 = vmatpush.bf16.msra.mxu0 %v2521
        %2582 = vmatpush.bf16.msra.mxu0 %v2517
        %2583 = vmatpush.bf16.msra.mxu0 %v2513
        %2584 = vmatpush.bf16.msra.mxu0 %v2509
        %2585 = vmatpush.bf16.msra.mxu0 %v2505
        %2586 = vmatpush.bf16.msra.mxu0 %v2501
        %2587 = vmatpush.bf16.msra.mxu0 %v2497
        %2588 = vmatpush.bf16.msra.mxu0 %v2493
        %2589 = vmatmul.bf16.gmra.mxu0 %v2352
        %v2590 = vpop.f32.mrf.mxu0
        %v2591 = vadd.f32 %v2389, %v2590
        %v2592 = vpop.f32.mrf.mxu0
        %2593 = vdwg.mxu0
        %2594 = vmatpush.bf16.msra.mxu0 %v2522
        %2595 = vmatpush.bf16.msra.mxu0 %v2518
        %2596 = vmatpush.bf16.msra.mxu0 %v2514
        %2597 = vmatpush.bf16.msra.mxu0 %v2510
        %2598 = vmatpush.bf16.msra.mxu0 %v2506
        %2599 = vmatpush.bf16.msra.mxu0 %v2502
        %2600 = vmatpush.bf16.msra.mxu0 %v2498
        %2601 = vmatpush.bf16.msra.mxu0 %v2494
        %2602 = vmatmul.bf16.gmra.mxu0 %v2352
        %v2603 = vpop.f32.mrf.mxu0
        %v2604 = vadd.f32 %v2390, %v2603
        %v2605 = vpop.f32.mrf.mxu0
        %2606 = vdwg.mxu0
        %v2607 = vmul.f32 %v2565, 0.5
        %v2608 = vmul.f32 %v2578, 0.5
        %v2609 = vmul.f32 %v2591, 0.5
        %v2610 = vmul.f32 %v2604, 0.5
        %v2611 = vmul.f32 %v2565, 0.044715
        %v2612 = vmul.f32 %v2578, 0.044715
        %v2613 = vmul.f32 %v2591, 0.044715
        %v2614 = vmul.f32 %v2604, 0.044715
        %v2615 = vmul.f32 %v2611, %v2565
        %v2616 = vmul.f32 %v2612, %v2578
        %v2617 = vmul.f32 %v2613, %v2591
        %v2618 = vmul.f32 %v2614, %v2604
        %v2619 = vmul.f32 %v2615, %v2565
        %v2620 = vmul.f32 %v2616, %v2578
        %v2621 = vmul.f32 %v2617, %v2591
        %v2622 = vmul.f32 %v2618, %v2604
        %v2623 = vadd.f32 %v2565, %v2619
        %v2624 = vadd.f32 %v2578, %v2620
        %v2625 = vadd.f32 %v2591, %v2621
        %v2626 = vadd.f32 %v2604, %v2622
        %v2627 = vmul.f32 %v2623, 0.7978846
        %v2628 = vmul.f32 %v2624, 0.7978846
        %v2629 = vmul.f32 %v2625, 0.7978846
        %v2630 = vmul.f32 %v2626, 0.7978846
        %v2631 = vtanh.pop %v2627
        %v2632 = vtanh.pop %v2628
        %v2633 = vtanh.pop %v2629
        %v2634 = vtanh.pop %v2630
        %v2635 = vadd.f32 %v2631, 1.0
        %v2636 = vadd.f32 %v2632, 1.0
        %v2637 = vadd.f32 %v2633, 1.0
        %v2638 = vadd.f32 %v2634, 1.0
        %v2639 = vmul.f32 %v2607, %v2635
        %v2640 = vmul.f32 %v2608, %v2636
        %v2641 = vmul.f32 %v2609, %v2637
        %v2642 = vmul.f32 %v2610, %v2638
        %v2643 = vpack.c.bf16 %v2639, %v2639
        %v2644 = vpack.c.bf16 %v2640, %v2640
        %v2645 = vpack.c.bf16 %v2641, %v2641
        %v2646 = vpack.c.bf16 %v2642, %v2642
        %v2647 = vld [vmem:[%s902] sm:$0xf]
        %v2648 = vld [vmem:[%s902 + $0x4] sm:$0xf]
        %v2649 = vld [vmem:[%s902 + $0x8] sm:$0xf]
        %v2650 = vld [vmem:[%s902 + $0xc] sm:$0xf]
        %v2651 = vld [vmem:[%s902 + $0x10] sm:$0xf]
        %v2652 = vld [vmem:[%s902 + $0x14] sm:$0xf]
        %v2653 = vld [vmem:[%s902 + $0x18] sm:$0xf]
        %v2654 = vld [vmem:[%s902 + $0x1c] sm:$0xf]
        %v2655 = vld [vmem:[%s902 + $0x20] sm:$0xf]
        %v2656 = vld [vmem:[%s902 + $0x24] sm:$0xf]
        %v2657 = vld [vmem:[%s902 + $0x28] sm:$0xf]
        %v2658 = vld [vmem:[%s902 + $0x2c] sm:$0xf]
        %v2659 = vld [vmem:[%s902 + $0x30] sm:$0xf]
        %v2660 = vld [vmem:[%s902 + $0x34] sm:$0xf]
        %v2661 = vld [vmem:[%s902 + $0x38] sm:$0xf]
        %v2662 = vld [vmem:[%s902 + $0x3c] sm:$0xf]
        %v2663 = vld [vmem:[%s902 + $0x40] sm:$0xf]
        %v2664 = vld [vmem:[%s902 + $0x44] sm:$0xf]
        %v2665 = vld [vmem:[%s902 + $0x48] sm:$0xf]
        %v2666 = vld [vmem:[%s902 + $0x4c] sm:$0xf]
        %v2667 = vld [vmem:[%s902 + $0x50] sm:$0xf]
        %v2668 = vld [vmem:[%s902 + $0x54] sm:$0xf]
        %v2669 = vld [vmem:[%s902 + $0x58] sm:$0xf]
        %v2670 = vld [vmem:[%s902 + $0x5c] sm:$0xf]
        %v2671 = vld [vmem:[%s902 + $0x60] sm:$0xf]
        %v2672 = vld [vmem:[%s902 + $0x64] sm:$0xf]
        %v2673 = vld [vmem:[%s902 + $0x68] sm:$0xf]
        %v2674 = vld [vmem:[%s902 + $0x6c] sm:$0xf]
        %v2675 = vld [vmem:[%s902 + $0x70] sm:$0xf]
        %v2676 = vld [vmem:[%s902 + $0x74] sm:$0xf]
        %v2677 = vld [vmem:[%s902 + $0x78] sm:$0xf]
        %v2678 = vld [vmem:[%s902 + $0x7c] sm:$0xf]
        %v2679 = vld [vmem:[%s902 + $0x80] sm:$0xf]
        %v2680 = vld [vmem:[%s902 + $0x84] sm:$0xf]
        %v2681 = vld [vmem:[%s902 + $0x88] sm:$0xf]
        %v2682 = vld [vmem:[%s902 + $0x8c] sm:$0xf]
        %v2683 = vld [vmem:[%s902 + $0x90] sm:$0xf]
        %v2684 = vld [vmem:[%s902 + $0x94] sm:$0xf]
        %v2685 = vld [vmem:[%s902 + $0x98] sm:$0xf]
        %v2686 = vld [vmem:[%s902 + $0x9c] sm:$0xf]
        %v2687 = vld [vmem:[%s902 + $0xa0] sm:$0xf]
        %v2688 = vld [vmem:[%s902 + $0xa4] sm:$0xf]
        %v2689 = vld [vmem:[%s902 + $0xa8] sm:$0xf]
        %v2690 = vld [vmem:[%s902 + $0xac] sm:$0xf]
        %v2691 = vld [vmem:[%s902 + $0xb0] sm:$0xf]
        %v2692 = vld [vmem:[%s902 + $0xb4] sm:$0xf]
        %v2693 = vld [vmem:[%s902 + $0xb8] sm:$0xf]
        %v2694 = vld [vmem:[%s902 + $0xbc] sm:$0xf]
        %v2695 = vld [vmem:[%s902 + $0xc0] sm:$0xf]
        %v2696 = vld [vmem:[%s902 + $0xc4] sm:$0xf]
        %v2697 = vld [vmem:[%s902 + $0xc8] sm:$0xf]
        %v2698 = vld [vmem:[%s902 + $0xcc] sm:$0xf]
        %v2699 = vld [vmem:[%s902 + $0xd0] sm:$0xf]
        %v2700 = vld [vmem:[%s902 + $0xd4] sm:$0xf]
        %v2701 = vld [vmem:[%s902 + $0xd8] sm:$0xf]
        %v2702 = vld [vmem:[%s902 + $0xdc] sm:$0xf]
        %v2703 = vld [vmem:[%s902 + $0xe0] sm:$0xf]
        %v2704 = vld [vmem:[%s902 + $0xe4] sm:$0xf]
        %v2705 = vld [vmem:[%s902 + $0xe8] sm:$0xf]
        %v2706 = vld [vmem:[%s902 + $0xec] sm:$0xf]
        %v2707 = vld [vmem:[%s902 + $0xf0] sm:$0xf]
        %v2708 = vld [vmem:[%s902 + $0xf4] sm:$0xf]
        %v2709 = vld [vmem:[%s902 + $0xf8] sm:$0xf]
        %v2710 = vld [vmem:[%s902 + $0xfc] sm:$0xf]
        %v2711 = vld [vmem:[%s905] sm:$0x1]
        %v2713 = vperm.slane %v2711, 0
        %v2779 = vunpack.c.l.b16 %v2647
        %v2780 = vunpack.c.l.b16 %v2648
        %v2781 = vunpack.c.l.b16 %v2649
        %v2782 = vunpack.c.l.b16 %v2650
        %v2783 = vunpack.c.l.b16 %v2651
        %v2784 = vunpack.c.l.b16 %v2652
        %v2785 = vunpack.c.l.b16 %v2653
        %v2786 = vunpack.c.l.b16 %v2654
        %v2787 = vunpack.c.l.b16 %v2655
        %v2788 = vunpack.c.l.b16 %v2656
        %v2789 = vunpack.c.l.b16 %v2657
        %v2790 = vunpack.c.l.b16 %v2658
        %v2791 = vunpack.c.l.b16 %v2659
        %v2792 = vunpack.c.l.b16 %v2660
        %v2793 = vunpack.c.l.b16 %v2661
        %v2794 = vunpack.c.l.b16 %v2662
        %v2795 = vunpack.c.l.b16 %v2663
        %v2796 = vunpack.c.l.b16 %v2664
        %v2797 = vunpack.c.l.b16 %v2665
        %v2798 = vunpack.c.l.b16 %v2666
        %v2799 = vunpack.c.l.b16 %v2667
        %v2800 = vunpack.c.l.b16 %v2668
        %v2801 = vunpack.c.l.b16 %v2669
        %v2802 = vunpack.c.l.b16 %v2670
        %v2803 = vunpack.c.l.b16 %v2671
        %v2804 = vunpack.c.l.b16 %v2672
        %v2805 = vunpack.c.l.b16 %v2673
        %v2806 = vunpack.c.l.b16 %v2674
        %v2807 = vunpack.c.l.b16 %v2675
        %v2808 = vunpack.c.l.b16 %v2676
        %v2809 = vunpack.c.l.b16 %v2677
        %v2810 = vunpack.c.l.b16 %v2678
        %v2811 = vunpack.c.l.b16 %v2679
        %v2812 = vunpack.c.l.b16 %v2680
        %v2813 = vunpack.c.l.b16 %v2681
        %v2814 = vunpack.c.l.b16 %v2682
        %v2815 = vunpack.c.l.b16 %v2683
        %v2816 = vunpack.c.l.b16 %v2684
        %v2817 = vunpack.c.l.b16 %v2685
        %v2818 = vunpack.c.l.b16 %v2686
        %v2819 = vunpack.c.l.b16 %v2687
        %v2820 = vunpack.c.l.b16 %v2688
        %v2821 = vunpack.c.l.b16 %v2689
        %v2822 = vunpack.c.l.b16 %v2690
        %v2823 = vunpack.c.l.b16 %v2691
        %v2824 = vunpack.c.l.b16 %v2692
        %v2825 = vunpack.c.l.b16 %v2693
        %v2826 = vunpack.c.l.b16 %v2694
        %v2827 = vunpack.c.l.b16 %v2695
        %v2828 = vunpack.c.l.b16 %v2696
        %v2829 = vunpack.c.l.b16 %v2697
        %v2830 = vunpack.c.l.b16 %v2698
        %v2831 = vunpack.c.l.b16 %v2699
        %v2832 = vunpack.c.l.b16 %v2700
        %v2833 = vunpack.c.l.b16 %v2701
        %v2834 = vunpack.c.l.b16 %v2702
        %v2835 = vunpack.c.l.b16 %v2703
        %v2836 = vunpack.c.l.b16 %v2704
        %v2837 = vunpack.c.l.b16 %v2705
        %v2838 = vunpack.c.l.b16 %v2706
        %v2839 = vunpack.c.l.b16 %v2707
        %v2840 = vunpack.c.l.b16 %v2708
        %v2841 = vunpack.c.l.b16 %v2709
        %v2842 = vunpack.c.l.b16 %v2710
        %v2843 = vpack.c.b16 %v2780, %v2779
        %v2844 = vpack.c.b16 %v2782, %v2781
        %v2845 = vpack.c.b16 %v2784, %v2783
        %v2846 = vpack.c.b16 %v2786, %v2785
        %v2847 = vpack.c.b16 %v2788, %v2787
        %v2848 = vpack.c.b16 %v2790, %v2789
        %v2849 = vpack.c.b16 %v2792, %v2791
        %v2850 = vpack.c.b16 %v2794, %v2793
        %v2851 = vpack.c.b16 %v2796, %v2795
        %v2852 = vpack.c.b16 %v2798, %v2797
        %v2853 = vpack.c.b16 %v2800, %v2799
        %v2854 = vpack.c.b16 %v2802, %v2801
        %v2855 = vpack.c.b16 %v2804, %v2803
        %v2856 = vpack.c.b16 %v2806, %v2805
        %v2857 = vpack.c.b16 %v2808, %v2807
        %v2858 = vpack.c.b16 %v2810, %v2809
        %v2859 = vpack.c.b16 %v2812, %v2811
        %v2860 = vpack.c.b16 %v2814, %v2813
        %v2861 = vpack.c.b16 %v2816, %v2815
        %v2862 = vpack.c.b16 %v2818, %v2817
        %v2863 = vpack.c.b16 %v2820, %v2819
        %v2864 = vpack.c.b16 %v2822, %v2821
        %v2865 = vpack.c.b16 %v2824, %v2823
        %v2866 = vpack.c.b16 %v2826, %v2825
        %v2867 = vpack.c.b16 %v2828, %v2827
        %v2868 = vpack.c.b16 %v2830, %v2829
        %v2869 = vpack.c.b16 %v2832, %v2831
        %v2870 = vpack.c.b16 %v2834, %v2833
        %v2871 = vpack.c.b16 %v2836, %v2835
        %v2872 = vpack.c.b16 %v2838, %v2837
        %v2873 = vpack.c.b16 %v2840, %v2839
        %v2874 = vpack.c.b16 %v2842, %v2841
        %2907 = vmatpush.bf16.msra.mxu0 %v2850
        %2908 = vmatpush.bf16.msra.mxu0 %v2849
        %2909 = vmatpush.bf16.msra.mxu0 %v2848
        %2910 = vmatpush.bf16.msra.mxu0 %v2847
        %2911 = vmatpush.bf16.msra.mxu0 %v2846
        %2912 = vmatpush.bf16.msra.mxu0 %v2845
        %2913 = vmatpush.bf16.msra.mxu0 %v2844
        %2914 = vmatpush.bf16.msra.mxu0 %v2843
        %2915 = vmatmul.bf16.gmra.mxu0 %v2643
        %v2916 = vpop.f32.mrf.mxu0
        %v2917 = vadd.f32 %v2713, %v2916
        %v2918 = vpop.f32.mrf.mxu0
        %2919 = vdwg.mxu0
        %2920 = vmatpush.bf16.msra.mxu0 %v2858
        %2921 = vmatpush.bf16.msra.mxu0 %v2857
        %2922 = vmatpush.bf16.msra.mxu0 %v2856
        %2923 = vmatpush.bf16.msra.mxu0 %v2855
        %2924 = vmatpush.bf16.msra.mxu0 %v2854
        %2925 = vmatpush.bf16.msra.mxu0 %v2853
        %2926 = vmatpush.bf16.msra.mxu0 %v2852
        %2927 = vmatpush.bf16.msra.mxu0 %v2851
        %2928 = vmatmul.bf16.gmra.mxu0 %v2644
        %v2929 = vpop.f32.mrf.mxu0
        %v2930 = vadd.f32 %v2917, %v2929
        %v2931 = vpop.f32.mrf.mxu0
        %2932 = vdwg.mxu0
        %2933 = vmatpush.bf16.msra.mxu0 %v2866
        %2934 = vmatpush.bf16.msra.mxu0 %v2865
        %2935 = vmatpush.bf16.msra.mxu0 %v2864
        %2936 = vmatpush.bf16.msra.mxu0 %v2863
        %2937 = vmatpush.bf16.msra.mxu0 %v2862
        %2938 = vmatpush.bf16.msra.mxu0 %v2861
        %2939 = vmatpush.bf16.msra.mxu0 %v2860
        %2940 = vmatpush.bf16.msra.mxu0 %v2859
        %2941 = vmatmul.bf16.gmra.mxu0 %v2645
        %v2942 = vpop.f32.mrf.mxu0
        %v2943 = vadd.f32 %v2930, %v2942
        %v2944 = vpop.f32.mrf.mxu0
        %2945 = vdwg.mxu0
        %2946 = vmatpush.bf16.msra.mxu0 %v2874
        %2947 = vmatpush.bf16.msra.mxu0 %v2873
        %2948 = vmatpush.bf16.msra.mxu0 %v2872
        %2949 = vmatpush.bf16.msra.mxu0 %v2871
        %2950 = vmatpush.bf16.msra.mxu0 %v2870
        %2951 = vmatpush.bf16.msra.mxu0 %v2869
        %2952 = vmatpush.bf16.msra.mxu0 %v2868
        %2953 = vmatpush.bf16.msra.mxu0 %v2867
        %2954 = vmatmul.bf16.gmra.mxu0 %v2646
        %v2955 = vpop.f32.mrf.mxu0
        %v2956 = vadd.f32 %v2943, %v2955
        %v2957 = vpop.f32.mrf.mxu0
        %2958 = vdwg.mxu0
        %v2959 = vadd.f32 %v2351, %v2956
        %v2960 = vld [vmem:[%s908] sm:$0x1]
        %v2961 = vld [vmem:[%s911] sm:$0x1]
        %2962 = vadd.xlane.f32.xlu0 %v2959
        %v2963 = vpop.xlane.xlu0 %2962
        %v2964 = vmul.f32 %v2963, %v2325
        %v2965 = vsub.f32 %v2959, %v2964
        %v2966 = vmul.f32 %v2965, %v2965
        %2967 = vadd.xlane.f32.xlu0 %v2966
        %v2968 = vpop.xlane.xlu0 %2967
        %v2969 = vmul.f32 %v2968, %v2325
        %v2970 = vadd.f32 %v2969, 1e-12
        %v2971 = vrsqrt.pop %v2970
        %v2972 = vmul.f32 %v2971, %v2970
        %v2973 = vmul.f32 %v2972, %v2971
        %v2974 = vmul.f32 0.5, %v2973
        %v2975 = vsub.f32 1.5, %v2974
        %v2976 = vmul.f32 %v2971, %v2975
        %vm2977 = vweird.f32 %v2970
        %vm2978 = vweird.f32 %v2971
        %vm2979 = vmor %vm2977, %vm2978
        %v2980 = vsel %vm2979, %v2971, %v2976
        %v2981 = vmul.f32 %v2965, %v2980
        %v2983 = vperm.slane %v2960, 0
        %v2985 = vmul.f32 %v2981, %v2983
        %v2987 = vperm.slane %v2961, 0
        %v2989 = vadd.f32 %v2985, %v2987
        %2990 = vst [vmem:[#allocation2] sm:$0xff] %v2989
        %p2991 = scmp.eq.s32.totalorder %s38, 1
        // Predicated region
        $region101: #{ablang_forward.1} parent=95 // pred_check
          %p2992 = pneg %p2991
        $region102: #{ablang_forward.1} parent=95 // pred_check_branch
          %2994 = sbr.rel (%p2992) target = $region104
        $region103: #{ablang_forward.1} parent=95 // pred_region
          %v2995 = vld [vmem:[%s847] sm:$0xff]
          %2997 = vset.pattern.permute.xlu0 0
          %2998 = vperm.xlu0 %2997, %v2995
          %v2999 = vpop.permute.xlu0 %2998
          %v3001 = vmul.f32 %v2989, %v2999
          %v3002 = vrot.slane %v3001, 4
          %v3003 = vadd.f32 %v3001, %v3002
          %v3004 = vrot.slane %v3003, 2
          %v3005 = vadd.f32 %v3003, %v3004
          %v3006 = vrot.slane %v3005, 1
          %v3007 = vadd.f32 %v3005, %v3006
          %vm3008 = vcmask 7168
          %v3009 = vsel %vm3008, %v2995, 0.0
          %3010 = vadd.xlane.f32.xlu0 %v3009
          %v3011 = vpop.xlane.xlu0 %3010
          %v3012 = vrot.slane %v3011, 4
          %v3013 = vadd.f32 %v3011, %v3012
          %v3014 = vrot.slane %v3013, 2
          %v3015 = vadd.f32 %v3013, %v3014
          %v3016 = vrot.slane %v3015, 1
          %v3017 = vadd.f32 %v3015, %v3016
          %s3018 = vtos %v3017
          %s3019 = smax.f32 %s3018, 1.0
          %v3020 = vstv %s3019
          %v3021 = vrcp.pop %v3020
          %v3022 = vmul.f32 %v3020, %v3021
          %v3023 = vsub.f32 1.0, %v3022
          %v3024 = vmul.f32 %v3021, %v3023
          %v3025 = vadd.f32 %v3021, %v3024
          %vm3026 = vweird.f32 %v3020
          %vm3027 = vweird.f32 %v3021
          %vm3028 = vmor %vm3026, %vm3027
          %v3029 = vsel %vm3028, %v3021, %v3025
          %v3030 = vand.u32 2147483647, %v3020
          %vm3031 = vcmp.eq.f32.partialorder %v3030, 8.507059e+37
          %v3032 = vand.u32 %v3020, 2147483648
          %v3033 = vor.u32 1.1754944e-38, %v3032
          %v3034 = vsel %vm3031, %v3033, %v3029
          %s3035 = vtos %v3034
          %v3036 = vstv %s3035
          %v3037 = vmul.f32 %v3007, %v3036
          %3038 = vst [vmem:[%s836] sm:$0x1] %v3037
        $region104: #{ablang_forward.1} parent=95 // pred_fallthru
          _
        %s3039 = sand.u32 %s547, 1
        %s3040 = scalar_lea.sflag [#allocation4], %s3039
        %s3041 = sand.u32 %s547, 1
        %s3042 = scalar_lea.vmem [#allocation3], %s3041
        // Predicated region
        $region105: #{ablang_forward.1} parent=95 // pred_check
          %p3043 = pneg %p557
        $region106: #{ablang_forward.1} parent=95 // pred_check_branch
          %3045 = sbr.rel (%p3043) target = $region108
        $region107: #{ablang_forward.1} parent=95 // pred_region
          %3047 = vsyncadd %s3040, 0
          %s3048 = scalar_lea.hbm %s19, %s37
          %s3050 = sshll.u32 %s3042, 4
          %s3051 = int_to_ptr.vmem [resolvable:$true] %s3050
          %s3052 = sshll.u32 %s3048, 4
          %s3053 = int_to_ptr.hbm [resolvable:$true] %s3052
          %3055 = dma.vmem_to_hbm [thread:$0]  %s3051, 16, %s3053, %s3040
        $region108: #{ablang_forward.1} parent=95 // pred_fallthru
          _
      $region96: #{ablang_forward.1} parent=5 // pred_fallthru
        _
      %p3056 = scmp.le.s32.totalorder 2, %s28
      // Predicated region
      $region109: #{ablang_forward.1} parent=5 // pred_check
        %p3057 = pneg %p3056
      $region110: #{ablang_forward.1} parent=5 // pred_check_branch
        %3059 = sbr.rel (%p3057) target = $region112
      $region111: #{ablang_forward.1} parent=5 // pred_region
        %s3060 = ssub.s32 %s28, 2
        // Predicated region
        $region113: #{ablang_forward.1} parent=111 // pred_check
          %p3061 = pneg %p563
        $region114: #{ablang_forward.1} parent=111 // pred_check_branch
          %3063 = sbr.rel (%p3061) target = $region116
        $region115: #{ablang_forward.1} parent=111 // pred_region
          %s3064 = sand.u32 %s548, 1
          %s3065 = scalar_lea.sflag [#allocation4], %s3064
          %s3066 = sand.u32 %s548, 1
          %s3067 = scalar_lea.vmem [#allocation3], %s3066
          %3069 = dma.done %s3065, 16
        $region116: #{ablang_forward.1} parent=111 // pred_fallthru
          _
      $region112: #{ablang_forward.1} parent=5 // pred_fallthru
        _
    $region6: #{ablang_forward.1} parent=1 // loop_footer
      %s32 = sadd.s32 1, %s28
    $region7: #{ablang_forward.1} parent=1 // loop_footer_branch
      %27 = sbr.rel target = $region3
    $region8: #{ablang_forward.1} parent=1 // loop_exit
      _
    %3070 = vsyncpa [#allocation4], 1
    %s3071 = scalar_lea.sflag [#allocation4], 1
    %3072 = vsyncpa %s3071, 1

</llo_original>
